<compile_context>
chip_gen: v7x
topology: tpu7x:2x2x1
jax: 0.10.0
libtpu: 0.0.40
codegen_flags: <defaults>
</compile_context>

<pallas_src>
import functools
import math
import re

import jax
import jax.numpy as jnp
from jax import lax
from jax.experimental import pallas as pl
from jax.experimental.pallas import tpu as pltpu


_KEY_TILE = 512        # target key tile (multiple of 256 to fill v6e/v7x MXU)
_NEG_INF = -1e30       # finite "minus infinity" (avoids inf-inf NaNs)


def _round_up(n, m):
    return ((n + m - 1) // m) * m


@functools.lru_cache(maxsize=None)
def _tpu_generation():
    try:
        kind = jax.devices()[0].device_kind.lower()
        m = re.search(r"(\d+)", kind)
        if m:
            return int(m.group(1))
    except Exception:
        pass
    return 6


def _vmem_limit_bytes():
    # v7x: 64 MiB physical per TensorCore -> leave compiler headroom.
    # v5e/v6e (and older): 128 MiB physical -> use most of it.
    return (48 << 20) if _tpu_generation() >= 7 else (100 << 20)


def _query_tile_target():
    # v6e/v7x MXU is 256 deep on the N side; v5e's is 128.
    return 256 if _tpu_generation() >= 6 else 128


def _erf(z):
    # Abramowitz & Stegun 7.1.26 rational approximation (|err| < 1.5e-7).
    # TODO(synk): not bit-exact vs torch's erf-based nn.GELU (f32-level match).
    a1, a2, a3, a4, a5 = (0.254829592, -0.284496736, 1.421413741,
                          -1.453152027, 1.061405429)
    p = 0.3275911
    sign = jnp.where(z >= 0.0, 1.0, -1.0)
    az = jnp.abs(z)
    t = 1.0 / (1.0 + p * az)
    poly = ((((a5 * t + a4) * t + a3) * t + a2) * t + a1) * t
    return sign * (1.0 - poly * jnp.exp(-az * az))


def _gelu_exact(x):
    # nn.GELU() default (erf-based), not the tanh approximation.
    return 0.5 * x * (1.0 + _erf(x * (1.0 / math.sqrt(2.0))))


# ----------------------------------------------------------------------------
# Kernel A: K/V projection, computed once per key tile (hoisted out of the
# query-tile loop).  Token layout is transposed: features on sublanes,
# tokens on lanes.  Output is bf16 (halves DMA into the attention kernel).
# ----------------------------------------------------------------------------
def _kv_proj_kernel(x_ref, wkv_ref, bkv_ref, kv_ref):
    f32 = jnp.float32
    kv = jnp.dot(wkv_ref[...], x_ref[0], preferred_element_type=f32)
    kv_ref[0] = (kv + bkv_ref[...]).astype(jnp.bfloat16)


def kv_project(x_t, w_kv, b_kv, *, tk):
    B, D, NKp = x_t.shape
    vmem = pltpu.MemorySpace.VMEM
    return pl.pallas_call(
        _kv_proj_kernel,
        out_shape=jax.ShapeDtypeStruct((B, 2 * D, NKp), jnp.bfloat16),
        grid=(B, NKp // tk),
        in_specs=[
            pl.BlockSpec((1, D, tk), lambda b, k: (b, 0, k)),
            pl.BlockSpec(memory_space=vmem),          # (2D, D) bf16, 1 copy
            pl.BlockSpec(memory_space=vmem),          # (2D, 1) f32
        ],
        out_specs=pl.BlockSpec((1, 2 * D, tk), lambda b, k: (b, 0, k)),
        compiler_params=pltpu.CompilerParams(
            dimension_semantics=("parallel", "parallel"),
            vmem_limit_bytes=_vmem_limit_bytes()),
    )(x_t, w_kv, b_kv)


# ----------------------------------------------------------------------------
# Kernel B: fused MHA (online softmax over key tiles) + out_proj + residual
# + FeedForward.  grid = (B, NQ_tiles, NK_tiles), key axis innermost.
# ----------------------------------------------------------------------------
def _atm_attn_ffn_kernel(y_ref, kv_ref, wa_ref, w2_ref, b_ref, o_ref,
                         q_scr, m_scr, l_scr, acc_scr, *,
                         num_heads, n_k, n_k_pad, d_model, d_hidden):
    D, nh = d_model, num_heads
    dh = D // nh
    TQ = y_ref.shape[-1]
    TK = kv_ref.shape[-1]
    bf, f32 = jnp.bfloat16, jnp.float32

    k_step = pl.program_id(2)

    # ---- first key tile of this (batch, query-tile): project Q, init state -
    @pl.when(k_step == 0)
    def _init():
        wq = wa_ref[0:D, :]                               # (D, D) bf16
        bq = b_ref[0:D]                                   # (D, 1) f32
        y_b = y_ref[0].astype(bf)                         # (D, TQ)
        q_t = jnp.dot(wq, y_b, preferred_element_type=f32) + bq
        q_t = q_t * (1.0 / math.sqrt(dh))                 # torch scaling (incl. bias)
        q_scr[...] = q_t.reshape(nh, dh, TQ).astype(bf)
        m_scr[...] = jnp.full_like(m_scr, _NEG_INF)
        l_scr[...] = jnp.zeros_like(l_scr)
        acc_scr[...] = jnp.zeros_like(acc_scr)

    # ---- online-softmax update for this key tile ----------------------------
    kv = kv_ref[0]                                        # (2D, TK) bf16
    k3 = kv[0:D, :].reshape(nh, dh, TK)                   # (H, dh, TK)
    v3 = kv[D:2 * D, :].reshape(nh, dh, TK)               # (H, dh, TK)
    q3 = q_scr[...]                                       # (H, dh, TQ) bf16

    # scores with keys on sublanes, queries on lanes: (H, TK, TQ); contraction
    # over axis 1 of both operands -> no transposes anywhere.
    s = lax.dot_general(k3, q3, (((1,), (1,)), ((0,), (0,))),
                        preferred_element_type=f32)
    if n_k < n_k_pad:
        # tiny (1, TK, 1) additive key-padding bias, applied BEFORE the
        # running max so padded keys cannot poison the online softmax.
        kidx = lax.broadcasted_iota(jnp.int32, (1, TK, 1), 1) + k_step * TK
        s = s + jnp.where(kidx < n_k, 0.0, _NEG_INF).astype(f32)

    m_prev = m_scr[...]                                   # (H, 1, TQ)
    m_new = jnp.maximum(m_prev, jnp.max(s, axis=1, keepdims=True))
    alpha = jnp.exp(m_prev - m_new)                       # (H, 1, TQ)
    p = jnp.exp(s - m_new)                                # (H, TK, TQ) f32
    l_scr[...] = alpha * l_scr[...] + jnp.sum(p, axis=1, keepdims=True)
    pv = lax.dot_general(v3, p.astype(bf), (((2,), (1,)), ((0,), (0,))),
                         preferred_element_type=f32)      # (H, dh, TQ)
    acc_scr[...] = alpha * acc_scr[...] + pv
    m_scr[...] = m_new

    # ---- last key tile: finish attention, out_proj, residual, FFN ----------
    @pl.when(k_step == pl.num_programs(2) - 1)
    def _finalize():
        wo = wa_ref[D:2 * D, :]
        w1 = wa_ref[2 * D:2 * D + d_hidden, :]
        bo = b_ref[D:2 * D]
        b1 = b_ref[2 * D:2 * D + d_hidden]
        b2 = b_ref[2 * D + d_hidden:3 * D + d_hidden]

        inv_l = pl.reciprocal(l_scr[...], approx=True)    # EUP slot
        attn = (acc_scr[...] * inv_l).reshape(D, TQ).astype(bf)
        attn_t = jnp.dot(wo, attn, preferred_element_type=f32) + bo   # (D,TQ)
        z_t = y_ref[0] + attn_t                           # residual in f32
        h_t = jnp.dot(w1, z_t.astype(bf), preferred_element_type=f32) + b1
        h_t = _gelu_exact(h_t).astype(bf)
        # torch: x = ffn(y + attn)  (no second residual); dropout == identity.
        o_ref[0] = jnp.dot(w2_ref[...], h_t, preferred_element_type=f32) + b2


def atm_attn_ffn(y_t, kv, w_attn, w2, b_attn, *, num_heads, n_k,
                 d_hidden, tq, tk):
    B, D, NQp = y_t.shape
    NKp = kv.shape[-1]
    nh = num_heads
    dh = D // nh
    kernel = functools.partial(_atm_attn_ffn_kernel, num_heads=nh, n_k=n_k,
                               n_k_pad=NKp, d_model=D, d_hidden=d_hidden)
    vmem = pltpu.MemorySpace.VMEM
    return pl.pallas_call(
        kernel,
        out_shape=jax.ShapeDtypeStruct((B, D, NQp), jnp.float32),
        grid=(B, NQp // tq, NKp // tk),
        in_specs=[
            pl.BlockSpec((1, D, tq), lambda b, t, k: (b, 0, t)),      # queries
            pl.BlockSpec((1, 2 * D, tk), lambda b, t, k: (b, 0, k)),  # kv tile
            pl.BlockSpec(memory_space=vmem),    # packed [Wq;Wo;W1] bf16
            pl.BlockSpec(memory_space=vmem),    # W2 bf16
            pl.BlockSpec(memory_space=vmem),    # packed biases f32 column
        ],
        out_specs=pl.BlockSpec((1, D, tq), lambda b, t, k: (b, 0, t)),
        scratch_shapes=[
            pltpu.VMEM((nh, dh, tq), jnp.bfloat16),   # projected Q
            pltpu.VMEM((nh, 1, tq), jnp.float32),     # running max m
            pltpu.VMEM((nh, 1, tq), jnp.float32),     # running sum l
            pltpu.VMEM((nh, dh, tq), jnp.float32),    # running acc
        ],
        compiler_params=pltpu.CompilerParams(
            dimension_semantics=("parallel", "parallel", "arbitrary"),
            vmem_limit_bytes=_vmem_limit_bytes()),
    )(y_t, kv, w_attn, w2, b_attn)


# ----------------------------------------------------------------------------
# plain-JAX glue: grid_pad, avg-pool, token formation, iteration loop
# ----------------------------------------------------------------------------
def grid_pad(img, Gh, Gw):
    B, C, H, W = img.shape
    if H > 2 * Gh:
        h_pad = 1 if H % 2 != 0 else 0
    else:
        h_pad = 2 * Gh - H
    if W > 2 * Gw:
        w_pad = 1 if W % 2 != 0 else 0
    else:
        w_pad = 2 * Gw - W
    new_H, new_W = H + h_pad, W + w_pad
    if h_pad == 0 and w_pad == 0:
        return img
    padded = jnp.zeros((B, C, new_H, new_W), jnp.float32)
    if h_pad < H and w_pad < W:
        padded = padded.at[:, :, :2 * h_pad:2, :2 * w_pad:2].set(
            img[:, :, :h_pad, :w_pad])
        padded = padded.at[:, :, 2 * h_pad:, :2 * w_pad:2].set(
            img[:, :, h_pad:, :w_pad])
        padded = padded.at[:, :, :2 * h_pad:2, 2 * w_pad:].set(
            img[:, :, :h_pad, w_pad:])
        padded = padded.at[:, :, 2 * h_pad:, 2 * w_pad:].set(
            img[:, :, h_pad:, w_pad:])
    elif h_pad < H:
        padded = padded.at[:, :, :2 * h_pad:2, :2 * W:2].set(
            img[:, :, :h_pad, :])
        padded = padded.at[:, :, 2 * h_pad:, :2 * W:2].set(
            img[:, :, h_pad:, :])
    elif w_pad < W:
        padded = padded.at[:, :, :2 * H:2, :2 * w_pad:2].set(
            img[:, :, :, :w_pad])
        padded = padded.at[:, :, :2 * H:2, 2 * w_pad:].set(
            img[:, :, :, w_pad:])
    else:
        padded = padded.at[:, :, :2 * H:2, :2 * W:2].set(img)
    return padded


def avg_pool2d(y, r):
    """nn.AvgPool2d(kernel_size=r, stride=r) on NCHW input (tiny: plain JAX)."""
    B, D, Hp, Wp = y.shape
    Hh, Wh = Hp // r, Wp // r
    y = y[:, :, :Hh * r, :Wh * r]
    return y.reshape(B, D, Hh, r, Wh, r).mean(axis=(3, 5))


def _prepare_params(params):
    """Pack weights/biases once: bf16 weights, f32 bias columns."""
    bf, f32 = jnp.bfloat16, jnp.float32
    w_kv = jnp.concatenate([params["wk"], params["wv"]], axis=0).astype(bf)
    b_kv = jnp.concatenate([params["bk"], params["bv"]]
                           ).reshape(-1, 1).astype(f32)
    w_attn = jnp.concatenate([params["wq"], params["wo"], params["w1"]],
                             axis=0).astype(bf)
    w2 = params["w2"].astype(bf)
    b_attn = jnp.concatenate([params["bq"], params["bo"], params["b1"],
                              params["b2"]]).reshape(-1, 1).astype(f32)
    return w_kv, b_kv, w_attn, w2, b_attn


@functools.partial(jax.jit, static_argnames=("Gh", "Gt", "num_heads", "ratio",
                                             "d_hidden"))
def ae_iteration(x, w_kv, b_kv, w_attn, w2, b_attn, *, Gh, Gt, num_heads,
                 ratio, d_hidden):
    B, D, H, W = x.shape
    y = avg_pool2d(grid_pad(x, Gh, Gt), ratio)             # (B, D, H_, W_)
    _, _, H_, W_ = y.shape
    n_k, n_q = H * W, H_ * W_

    tq = min(_query_tile_target(), _round_up(n_q, 128))
    tk = min(_KEY_TILE, _round_up(n_k, 128))
    nq_pad = _round_up(n_q, tq)
    nk_pad = _round_up(n_k, tk)

    # Raw row-major reinterpretation exactly like torch .reshape(B, -1, D),
    # then tokens onto the lane axis: (B, D, N).  Keys in bf16 (halves DMA /
    # VMEM of the dominant operand); queries stay f32 for the residual add.
    x_t = jnp.swapaxes(x.reshape(B, n_k, D), 1, 2).astype(jnp.bfloat16)
    y_t = jnp.swapaxes(y.reshape(B, n_q, D), 1, 2)
    x_t = jnp.pad(x_t, ((0, 0), (0, 0), (0, nk_pad - n_k)))
    y_t = jnp.pad(y_t, ((0, 0), (0, 0), (0, nq_pad - n_q)))

    kv = kv_project(x_t, w_kv, b_kv, tk=tk)                 # (B, 2D, NKp) bf16
    out_t = atm_attn_ffn(y_t, kv, w_attn, w2, b_attn, num_heads=num_heads,
                         n_k=n_k, d_hidden=d_hidden, tq=tq, tk=tk)
    # (B, D, n_q) transposed-token layout reshapes straight back to NCHW
    # (equals torch's reshape(B,H_,W_,D).permute(0,3,1,2)).
    return out_t[:, :, :n_q].reshape(B, D, H_, W_)


def adaptive_token_merger(x, params, Gh, Gt, num_heads, ratio=2):
    _, D, H, W = x.shape
    assert D % num_heads == 0
    w_kv, b_kv, w_attn, w2, b_attn = _prepare_params(params)
    d_hidden = params["w1"].shape[0]
    while H != Gh or W != Gt:
        x = ae_iteration(x, w_kv, b_kv, w_attn, w2, b_attn, Gh=Gh, Gt=Gt,
                         num_heads=num_heads, ratio=ratio, d_hidden=d_hidden)
        _, _, H, W = x.shape
    return x


# ----------------------------------------------------------------------------
if __name__ == "__main__":
    # small, self-consistent shapes: embedding_dim D == channel dim of input
    B, D = 2, 32
    H = W = 9            # exercises both grid_pad branches (interleave+shrink)
    Gh = Gt = 4
    num_heads = 4
    hidden = 4 * D

    key = jax.random.PRNGKey(0)
    ks = jax.random.split(key, 9)
    x = jax.random.normal(ks[0], (B, D, H, W), jnp.float32)

    # synthetic parameters with nn.MultiheadAttention / FeedForward shapes
    in_w = jax.random.normal(ks[1], (3 * D, D), jnp.float32) / math.sqrt(D)
    in_b = jax.random.normal(ks[2], (3 * D,), jnp.float32) * 0.02
    out_w = jax.random.normal(ks[3], (D, D), jnp.float32) / math.sqrt(D)
    out_b = jax.random.normal(ks[4], (D,), jnp.float32) * 0.02
    w1 = jax.random.normal(ks[5], (hidden, D), jnp.float32) / math.sqrt(D)
    b1 = jax.random.normal(ks[6], (hidden,), jnp.float32) * 0.02
    w2 = jax.random.normal(ks[7], (D, hidden), jnp.float32) / math.sqrt(hidden)
    b2 = jax.random.normal(ks[8], (D,), jnp.float32) * 0.02

    params = {
        "wq": in_w[:D], "wk": in_w[D:2 * D], "wv": in_w[2 * D:],
        "bq": in_b[:D], "bk": in_b[D:2 * D], "bv": in_b[2 * D:],
        "wo": out_w, "bo": out_b,
        "w1": w1, "b1": b1, "w2": w2, "b2": b2,
    }

    out = adaptive_token_merger(x, params, Gh, Gt, num_heads, ratio=2)
    out = jax.block_until_ready(out)
    assert out.shape == (B, D, Gh, Gt), out.shape
    assert bool(jnp.all(jnp.isfinite(out)))
    print("KERNEL_OK")
</pallas_src>

<mosaic_0001>
module attributes {stable_mosaic.version = 11 : i64} {
  func.func @_kv_proj_kernel(%arg0: i32, %arg1: i32, %arg2: memref<1x32x128xbf16, #tpu.memory_space<vmem>>, %arg3: memref<64x32xbf16, #tpu.memory_space<vmem>>, %arg4: memref<64x1xf32, #tpu.memory_space<vmem>>, %arg5: memref<1x64x128xbf16, #tpu.memory_space<vmem>>) attributes {dimension_semantics = [#tpu.dimension_semantics<parallel>, #tpu.dimension_semantics<parallel>], iteration_bounds = array<i64: 2, 1>, scalar_prefetch = 0 : i64, scratch_operands = 0 : i64, tpu.core_type = #tpu.core_type<tc>, window_params = [{transform_indices = @transform_0, window_bounds = array<i64: 1, 32, 128>}, {pipeline_mode = #tpu.pipeline_mode<synchronous>, transform_indices = @transform_1, window_bounds = array<i64: 64, 32>}, {pipeline_mode = #tpu.pipeline_mode<synchronous>, transform_indices = @transform_2, window_bounds = array<i64: 64, 1>}, {transform_indices = @transform_3, window_bounds = array<i64: 1, 64, 128>}]} {
    %c0 = arith.constant 0 : index
    %c0_0 = arith.constant 0 : index
    %0 = vector.load %arg3[%c0, %c0_0] : memref<64x32xbf16, #tpu.memory_space<vmem>>, vector<64x32xbf16>
    %c0_1 = arith.constant 0 : index
    %c0_2 = arith.constant 0 : index
    %c0_3 = arith.constant 0 : index
    %1 = vector.load %arg2[%c0_1, %c0_2, %c0_3] : memref<1x32x128xbf16, #tpu.memory_space<vmem>>, vector<1x32x128xbf16>
    %2 = vector.shape_cast %1 : vector<1x32x128xbf16> to vector<32x128xbf16>
    %cst = arith.constant dense<0.000000e+00> : vector<64x128xf32>
    %3 = tpu.matmul %0, %2, %cst {dimension_numbers = #tpu.dot_dimension_numbers<[1], [0], [0], [1], [0, 0, 1, 1], [], []>} : vector<64x32xbf16>, vector<32x128xbf16>, vector<64x128xf32> -> vector<64x128xf32>
    %c0_4 = arith.constant 0 : index
    %c0_5 = arith.constant 0 : index
    %4 = vector.load %arg4[%c0_4, %c0_5] : memref<64x1xf32, #tpu.memory_space<vmem>>, vector<64x1xf32>
    %5 = vector.broadcast %4 : vector<64x1xf32> to vector<64x128xf32>
    %6 = arith.addf %3, %5 : vector<64x128xf32>
    %7 = arith.truncf %6 : vector<64x128xf32> to vector<64x128xbf16>
    %c0_6 = arith.constant 0 : index
    %c0_7 = arith.constant 0 : index
    %c0_8 = arith.constant 0 : index
    %8 = vector.load %arg5[%c0_6, %c0_7, %c0_8] : memref<1x64x128xbf16, #tpu.memory_space<vmem>>, vector<1x64x128xbf16>
    %9 = vector.shape_cast %8 : vector<1x64x128xbf16> to vector<64x128xbf16>
    %10 = vector.shape_cast %7 : vector<64x128xbf16> to vector<1x64x128xbf16>
    tpu.vector_store %arg5[%c0_6, %c0_7, %c0_8], %10 {strides = array<i32>} : memref<1x64x128xbf16, #tpu.memory_space<vmem>>, vector<1x64x128xbf16>,
    return
  }
  func.func @transform_0(%arg0: i32, %arg1: i32) -> (i32, i32, i32) {
    %c0_i32 = arith.constant 0 : i32
    %c0_i32_0 = arith.constant 0 : i32
    return %arg0, %c0_i32, %arg1 : i32, i32, i32
  }
  func.func @transform_1(%arg0: i32, %arg1: i32) -> (i32, i32) {
    %c0_i32 = arith.constant 0 : i32
    %c0_i32_0 = arith.constant 0 : i32
    %c0_i32_1 = arith.constant 0 : i32
    return %c0_i32, %c0_i32_0 : i32, i32
  }
  func.func @transform_2(%arg0: i32, %arg1: i32) -> (i32, i32) {
    %c0_i32 = arith.constant 0 : i32
    %c0_i32_0 = arith.constant 0 : i32
    %c0_i32_1 = arith.constant 0 : i32
    return %c0_i32, %c0_i32_0 : i32, i32
  }
  func.func @transform_3(%arg0: i32, %arg1: i32) -> (i32, i32, i32) {
    %c0_i32 = arith.constant 0 : i32
    %c0_i32_0 = arith.constant 0 : i32
    return %arg0, %c0_i32, %arg1 : i32, i32, i32
  }
}

module attributes {stable_mosaic.version = 11 : i64} {
  func.func @_atm_attn_ffn_kernel(%arg0: i32, %arg1: i32, %arg2: i32, %arg3: memref<1x32x128xf32, #tpu.memory_space<vmem>>, %arg4: memref<1x64x128xbf16, #tpu.memory_space<vmem>>, %arg5: memref<192x32xbf16, #tpu.memory_space<vmem>>, %arg6: memref<32x128xbf16, #tpu.memory_space<vmem>>, %arg7: memref<224x1xf32, #tpu.memory_space<vmem>>, %arg8: memref<1x32x128xf32, #tpu.memory_space<vmem>>, %arg9: memref<4x8x128xbf16, #tpu.memory_space<vmem>>, %arg10: memref<4x1x128xf32, #tpu.memory_space<vmem>>, %arg11: memref<4x1x128xf32, #tpu.memory_space<vmem>>, %arg12: memref<4x8x128xf32, #tpu.memory_space<vmem>>) attributes {dimension_semantics = [#tpu.dimension_semantics<parallel>, #tpu.dimension_semantics<parallel>, #tpu.dimension_semantics<arbitrary>], iteration_bounds = array<i64: 2, 1, 1>, scalar_prefetch = 0 : i64, scratch_operands = 4 : i64, tpu.core_type = #tpu.core_type<tc>, window_params = [{transform_indices = @transform_0, window_bounds = array<i64: 1, 32, 128>}, {transform_indices = @transform_1, window_bounds = array<i64: 1, 64, 128>}, {pipeline_mode = #tpu.pipeline_mode<synchronous>, transform_indices = @transform_2, window_bounds = array<i64: 192, 32>}, {pipeline_mode = #tpu.pipeline_mode<synchronous>, transform_indices = @transform_3, window_bounds = array<i64: 32, 128>}, {pipeline_mode = #tpu.pipeline_mode<synchronous>, transform_indices = @transform_4, window_bounds = array<i64: 224, 1>}, {transform_indices = @transform_5, window_bounds = array<i64: 1, 32, 128>}]} {
    %c0_i32 = arith.constant 0 : i32
    %0 = arith.cmpi eq, %arg2, %c0_i32 : i32
    %1 = arith.extui %0 : i1 to i32
    %c0_i32_0 = arith.constant 0 : i32
    %2 = arith.cmpi ne, %1, %c0_i32_0 : i32
    scf.if %2 {
      %c0_31 = arith.constant 0 : index
      %c0_32 = arith.constant 0 : index
      %48 = vector.load %arg5[%c0_31, %c0_32] : memref<192x32xbf16, #tpu.memory_space<vmem>>, vector<32x32xbf16>
      %c0_33 = arith.constant 0 : index
      %c0_34 = arith.constant 0 : index
      %49 = vector.load %arg7[%c0_33, %c0_34] : memref<224x1xf32, #tpu.memory_space<vmem>>, vector<32x1xf32>
      %c0_35 = arith.constant 0 : index
      %c0_36 = arith.constant 0 : index
      %c0_37 = arith.constant 0 : index
      %50 = vector.load %arg3[%c0_35, %c0_36, %c0_37] : memref<1x32x128xf32, #tpu.memory_space<vmem>>, vector<1x32x128xf32>
      %51 = vector.shape_cast %50 : vector<1x32x128xf32> to vector<32x128xf32>
      %52 = arith.truncf %51 : vector<32x128xf32> to vector<32x128xbf16>
      %cst_38 = arith.constant dense<0.000000e+00> : vector<32x128xf32>
      %53 = tpu.matmul %48, %52, %cst_38 {dimension_numbers = #tpu.dot_dimension_numbers<[1], [0], [0], [1], [0, 0, 1, 1], [], []>} : vector<32x32xbf16>, vector<32x128xbf16>, vector<32x128xf32> -> vector<32x128xf32>
      %54 = vector.broadcast %49 : vector<32x1xf32> to vector<32x128xf32>
      %55 = arith.addf %53, %54 : vector<32x128xf32>
      %cst_39 = arith.constant 0.353553385 : f32
      %56 = vector.broadcast %cst_39 : f32 to vector<32x128xf32>
      %57 = arith.mulf %55, %56 : vector<32x128xf32>
      %58 = vector.shape_cast %57 : vector<32x128xf32> to vector<4x8x128xf32>
      %59 = arith.truncf %58 : vector<4x8x128xf32> to vector<4x8x128xbf16>
      %c0_40 = arith.constant 0 : index
      %c0_41 = arith.constant 0 : index
      %c0_42 = arith.constant 0 : index
      %60 = vector.load %arg9[%c0_40, %c0_41, %c0_42] : memref<4x8x128xbf16, #tpu.memory_space<vmem>>, vector<4x8x128xbf16>
      tpu.vector_store %arg9[%c0_40, %c0_41, %c0_42], %59 {strides = array<i32>} : memref<4x8x128xbf16, #tpu.memory_space<vmem>>, vector<4x8x128xbf16>,
      %cst_43 = arith.constant -1.000000e+30 : f32
      %61 = vector.broadcast %cst_43 : f32 to vector<4x1x128xf32>
      %c0_44 = arith.constant 0 : index
      %c0_45 = arith.constant 0 : index
      %c0_46 = arith.constant 0 : index
      %62 = vector.load %arg10[%c0_44, %c0_45, %c0_46] : memref<4x1x128xf32, #tpu.memory_space<vmem>>, vector<4x1x128xf32>
      tpu.vector_store %arg10[%c0_44, %c0_45, %c0_46], %61 {strides = array<i32>} : memref<4x1x128xf32, #tpu.memory_space<vmem>>, vector<4x1x128xf32>,
      %cst_47 = arith.constant 0.000000e+00 : f32
      %63 = vector.broadcast %cst_47 : f32 to vector<4x1x128xf32>
      %c0_48 = arith.constant 0 : index
      %c0_49 = arith.constant 0 : index
      %c0_50 = arith.constant 0 : index
      %64 = vector.load %arg11[%c0_48, %c0_49, %c0_50] : memref<4x1x128xf32, #tpu.memory_space<vmem>>, vector<4x1x128xf32>
      tpu.vector_store %arg11[%c0_48, %c0_49, %c0_50], %63 {strides = array<i32>} : memref<4x1x128xf32, #tpu.memory_space<vmem>>, vector<4x1x128xf32>,
      %cst_51 = arith.constant 0.000000e+00 : f32
      %65 = vector.broadcast %cst_51 : f32 to vector<4x8x128xf32>
      %c0_52 = arith.constant 0 : index
      %c0_53 = arith.constant 0 : index
      %c0_54 = arith.constant 0 : index
      %66 = vector.load %arg12[%c0_52, %c0_53, %c0_54] : memref<4x8x128xf32, #tpu.memory_space<vmem>>, vector<4x8x128xf32>
      tpu.vector_store %arg12[%c0_52, %c0_53, %c0_54], %65 {strides = array<i32>} : memref<4x8x128xf32, #tpu.memory_space<vmem>>, vector<4x8x128xf32>,
    } else {
    }
    %c0 = arith.constant 0 : index
    %c0_1 = arith.constant 0 : index
    %c0_2 = arith.constant 0 : index
    %3 = vector.load %arg4[%c0, %c0_1, %c0_2] : memref<1x64x128xbf16, #tpu.memory_space<vmem>>, vector<1x64x128xbf16>
    %4 = vector.shape_cast %3 : vector<1x64x128xbf16> to vector<64x128xbf16>
    %5 = vector.extract_strided_slice %4 {offsets = [0, 0], sizes = [32, 128], strides = [1, 1]} : vector<64x128xbf16> to vector<32x128xbf16>
    %6 = vector.shape_cast %5 : vector<32x128xbf16> to vector<4x8x128xbf16>
    %7 = vector.extract_strided_slice %4 {offsets = [32, 0], sizes = [32, 128], strides = [1, 1]} : vector<64x128xbf16> to vector<32x128xbf16>
    %8 = vector.shape_cast %7 : vector<32x128xbf16> to vector<4x8x128xbf16>
    %c0_3 = arith.constant 0 : index
    %c0_4 = arith.constant 0 : index
    %c0_5 = arith.constant 0 : index
    %9 = vector.load %arg9[%c0_3, %c0_4, %c0_5] : memref<4x8x128xbf16, #tpu.memory_space<vmem>>, vector<4x8x128xbf16>
    %cst = arith.constant dense<0.000000e+00> : vector<4x128x128xf32>
    %10 = tpu.matmul %6, %9, %cst {dimension_numbers = #tpu.dot_dimension_numbers<[1], [1], [2], [2], [0, 0, 0, 2, 1, 2], [0], [0]>} : vector<4x8x128xbf16>, vector<4x8x128xbf16>, vector<4x128x128xf32> -> vector<4x128x128xf32>
    %11 = tpu.iota {dimensions = array<i32: 1>} : vector<1x128x1xi32>
    %c128_i32 = arith.constant 128 : i32
    %12 = arith.muli %arg2, %c128_i32 : i32
    %13 = vector.broadcast %12 : i32 to vector<1x128x1xi32>
    %14 = arith.addi %11, %13 : vector<1x128x1xi32>
    %c81_i32 = arith.constant 81 : i32
    %15 = vector.broadcast %c81_i32 : i32 to vector<1x128x1xi32>
    %16 = arith.cmpi slt, %14, %15 : vector<1x128x1xi32>
    %cst_6 = arith.constant 0.000000e+00 : f32
    %cst_7 = arith.constant -1.000000e+30 : f32
    %17 = vector.broadcast %cst_6 : f32 to vector<1x128x1xf32>
    %18 = vector.broadcast %cst_7 : f32 to vector<1x128x1xf32>
    %19 = arith.select %16, %17, %18 : vector<1x128x1xi1>, vector<1x128x1xf32>
    %20 = vector.broadcast %19 : vector<1x128x1xf32> to vector<4x128x128xf32>
    %21 = arith.addf %10, %20 : vector<4x128x128xf32>
    %c0_8 = arith.constant 0 : index
    %c0_9 = arith.constant 0 : index
    %c0_10 = arith.constant 0 : index
    %22 = vector.load %arg10[%c0_8, %c0_9, %c0_10] : memref<4x1x128xf32, #tpu.memory_space<vmem>>, vector<4x1x128xf32>
    %cst_11 = arith.constant dense<0xFF800000> : vector<4x128xf32>
    %23 = vector.multi_reduction <maximumf>, %21, %cst_11 [1] : vector<4x128x128xf32> to vector<4x128xf32>
    %24 = vector.shape_cast %23 : vector<4x128xf32> to vector<4x1x128xf32>
    %25 = arith.maximumf %22, %24 : vector<4x1x128xf32>
    %26 = arith.subf %22, %25 : vector<4x1x128xf32>
    %27 = math.exp %26 : vector<4x1x128xf32>
    %28 = vector.broadcast %25 : vector<4x1x128xf32> to vector<4x128x128xf32>
    %29 = arith.subf %21, %28 : vector<4x128x128xf32>
    %30 = math.exp %29 : vector<4x128x128xf32>
    %c0_12 = arith.constant 0 : index
    %c0_13 = arith.constant 0 : index
    %c0_14 = arith.constant 0 : index
    %31 = vector.load %arg11[%c0_12, %c0_13, %c0_14] : memref<4x1x128xf32, #tpu.memory_space<vmem>>, vector<4x1x128xf32>
    %32 = arith.mulf %27, %31 : vector<4x1x128xf32>
    %cst_15 = arith.constant dense<0.000000e+00> : vector<4x128xf32>
    %33 = vector.multi_reduction <add>, %30, %cst_15 [1] : vector<4x128x128xf32> to vector<4x128xf32>
    %34 = vector.shape_cast %33 : vector<4x128xf32> to vector<4x1x128xf32>
    %35 = arith.addf %32, %34 : vector<4x1x128xf32>
    %c0_16 = arith.constant 0 : index
    %c0_17 = arith.constant 0 : index
    %c0_18 = arith.constant 0 : index
    %36 = vector.load %arg11[%c0_16, %c0_17, %c0_18] : memref<4x1x128xf32, #tpu.memory_space<vmem>>, vector<4x1x128xf32>
    tpu.vector_store %arg11[%c0_16, %c0_17, %c0_18], %35 {strides = array<i32>} : memref<4x1x128xf32, #tpu.memory_space<vmem>>, vector<4x1x128xf32>,
    %37 = arith.truncf %30 : vector<4x128x128xf32> to vector<4x128x128xbf16>
    %cst_19 = arith.constant dense<0.000000e+00> : vector<4x8x128xf32>
    %38 = tpu.matmul %8, %37, %cst_19 {dimension_numbers = #tpu.dot_dimension_numbers<[2], [1], [1], [2], [0, 0, 0, 1, 1, 2], [0], [0]>} : vector<4x8x128xbf16>, vector<4x128x128xbf16>, vector<4x8x128xf32> -> vector<4x8x128xf32>
    %c0_20 = arith.constant 0 : index
    %c0_21 = arith.constant 0 : index
    %c0_22 = arith.constant 0 : index
    %39 = vector.load %arg12[%c0_20, %c0_21, %c0_22] : memref<4x8x128xf32, #tpu.memory_space<vmem>>, vector<4x8x128xf32>
    %40 = vector.broadcast %27 : vector<4x1x128xf32> to vector<4x8x128xf32>
    %41 = arith.mulf %40, %39 : vector<4x8x128xf32>
    %42 = arith.addf %41, %38 : vector<4x8x128xf32>
    %c0_23 = arith.constant 0 : index
    %c0_24 = arith.constant 0 : index
    %c0_25 = arith.constant 0 : index
    %43 = vector.load %arg12[%c0_23, %c0_24, %c0_25] : memref<4x8x128xf32, #tpu.memory_space<vmem>>, vector<4x8x128xf32>
    tpu.vector_store %arg12[%c0_23, %c0_24, %c0_25], %42 {strides = array<i32>} : memref<4x8x128xf32, #tpu.memory_space<vmem>>, vector<4x8x128xf32>,
    %c0_26 = arith.constant 0 : index
    %c0_27 = arith.constant 0 : index
    %c0_28 = arith.constant 0 : index
    %44 = vector.load %arg10[%c0_26, %c0_27, %c0_28] : memref<4x1x128xf32, #tpu.memory_space<vmem>>, vector<4x1x128xf32>
    tpu.vector_store %arg10[%c0_26, %c0_27, %c0_28], %25 {strides = array<i32>} : memref<4x1x128xf32, #tpu.memory_space<vmem>>, vector<4x1x128xf32>,
    %c0_i32_29 = arith.constant 0 : i32
    %45 = arith.cmpi eq, %arg2, %c0_i32_29 : i32
    %46 = arith.extui %45 : i1 to i32
    %c0_i32_30 = arith.constant 0 : i32
    %47 = arith.cmpi ne, %46, %c0_i32_30 : i32
    scf.if %47 {
      %c32 = arith.constant 32 : index
      %c0_31 = arith.constant 0 : index
      %48 = vector.load %arg5[%c32, %c0_31] : memref<192x32xbf16, #tpu.memory_space<vmem>>, vector<32x32xbf16>
      %c64 = arith.constant 64 : index
      %c0_32 = arith.constant 0 : index
      %49 = vector.load %arg5[%c64, %c0_32] : memref<192x32xbf16, #tpu.memory_space<vmem>>, vector<128x32xbf16>
      %c32_33 = arith.constant 32 : index
      %c0_34 = arith.constant 0 : index
      %50 = vector.load %arg7[%c32_33, %c0_34] : memref<224x1xf32, #tpu.memory_space<vmem>>, vector<32x1xf32>
      %c64_35 = arith.constant 64 : index
      %c0_36 = arith.constant 0 : index
      %51 = vector.load %arg7[%c64_35, %c0_36] : memref<224x1xf32, #tpu.memory_space<vmem>>, vector<128x1xf32>
      %c192 = arith.constant 192 : index
      %c0_37 = arith.constant 0 : index
      %52 = vector.load %arg7[%c192, %c0_37] : memref<224x1xf32, #tpu.memory_space<vmem>>, vector<32x1xf32>
      %c0_38 = arith.constant 0 : index
      %c0_39 = arith.constant 0 : index
      %c0_40 = arith.constant 0 : index
      %53 = vector.load %arg11[%c0_38, %c0_39, %c0_40] : memref<4x1x128xf32, #tpu.memory_space<vmem>>, vector<4x1x128xf32>
      %54 = tpu.reciprocal %53 {approx = true} : vector<4x1x128xf32> -> vector<4x1x128xf32>
      %c0_41 = arith.constant 0 : index
      %c0_42 = arith.constant 0 : index
      %c0_43 = arith.constant 0 : index
      %55 = vector.load %arg12[%c0_41, %c0_42, %c0_43] : memref<4x8x128xf32, #tpu.memory_space<vmem>>, vector<4x8x128xf32>
      %56 = vector.broadcast %54 : vector<4x1x128xf32> to vector<4x8x128xf32>
      %57 = arith.mulf %55, %56 : vector<4x8x128xf32>
      %58 = vector.shape_cast %57 : vector<4x8x128xf32> to vector<32x128xf32>
      %59 = arith.truncf %58 : vector<32x128xf32> to vector<32x128xbf16>
      %cst_44 = arith.constant dense<0.000000e+00> : vector<32x128xf32>
      %60 = tpu.matmul %48, %59, %cst_44 {dimension_numbers = #tpu.dot_dimension_numbers<[1], [0], [0], [1], [0, 0, 1, 1], [], []>} : vector<32x32xbf16>, vector<32x128xbf16>, vector<32x128xf32> -> vector<32x128xf32>
      %61 = vector.broadcast %50 : vector<32x1xf32> to vector<32x128xf32>
      %62 = arith.addf %60, %61 : vector<32x128xf32>
      %c0_45 = arith.constant 0 : index
      %c0_46 = arith.constant 0 : index
      %c0_47 = arith.constant 0 : index
      %63 = vector.load %arg3[%c0_45, %c0_46, %c0_47] : memref<1x32x128xf32, #tpu.memory_space<vmem>>, vector<1x32x128xf32>
      %64 = vector.shape_cast %63 : vector<1x32x128xf32> to vector<32x128xf32>
      %65 = arith.addf %64, %62 : vector<32x128xf32>
      %66 = arith.truncf %65 : vector<32x128xf32> to vector<32x128xbf16>
      %cst_48 = arith.constant dense<0.000000e+00> : vector<128x128xf32>
      %67 = tpu.matmul %49, %66, %cst_48 {dimension_numbers = #tpu.dot_dimension_numbers<[1], [0], [0], [1], [0, 0, 1, 1], [], []>} : vector<128x32xbf16>, vector<32x128xbf16>, vector<128x128xf32> -> vector<128x128xf32>
      %68 = vector.broadcast %51 : vector<128x1xf32> to vector<128x128xf32>
      %69 = arith.addf %67, %68 : vector<128x128xf32>
      %cst_49 = arith.constant 5.000000e-01 : f32
      %70 = vector.broadcast %cst_49 : f32 to vector<128x128xf32>
      %71 = arith.mulf %70, %69 : vector<128x128xf32>
      %cst_50 = arith.constant 0.707106769 : f32
      %72 = vector.broadcast %cst_50 : f32 to vector<128x128xf32>
      %73 = arith.mulf %69, %72 : vector<128x128xf32>
      %cst_51 = arith.constant 0.000000e+00 : f32
      %74 = vector.broadcast %cst_51 : f32 to vector<128x128xf32>
      %75 = arith.cmpf oge, %73, %74 : vector<128x128xf32>
      %cst_52 = arith.constant 1.000000e+00 : f32
      %cst_53 = arith.constant -1.000000e+00 : f32
      %76 = vector.broadcast %cst_52 : f32 to vector<128x128xf32>
      %77 = vector.broadcast %cst_53 : f32 to vector<128x128xf32>
      %78 = arith.select %75, %76, %77 : vector<128x128xi1>, vector<128x128xf32>
      %79 = math.absf %73 : vector<128x128xf32>
      %cst_54 = arith.constant 0.327591091 : f32
      %80 = vector.broadcast %cst_54 : f32 to vector<128x128xf32>
      %81 = arith.mulf %80, %79 : vector<128x128xf32>
      %cst_55 = arith.constant 1.000000e+00 : f32
      %82 = vector.broadcast %cst_55 : f32 to vector<128x128xf32>
      %83 = arith.addf %82, %81 : vector<128x128xf32>
      %cst_56 = arith.constant 1.000000e+00 : f32
      %84 = vector.broadcast %cst_56 : f32 to vector<128x128xf32>
      %85 = arith.divf %84, %83 : vector<128x128xf32>
      %cst_57 = arith.constant 1.06140542 : f32
      %86 = vector.broadcast %cst_57 : f32 to vector<128x128xf32>
      %87 = arith.mulf %86, %85 : vector<128x128xf32>
      %cst_58 = arith.constant -1.45315206 : f32
      %88 = vector.broadcast %cst_58 : f32 to vector<128x128xf32>
      %89 = arith.addf %87, %88 : vector<128x128xf32>
      %90 = arith.mulf %89, %85 : vector<128x128xf32>
      %cst_59 = arith.constant 1.42141378 : f32
      %91 = vector.broadcast %cst_59 : f32 to vector<128x128xf32>
      %92 = arith.addf %90, %91 : vector<128x128xf32>
      %93 = arith.mulf %92, %85 : vector<128x128xf32>
      %cst_60 = arith.constant -0.284496725 : f32
      %94 = vector.broadcast %cst_60 : f32 to vector<128x128xf32>
      %95 = arith.addf %93, %94 : vector<128x128xf32>
      %96 = arith.mulf %95, %85 : vector<128x128xf32>
      %cst_61 = arith.constant 0.254829586 : f32
      %97 = vector.broadcast %cst_61 : f32 to vector<128x128xf32>
      %98 = arith.addf %96, %97 : vector<128x128xf32>
      %99 = arith.mulf %98, %85 : vector<128x128xf32>
      %cst_62 = arith.constant 0.000000e+00 : f32
      %100 = vector.broadcast %cst_62 : f32 to vector<128x128xf32>
      %101 = arith.subf %100, %79 : vector<128x128xf32>
      %102 = arith.mulf %101, %79 : vector<128x128xf32>
      %103 = math.exp %102 : vector<128x128xf32>
      %104 = arith.mulf %99, %103 : vector<128x128xf32>
      %cst_63 = arith.constant 1.000000e+00 : f32
      %105 = vector.broadcast %cst_63 : f32 to vector<128x128xf32>
      %106 = arith.subf %105, %104 : vector<128x128xf32>
      %107 = arith.mulf %78, %106 : vector<128x128xf32>
      %cst_64 = arith.constant 1.000000e+00 : f32
      %108 = vector.broadcast %cst_64 : f32 to vector<128x128xf32>
      %109 = arith.addf %108, %107 : vector<128x128xf32>
      %110 = arith.mulf %71, %109 : vector<128x128xf32>
      %111 = arith.truncf %110 : vector<128x128xf32> to vector<128x128xbf16>
      %c0_65 = arith.constant 0 : index
      %c0_66 = arith.constant 0 : index
      %112 = vector.load %arg6[%c0_65, %c0_66] : memref<32x128xbf16, #tpu.memory_space<vmem>>, vector<32x128xbf16>
      %cst_67 = arith.constant dense<0.000000e+00> : vector<32x128xf32>
      %113 = tpu.matmul %112, %111, %cst_67 {dimension_numbers = #tpu.dot_dimension_numbers<[1], [0], [0], [1], [0, 0, 1, 1], [], []>} : vector<32x128xbf16>, vector<128x128xbf16>, vector<32x128xf32> -> vector<32x128xf32>
      %114 = vector.broadcast %52 : vector<32x1xf32> to vector<32x128xf32>
      %115 = arith.addf %113, %114 : vector<32x128xf32>
      %c0_68 = arith.constant 0 : index
      %c0_69 = arith.constant 0 : index
      %c0_70 = arith.constant 0 : index
      %116 = vector.load %arg8[%c0_68, %c0_69, %c0_70] : memref<1x32x128xf32, #tpu.memory_space<vmem>>, vector<1x32x128xf32>
      %117 = vector.shape_cast %116 : vector<1x32x128xf32> to vector<32x128xf32>
      %118 = vector.shape_cast %115 : vector<32x128xf32> to vector<1x32x128xf32>
      tpu.vector_store %arg8[%c0_68, %c0_69, %c0_70], %118 {strides = array<i32>} : memref<1x32x128xf32, #tpu.memory_space<vmem>>, vector<1x32x128xf32>,
    } else {
    }
    return
  }
  func.func @transform_0(%arg0: i32, %arg1: i32, %arg2: i32) -> (i32, i32, i32) {
    %c0_i32 = arith.constant 0 : i32
    %c0_i32_0 = arith.constant 0 : i32
    return %arg0, %c0_i32, %arg1 : i32, i32, i32
  }
  func.func @transform_1(%arg0: i32, %arg1: i32, %arg2: i32) -> (i32, i32, i32) {
    %c0_i32 = arith.constant 0 : i32
    %c0_i32_0 = arith.constant 0 : i32
    return %arg0, %c0_i32, %arg2 : i32, i32, i32
  }
  func.func @transform_2(%arg0: i32, %arg1: i32, %arg2: i32) -> (i32, i32) {
    %c0_i32 = arith.constant 0 : i32
    %c0_i32_0 = arith.constant 0 : i32
    %c0_i32_1 = arith.constant 0 : i32
    return %c0_i32, %c0_i32_0 : i32, i32
  }
  func.func @transform_3(%arg0: i32, %arg1: i32, %arg2: i32) -> (i32, i32) {
    %c0_i32 = arith.constant 0 : i32
    %c0_i32_0 = arith.constant 0 : i32
    %c0_i32_1 = arith.constant 0 : i32
    return %c0_i32, %c0_i32_0 : i32, i32
  }
  func.func @transform_4(%arg0: i32, %arg1: i32, %arg2: i32) -> (i32, i32) {
    %c0_i32 = arith.constant 0 : i32
    %c0_i32_0 = arith.constant 0 : i32
    %c0_i32_1 = arith.constant 0 : i32
    return %c0_i32, %c0_i32_0 : i32, i32
  }
  func.func @transform_5(%arg0: i32, %arg1: i32, %arg2: i32) -> (i32, i32, i32) {
    %c0_i32 = arith.constant 0 : i32
    %c0_i32_0 = arith.constant 0 : i32
    return %arg0, %c0_i32, %arg1 : i32, i32, i32
  }
}

</mosaic_0001>

<llo_original>
// kernel: ae_iteration.2
$region0: #{ae_iteration.2}
  #allocation0 [shape = 'u32[]', space=smem, size = 0x4, offset = 0x4, fixed_abs, tag = 'smem constant byte address 0x4 - core index']
  #allocation1 [shape = 'u32[144,128]{1,0:T(1,128)}', space=vmem, size = 0x12000, scoped, tag = 'internal scratch']
  %s0 = inlined_call_operand.hbm [shape: bf16[2,32,128], index: 0, kind: input, shape index: {}]
  %s1 = inlined_call_operand.hbm [shape: bf16[64,32], index: 1, kind: input, shape index: {}]
  %s2 = inlined_call_operand.hbm [shape: f32[64,1], index: 2, kind: input, shape index: {}]
  %s3 = inlined_call_operand.hbm [shape: bf16[2,64,128], index: 3, kind: output, shape index: {}]
  %s4 = sld [smem:[#allocation0]]
  $region57: #{ae_iteration.2} parent=0
    _
  %s6 = ssub.s32 1, %s4
  %s7 = scalar_select 0, %s6, %s4
  $region1: #{ae_iteration.2} parent=0
    #allocation2 [shape = 'u8[16384]{0}', space=vmem, size = 0x4000, scoped, tag = 'input window, operand 0']
    #allocation3 [shape = 's32[2]{0}', space=sflag, size = 0x8, scoped, tag = 'scoped memory for ae_iteration.2']
    #allocation4 [shape = 's32[2]{0}', space=sflag, size = 0x8, scoped, tag = 'scoped memory for ae_iteration.2']
    #allocation5 [shape = 'u8[16384]{0}', space=vmem, size = 0x4000, scoped, tag = 'input window, operand 1, single buffered']
    #allocation6 [shape = 's32[1]{0}', space=sflag, size = 0x4, scoped, tag = 'scoped memory for ae_iteration.2']
    #allocation7 [shape = 'u8[32768]{0}', space=vmem, size = 0x8000, scoped, tag = 'input window, operand 2, single buffered']
    #allocation8 [shape = 'u8[32768]{0}', space=vmem, size = 0x8000, scoped, tag = 'output window, operand 0']
    %8 = vsyncpa [#allocation3], 0
    %s9 = scalar_lea.sflag [#allocation3], 1
    %10 = vsyncpa %s9, 0
    %11 = vsyncpa [#allocation6], 0
    %12 = vsyncpa [#allocation4], 0
    %s13 = scalar_lea.sflag [#allocation4], 1
    %14 = vsyncpa %s13, 0
    loop: start=0, step=1, limit=4
    $region2: #{ae_iteration.2} parent=1 // loop_pre_header
      _
    $region3: #{ae_iteration.2} parent=1 // loop_header
      %s16 = sphi 0, %s20
      %p17 = scmp.ge.s32.totalorder %s16, 4
      %s23 = sphi 0, %s35
      %s24 = sphi 0, %s31
      %s25 = sphi 0, %s23
      %s26 = sphi 0, %s24
      %s27 = sphi 0, %s25
      %s28 = sphi 0, %s26
      %s40 = sphi 0, %s42
      %s43 = sphi 0, %s40
      %s44 = sphi 0, %s43
      %s60 = sphi 0, %s44
      %s64 = sphi 0, %s64
      %s66 = sphi 0, %s64
      %s67 = sphi 0, %s66
      %s81 = sphi 0, %s67
      %s85 = sphi 0, %s85
      %s87 = sphi 0, %s85
      %s88 = sphi 0, %s87
      %s102 = sphi 0, %s88
      %s110 = sphi 0, %s112
      %s113 = sphi 0, %s110
      %s114 = sphi 0, %s113
      %s130 = sphi 0, %s114
    $region4: #{ae_iteration.2} parent=1 // loop_header_branch
      %19 = sbr.rel (%p17) target = $region8
    $region5: #{ae_iteration.2} parent=1 // loop_body
      %s21 = ssub.s32 %s16, 1
      %s22 = ssub.s32 %s16, 2
      %s29 = sadd.s32 1, %s24
      %p30 = scmp.ge.s32.totalorder %s29, 1
      %s31 = scalar_select %p30, 0, %s29
      %s32 = sadd.s32 1, %s23
      %s33 = scalar_select %p30, %s32, %s23
      %p34 = scmp.ge.s32.totalorder %s33, 2
      %s35 = scalar_select %p34, 0, %s33
      %s36 = ssub.s32 %s23, %s35
      %s37 = ssub.s32 %s24, %s31
      %s38 = sor.u32 %s36, %s37
      %p39 = scmp.eq.s32.totalorder %s38, 0
      %s41 = sadd.s32 %s40, 1
      %s42 = scalar_select %p39, %s40, %s41
      %p45 = pneg %p39
      %p46 = scmp.eq.s32.totalorder %s16, 1
      %p47 = por %p45, %p46
      %p48 = scmp.ne.s32.totalorder %s40, %s43
      %p49 = scmp.eq.s32.totalorder %s16, 0
      %p50 = por %p48, %p49
      %p51 = scmp.ne.s32.totalorder %s40, %s43
      %p52 = scmp.eq.s32.totalorder %s21, 1
      %p53 = por %p51, %p52
      %p54 = scmp.ne.s32.totalorder %s43, %s44
      %p55 = scmp.eq.s32.totalorder %s21, 0
      %p56 = por %p54, %p55
      %p57 = scmp.ne.s32.totalorder %s43, %s44
      %p58 = scmp.eq.s32.totalorder %s22, 1
      %p59 = por %p57, %p58
      %p61 = scmp.ne.s32.totalorder %s44, %s60
      %p62 = scmp.eq.s32.totalorder %s22, 0
      %p63 = por %p61, %p62
      %s65 = sadd.s32 %s64, 1
      %p68 = scmp.eq.s32.totalorder %s16, 1
      %p69 = scmp.ne.s32.totalorder %s64, %s66
      %p70 = scmp.eq.s32.totalorder %s16, 0
      %p71 = por %p69, %p70
      %p72 = scmp.ne.s32.totalorder %s64, %s66
      %p73 = scmp.eq.s32.totalorder %s21, 1
      %p74 = por %p72, %p73
      %p75 = scmp.ne.s32.totalorder %s66, %s67
      %p76 = scmp.eq.s32.totalorder %s21, 0
      %p77 = por %p75, %p76
      %p78 = scmp.ne.s32.totalorder %s66, %s67
      %p79 = scmp.eq.s32.totalorder %s22, 1
      %p80 = por %p78, %p79
      %p82 = scmp.ne.s32.totalorder %s67, %s81
      %p83 = scmp.eq.s32.totalorder %s22, 0
      %p84 = por %p82, %p83
      %s86 = sadd.s32 %s85, 1
      %p89 = scmp.eq.s32.totalorder %s16, 1
      %p90 = scmp.ne.s32.totalorder %s85, %s87
      %p91 = scmp.eq.s32.totalorder %s16, 0
      %p92 = por %p90, %p91
      %p93 = scmp.ne.s32.totalorder %s85, %s87
      %p94 = scmp.eq.s32.totalorder %s21, 1
      %p95 = por %p93, %p94
      %p96 = scmp.ne.s32.totalorder %s87, %s88
      %p97 = scmp.eq.s32.totalorder %s21, 0
      %p98 = por %p96, %p97
      %p99 = scmp.ne.s32.totalorder %s87, %s88
      %p100 = scmp.eq.s32.totalorder %s22, 1
      %p101 = por %p99, %p100
      %p103 = scmp.ne.s32.totalorder %s88, %s102
      %p104 = scmp.eq.s32.totalorder %s22, 0
      %p105 = por %p103, %p104
      %s106 = ssub.s32 %s23, %s35
      %s107 = ssub.s32 %s24, %s31
      %s108 = sor.u32 %s106, %s107
      %p109 = scmp.eq.s32.totalorder %s108, 0
      %s111 = sadd.s32 %s110, 1
      %s112 = scalar_select %p109, %s110, %s111
      %p115 = pneg %p109
      %p116 = scmp.eq.s32.totalorder %s16, 1
      %p117 = por %p115, %p116
      %p118 = scmp.ne.s32.totalorder %s110, %s113
      %p119 = scmp.eq.s32.totalorder %s16, 0
      %p120 = por %p118, %p119
      %p121 = scmp.ne.s32.totalorder %s110, %s113
      %p122 = scmp.eq.s32.totalorder %s21, 1
      %p123 = por %p121, %p122
      %p124 = scmp.ne.s32.totalorder %s113, %s114
      %p125 = scmp.eq.s32.totalorder %s21, 0
      %p126 = por %p124, %p125
      %p127 = scmp.ne.s32.totalorder %s113, %s114
      %p128 = scmp.eq.s32.totalorder %s22, 1
      %p129 = por %p127, %p128
      %p131 = scmp.ne.s32.totalorder %s114, %s130
      %p132 = scmp.eq.s32.totalorder %s22, 0
      %p133 = por %p131, %p132
      %p134 = scmp.le.s32.totalorder 1, %s16
      %p135 = scmp.lt.s32.totalorder %s16, 3
      %p136 = pnand %p134, %p135
      %p137 = pneg %p136
      // Predicated region
      $region9: #{ae_iteration.2} parent=5 // pred_check
        _
      $region10: #{ae_iteration.2} parent=5 // pred_check_branch
        %139 = sbr.rel (%p136) target = $region12
      $region11: #{ae_iteration.2} parent=5 // pred_region
        %s140 = ssub.s32 %s16, 1
        // Predicated region
        $region13: #{ae_iteration.2} parent=11 // pred_check
          %p141 = pneg %p77
        $region14: #{ae_iteration.2} parent=11 // pred_check_branch
          %143 = sbr.rel (%p141) target = $region16
        $region15: #{ae_iteration.2} parent=11 // pred_region
          %s145 = ssub.s32 512, 512
          %146 = vsyncadd [#allocation6], %s145
          %s147 = sshll.u32 [#allocation5], 4
          %s148 = int_to_ptr.vmem [resolvable:$true] %s147
          %153 = dma.hbm_to_vmem [thread:$0]  %s1, 512, %s148, [#allocation6], 64, 64, 4
        $region16: #{ae_iteration.2} parent=11 // pred_fallthru
          _
        // Predicated region
        $region17: #{ae_iteration.2} parent=11 // pred_check
          %p154 = pneg %p98
        $region18: #{ae_iteration.2} parent=11 // pred_check_branch
          %156 = sbr.rel (%p154) target = $region20
        $region19: #{ae_iteration.2} parent=11 // pred_region
          %s158 = ssub.s32 1024, 1024
          %159 = vsyncadd [#allocation6], %s158
          %s160 = sshll.u32 [#allocation7], 4
          %s161 = int_to_ptr.vmem [resolvable:$true] %s160
          %166 = dma.hbm_to_vmem [thread:$0]  %s2, 1024, %s161, [#allocation6], 128, 128, 8
        $region20: #{ae_iteration.2} parent=11 // pred_fallthru
          _
      $region12: #{ae_iteration.2} parent=5 // pred_fallthru
        _
      %p167 = scmp.lt.s32.totalorder %s16, 2
      // Predicated region
      $region21: #{ae_iteration.2} parent=5 // pred_check
        %p168 = pneg %p167
      $region22: #{ae_iteration.2} parent=5 // pred_check_branch
        %170 = sbr.rel (%p168) target = $region24
      $region23: #{ae_iteration.2} parent=5 // pred_region
        // Predicated region
        $region25: #{ae_iteration.2} parent=23 // pred_check
          %p171 = pneg %p50
        $region26: #{ae_iteration.2} parent=23 // pred_check_branch
          %173 = sbr.rel (%p171) target = $region28
        $region27: #{ae_iteration.2} parent=23 // pred_region
          %s174 = sand.u32 %s40, 1
          %s175 = scalar_lea.sflag [#allocation3], %s174
          %s176 = sand.u32 %s40, 1
          %s177 = smul.addr %s176, 16
          %s178 = scalar_lea.vmem [#allocation2], %s177
          %s180 = ssub.s32 256, 256
          %181 = vsyncadd %s175, %s180
          %s182 = smul.addr %s23, 4
          %s183 = sadd.s32 %s24, %s182
          %s184 = smul.addr %s183, 64
          %s185 = scalar_lea.hbm %s0, %s184
          %s186 = sshll.u32 %s178, 4
          %s187 = int_to_ptr.vmem [resolvable:$true] %s186
          %192 = dma.hbm_to_vmem [thread:$0]  %s185, 256, %s187, %s175, 64, 64, 4
        $region28: #{ae_iteration.2} parent=23 // pred_fallthru
          _
      $region24: #{ae_iteration.2} parent=5 // pred_fallthru
        _
      %p193 = scmp.le.s32.totalorder 1, %s16
      %p194 = scmp.lt.s32.totalorder %s16, 3
      %p195 = pnand %p193, %p194
      %p196 = pneg %p195
      // Predicated region
      $region29: #{ae_iteration.2} parent=5 // pred_check
        _
      $region30: #{ae_iteration.2} parent=5 // pred_check_branch
        %198 = sbr.rel (%p195) target = $region32
      $region31: #{ae_iteration.2} parent=5 // pred_region
        %s199 = ssub.s32 %s16, 1
        %s200 = sand.u32 %s43, 1
        %s201 = scalar_lea.sflag [#allocation3], %s200
        %s202 = sand.u32 %s43, 1
        %s203 = smul.addr %s202, 16
        %s204 = scalar_lea.vmem [#allocation2], %s203
        // Predicated region
        $region33: #{ae_iteration.2} parent=31 // pred_check
          %p205 = pneg %p56
        $region34: #{ae_iteration.2} parent=31 // pred_check_branch
          %207 = sbr.rel (%p205) target = $region36
        $region35: #{ae_iteration.2} parent=31 // pred_region
          %208 = dma.done %s201, 256
        $region36: #{ae_iteration.2} parent=31 // pred_fallthru
          _
        // Predicated region
        $region37: #{ae_iteration.2} parent=31 // pred_check
          %p209 = pneg %p77
        $region38: #{ae_iteration.2} parent=31 // pred_check_branch
          %211 = sbr.rel (%p209) target = $region40
        $region39: #{ae_iteration.2} parent=31 // pred_region
          %212 = dma.done [#allocation6], 512
        $region40: #{ae_iteration.2} parent=31 // pred_fallthru
          _
        // Predicated region
        $region41: #{ae_iteration.2} parent=31 // pred_check
          %p213 = pneg %p98
        $region42: #{ae_iteration.2} parent=31 // pred_check_branch
          %215 = sbr.rel (%p213) target = $region44
        $region43: #{ae_iteration.2} parent=31 // pred_region
          %216 = dma.done [#allocation6], 1024
        $region44: #{ae_iteration.2} parent=31 // pred_fallthru
          _
        %s217 = sand.u32 %s43, 1
        %s218 = scalar_lea.sflag [#allocation3], %s217
        %s219 = sand.u32 %s43, 1
        %s220 = smul.addr %s219, 16
        %s221 = scalar_lea.vmem [#allocation2], %s220
        %p222 = pneg %p56
        %p223 = pneg %p53
        %p224 = pneg %p77
        %p225 = pneg %p74
        %p226 = pneg %p98
        %p227 = pneg %p95
        %p228 = pneg %p126
        %p229 = pneg %p123
        %s230 = sand.u32 %s113, 1
        %s231 = scalar_lea.sflag [#allocation4], %s230
        %s232 = sand.u32 %s113, 1
        %s233 = smul.addr %s232, 32
        %s234 = scalar_lea.vmem [#allocation8], %s233
        %v236 = vld [vmem:[#allocation5] sm:$0xf]
        %v237 = vld [vmem:[#allocation5 + $0x4] sm:$0xf]
        %v238 = vld [vmem:[#allocation5 + $0x8] sm:$0xf]
        %v239 = vld [vmem:[#allocation5 + $0xc] sm:$0xf]
        %v240 = vld [vmem:[#allocation5 + $0x10] sm:$0xf]
        %v241 = vld [vmem:[#allocation5 + $0x14] sm:$0xf]
        %v242 = vld [vmem:[#allocation5 + $0x18] sm:$0xf]
        %v243 = vld [vmem:[#allocation5 + $0x1c] sm:$0xf]
        %v244 = vld [vmem:[%s204] sm:$0xf]
        %v245 = vld [vmem:[%s204 + $0x4] sm:$0xf]
        %v246 = vld [vmem:[%s204 + $0x8] sm:$0xf]
        %v247 = vld [vmem:[%s204 + $0xc] sm:$0xf]
        %v248 = vld [vmem:[#allocation7] sm:$0xff]
        %v249 = vld [vmem:[#allocation7 + $0x8] sm:$0xff]
        %v250 = vld [vmem:[#allocation7 + $0x10] sm:$0xff]
        %v251 = vld [vmem:[#allocation7 + $0x18] sm:$0xff]
        %v252 = vld [vmem:[#allocation7 + $0x20] sm:$0xff]
        %v253 = vld [vmem:[#allocation7 + $0x28] sm:$0xff]
        %v254 = vld [vmem:[#allocation7 + $0x30] sm:$0xff]
        %v255 = vld [vmem:[#allocation7 + $0x38] sm:$0xff]
        %257 = vset.pattern.permute.xlu0 0
        %258 = vperm.xlu0 %257, %v248
        %v259 = vpop.permute.xlu0 %258
        %262 = vset.pattern.permute.xlu0 0
        %263 = vperm.xlu0 %262, %v249
        %v264 = vpop.permute.xlu0 %263
        %267 = vset.pattern.permute.xlu0 0
        %268 = vperm.xlu0 %267, %v250
        %v269 = vpop.permute.xlu0 %268
        %272 = vset.pattern.permute.xlu0 0
        %273 = vperm.xlu0 %272, %v251
        %v274 = vpop.permute.xlu0 %273
        %277 = vset.pattern.permute.xlu0 0
        %278 = vperm.xlu0 %277, %v252
        %v279 = vpop.permute.xlu0 %278
        %282 = vset.pattern.permute.xlu0 0
        %283 = vperm.xlu0 %282, %v253
        %v284 = vpop.permute.xlu0 %283
        %287 = vset.pattern.permute.xlu0 0
        %288 = vperm.xlu0 %287, %v254
        %v289 = vpop.permute.xlu0 %288
        %292 = vset.pattern.permute.xlu0 0
        %293 = vperm.xlu0 %292, %v255
        %v294 = vpop.permute.xlu0 %293
        %v304 = vunpack.c.l.b16 %v236
        %v305 = vunpack.c.l.b16 %v237
        %v306 = vunpack.c.l.b16 %v238
        %v307 = vunpack.c.l.b16 %v239
        %v308 = vunpack.c.l.b16 %v240
        %v309 = vunpack.c.l.b16 %v241
        %v310 = vunpack.c.l.b16 %v242
        %v311 = vunpack.c.l.b16 %v243
        %v312 = vpack.c.b16 %v305, %v304
        %v313 = vpack.c.b16 %v307, %v306
        %v314 = vpack.c.b16 %v309, %v308
        %v315 = vpack.c.b16 %v311, %v310
        %v320 = vunpack.c.l.b16 %v244
        %v321 = vunpack.c.l.b16 %v245
        %v322 = vunpack.c.l.b16 %v246
        %v323 = vunpack.c.l.b16 %v247
        %v324 = vpack.c.b16 %v321, %v320
        %v325 = vpack.c.b16 %v323, %v322
        %vm328 = vcmask 261120
        %v330 = vsel %vm328, %v312, 0
        %v333 = vsel %vm328, %v313, 0
        %v336 = vsel %vm328, %v314, 0
        %v339 = vsel %vm328, %v315, 0
        %341 = vmatprep.subr.bf16.mxu0 0
        %342 = vmatpush1.bf16.msra.mxu0 %v324
        %343 = vmatprep.subr.bf16.mxu0 0
        %344 = vmatpush1.bf16.msra.mxu0 %v325
        %345 = vmatprep.subr.bf16.mxu0 0
        %346 = vmatpush1.bf16.msra.mxu0 0
        %347 = vmatprep.subr.bf16.mxu0 0
        %348 = vmatpush1.bf16.msra.mxu0 0
        %349 = vmatprep.subr.bf16.mxu0 0
        %350 = vmatpush1.bf16.msra.mxu0 0
        %351 = vmatprep.subr.bf16.mxu0 0
        %352 = vmatpush1.bf16.msra.mxu0 0
        %353 = vmatprep.subr.bf16.mxu0 0
        %354 = vmatpush1.bf16.msra.mxu0 0
        %355 = vmatprep.subr.bf16.mxu0 0
        %356 = vmatpush1.bf16.msra.mxu0 0
        %357 = vmatprep.subr.bf16.mxu0 0
        %358 = vmatpush1.bf16.msra.mxu0 0
        %359 = vmatprep.subr.bf16.mxu0 0
        %360 = vmatpush1.bf16.msra.mxu0 0
        %361 = vmatprep.subr.bf16.mxu0 0
        %362 = vmatpush1.bf16.msra.mxu0 0
        %363 = vmatprep.subr.bf16.mxu0 0
        %364 = vmatpush1.bf16.msra.mxu0 0
        %365 = vmatprep.subr.bf16.mxu0 0
        %366 = vmatpush1.bf16.msra.mxu0 0
        %367 = vmatprep.subr.bf16.mxu0 0
        %368 = vmatpush1.bf16.msra.mxu0 0
        %369 = vmatprep.subr.bf16.mxu0 0
        %370 = vmatpush1.bf16.msra.mxu0 0
        %371 = vmatprep.subr.bf16.mxu0 0
        %372 = vmatpush1.bf16.msra.mxu0 0
        %373 = vmatprep.mubr.bf16.mxu0 0
        %374 = vmatmul.mubr.bf16.gmra.mrb[0].mxu0 %v330
        %v375 = vpop.f32.mrb[0].mxu0
        %v376 = vadd.f32 %v259, %v375
        %v377 = vpop.f32.mrb[0].mxu0
        %v378 = vpop.f32.mrb[0].mxu0
        %v379 = vadd.f32 %v264, %v378
        %v380 = vpop.f32.mrb[0].mxu0
        %381 = vmatprep.mubr.bf16.mxu0 0
        %382 = vmatmul.mubr.bf16.gmra.mrb[0].mxu0 %v333
        %v383 = vpop.f32.mrb[0].mxu0
        %v384 = vadd.f32 %v269, %v383
        %v385 = vpop.f32.mrb[0].mxu0
        %v386 = vpop.f32.mrb[0].mxu0
        %v387 = vadd.f32 %v274, %v386
        %v388 = vpop.f32.mrb[0].mxu0
        %389 = vmatprep.mubr.bf16.mxu0 0
        %390 = vmatmul.mubr.bf16.gmra.mrb[0].mxu0 %v336
        %v391 = vpop.f32.mrb[0].mxu0
        %v392 = vadd.f32 %v279, %v391
        %v393 = vpop.f32.mrb[0].mxu0
        %v394 = vpop.f32.mrb[0].mxu0
        %v395 = vadd.f32 %v284, %v394
        %v396 = vpop.f32.mrb[0].mxu0
        %397 = vmatprep.mubr.bf16.mxu0 0
        %398 = vmatmul.mubr.bf16.gmra.mrb[0].mxu0 %v339
        %v399 = vpop.f32.mrb[0].mxu0
        %v400 = vadd.f32 %v289, %v399
        %v401 = vpop.f32.mrb[0].mxu0
        %v402 = vpop.f32.mrb[0].mxu0
        %v403 = vadd.f32 %v294, %v402
        %v404 = vpop.f32.mrb[0].mxu0
        %405 = vdwg.mxu0
        %v406 = vpack.c.bf16 %v379, %v376
        %v407 = vpack.c.bf16 %v387, %v384
        %v408 = vpack.c.bf16 %v395, %v392
        %v409 = vpack.c.bf16 %v403, %v400
        %v414 = vunpack.c.l.b16 %v406
        %v415 = vunpack.c.h.b16 %v406
        %v416 = vunpack.c.l.b16 %v407
        %v417 = vunpack.c.h.b16 %v407
        %v418 = vunpack.c.l.b16 %v408
        %v419 = vunpack.c.h.b16 %v408
        %v420 = vunpack.c.l.b16 %v409
        %v421 = vunpack.c.h.b16 %v409
        %v422 = vpack.c.b16 %v414, %v414
        %v423 = vpack.c.b16 %v415, %v415
        %v424 = vpack.c.b16 %v416, %v416
        %v425 = vpack.c.b16 %v417, %v417
        %v426 = vpack.c.b16 %v418, %v418
        %v427 = vpack.c.b16 %v419, %v419
        %v428 = vpack.c.b16 %v420, %v420
        %v429 = vpack.c.b16 %v421, %v421
        %438 = vst [vmem:[%s234] sm:$0xf] %v422
        %439 = vst [vmem:[%s234 + $0x4] sm:$0xf] %v423
        %440 = vst [vmem:[%s234 + $0x8] sm:$0xf] %v424
        %441 = vst [vmem:[%s234 + $0xc] sm:$0xf] %v425
        %442 = vst [vmem:[%s234 + $0x10] sm:$0xf] %v426
        %443 = vst [vmem:[%s234 + $0x14] sm:$0xf] %v427
        %444 = vst [vmem:[%s234 + $0x18] sm:$0xf] %v428
        %445 = vst [vmem:[%s234 + $0x1c] sm:$0xf] %v429
        %s446 = sand.u32 %s113, 1
        %s447 = scalar_lea.sflag [#allocation4], %s446
        %s448 = sand.u32 %s113, 1
        %s449 = smul.addr %s448, 32
        %s450 = scalar_lea.vmem [#allocation8], %s449
        // Predicated region
        $region45: #{ae_iteration.2} parent=31 // pred_check
          %p451 = pneg %p123
        $region46: #{ae_iteration.2} parent=31 // pred_check_branch
          %453 = sbr.rel (%p451) target = $region48
        $region47: #{ae_iteration.2} parent=31 // pred_region
          %s455 = ssub.s32 512, 512
          %456 = vsyncadd %s447, %s455
          %s457 = smul.addr %s25, 8
          %s458 = sadd.s32 %s26, %s457
          %s459 = smul.addr %s458, 64
          %s460 = scalar_lea.hbm %s3, %s459
          %s461 = sshll.u32 %s450, 4
          %s462 = int_to_ptr.vmem [resolvable:$true] %s461
          %467 = dma.vmem_to_hbm [thread:$0]  %s462, 512, %s460, %s447, 64, 64, 4
        $region48: #{ae_iteration.2} parent=31 // pred_fallthru
          _
      $region32: #{ae_iteration.2} parent=5 // pred_fallthru
        _
      %p468 = scmp.le.s32.totalorder 2, %s16
      // Predicated region
      $region49: #{ae_iteration.2} parent=5 // pred_check
        %p469 = pneg %p468
      $region50: #{ae_iteration.2} parent=5 // pred_check_branch
        %471 = sbr.rel (%p469) target = $region52
      $region51: #{ae_iteration.2} parent=5 // pred_region
        %s472 = ssub.s32 %s16, 2
        // Predicated region
        $region53: #{ae_iteration.2} parent=51 // pred_check
          %p473 = pneg %p129
        $region54: #{ae_iteration.2} parent=51 // pred_check_branch
          %475 = sbr.rel (%p473) target = $region56
        $region55: #{ae_iteration.2} parent=51 // pred_region
          %s476 = sand.u32 %s114, 1
          %s477 = scalar_lea.sflag [#allocation4], %s476
          %s478 = sand.u32 %s114, 1
          %s479 = smul.addr %s478, 32
          %s480 = scalar_lea.vmem [#allocation8], %s479
          %481 = dma.done %s477, 512
        $region56: #{ae_iteration.2} parent=51 // pred_fallthru
          _
      $region52: #{ae_iteration.2} parent=5 // pred_fallthru
        _
    $region6: #{ae_iteration.2} parent=1 // loop_footer
      %s20 = sadd.s32 1, %s16
    $region7: #{ae_iteration.2} parent=1 // loop_footer_branch
      %15 = sbr.rel target = $region3
    $region8: #{ae_iteration.2} parent=1 // loop_exit
      _
    %482 = vsyncpa [#allocation3], 1
    %s483 = scalar_lea.sflag [#allocation3], 1
    %484 = vsyncpa %s483, 1
    %485 = vsyncpa [#allocation6], 1
    %486 = vsyncpa [#allocation4], 1
    %s487 = scalar_lea.sflag [#allocation4], 1
    %488 = vsyncpa %s487, 1

// kernel: ae_iteration.3
$region0: #{ae_iteration.3}
  #allocation0 [shape = 'u32[]', space=smem, size = 0x4, offset = 0x4, fixed_abs, tag = 'smem constant byte address 0x4 - core index']
  #allocation1 [shape = 'u32[144,128]{1,0:T(1,128)}', space=vmem, size = 0x12000, scoped, tag = 'internal scratch']
  #allocation2 [shape = 'bf16[4,8,128]{2,1,0:T(8,128)(2,1)}', space=vmem, size = 0x2000, scoped, tag = 'scratch operand']
  #allocation3 [shape = 'f32[4,1,128]{2,1,0:T(1,128)}', space=vmem, size = 0x800, scoped, tag = 'scratch operand']
  #allocation4 [shape = 'f32[4,1,128]{2,1,0:T(1,128)}', space=vmem, size = 0x800, scoped, tag = 'scratch operand']
  #allocation5 [shape = 'f32[4,8,128]{2,1,0:T(8,128)}', space=vmem, size = 0x4000, scoped, tag = 'scratch operand']
  %s0 = inlined_call_operand.hbm [shape: f32[2,32,128], index: 0, kind: input, shape index: {}]
  %s1 = inlined_call_operand.hbm [shape: bf16[2,64,128], index: 1, kind: input, shape index: {}]
  %s2 = inlined_call_operand.hbm [shape: bf16[192,32], index: 2, kind: input, shape index: {}]
  %s3 = inlined_call_operand.hbm [shape: bf16[32,128], index: 3, kind: input, shape index: {}]
  %s4 = inlined_call_operand.hbm [shape: f32[224,1], index: 4, kind: input, shape index: {}]
  %s5 = inlined_call_operand.hbm [shape: f32[2,32,128], index: 5, kind: output, shape index: {}]
  %s6 = sld [smem:[#allocation0]]
  $region81: #{ae_iteration.3} parent=0
    _
  %s8 = ssub.s32 1, %s6
  %s9 = scalar_select 0, %s8, %s6
  $region1: #{ae_iteration.3} parent=0
    #allocation6 [shape = 'u8[32768]{0}', space=vmem, size = 0x8000, scoped, tag = 'input window, operand 0']
    #allocation7 [shape = 's32[2]{0}', space=sflag, size = 0x8, scoped, tag = 'scoped memory for ae_iteration.3']
    #allocation8 [shape = 's32[2]{0}', space=sflag, size = 0x8, scoped, tag = 'scoped memory for ae_iteration.3']
    #allocation9 [shape = 'u8[32768]{0}', space=vmem, size = 0x8000, scoped, tag = 'input window, operand 1']
    #allocation10 [shape = 's32[2]{0}', space=sflag, size = 0x8, scoped, tag = 'scoped memory for ae_iteration.3']
    #allocation11 [shape = 'u8[49152]{0}', space=vmem, size = 0xc000, scoped, tag = 'input window, operand 2, single buffered']
    #allocation12 [shape = 'u8[8192]{0}', space=vmem, size = 0x2000, scoped, tag = 'input window, operand 3, single buffered']
    #allocation13 [shape = 's32[1]{0}', space=sflag, size = 0x4, scoped, tag = 'scoped memory for ae_iteration.3']
    #allocation14 [shape = 'u8[114688]{0}', space=vmem, size = 0x1c000, scoped, tag = 'input window, operand 4, single buffered']
    #allocation15 [shape = 'u8[32768]{0}', space=vmem, size = 0x8000, scoped, tag = 'output window, operand 0']
    %10 = vsyncpa [#allocation7], 0
    %s11 = scalar_lea.sflag [#allocation7], 1
    %12 = vsyncpa %s11, 0
    %13 = vsyncpa [#allocation10], 0
    %s14 = scalar_lea.sflag [#allocation10], 1
    %15 = vsyncpa %s14, 0
    %16 = vsyncpa [#allocation13], 0
    %17 = vsyncpa [#allocation8], 0
    %s18 = scalar_lea.sflag [#allocation8], 1
    %19 = vsyncpa %s18, 0
    loop: start=0, step=1, limit=4
    $region2: #{ae_iteration.3} parent=1 // loop_pre_header
      _
    $region3: #{ae_iteration.3} parent=1 // loop_header
      %s21 = sphi 0, %s25
      %p22 = scmp.ge.s32.totalorder %s21, 4
      %s28 = sphi 0, %s47
      %s29 = sphi 0, %s43
      %s30 = sphi 0, %s39
      %s31 = sphi 0, %s28
      %s32 = sphi 0, %s29
      %s33 = sphi 0, %s30
      %s34 = sphi 0, %s31
      %s35 = sphi 0, %s32
      %s36 = sphi 0, %s33
      %s52 = sphi 0, %s54
      %s55 = sphi 0, %s52
      %s56 = sphi 0, %s55
      %s72 = sphi 0, %s56
      %s80 = sphi 0, %s82
      %s83 = sphi 0, %s80
      %s84 = sphi 0, %s83
      %s100 = sphi 0, %s84
      %s104 = sphi 0, %s104
      %s106 = sphi 0, %s104
      %s107 = sphi 0, %s106
      %s121 = sphi 0, %s107
      %s125 = sphi 0, %s125
      %s127 = sphi 0, %s125
      %s128 = sphi 0, %s127
      %s142 = sphi 0, %s128
      %s146 = sphi 0, %s146
      %s148 = sphi 0, %s146
      %s149 = sphi 0, %s148
      %s163 = sphi 0, %s149
      %s171 = sphi 0, %s173
      %s174 = sphi 0, %s171
      %s175 = sphi 0, %s174
      %s191 = sphi 0, %s175
    $region4: #{ae_iteration.3} parent=1 // loop_header_branch
      %24 = sbr.rel (%p22) target = $region8
    $region5: #{ae_iteration.3} parent=1 // loop_body
      %s26 = ssub.s32 %s21, 1
      %s27 = ssub.s32 %s21, 2
      %s37 = sadd.s32 1, %s30
      %p38 = scmp.ge.s32.totalorder %s37, 1
      %s39 = scalar_select %p38, 0, %s37
      %s40 = sadd.s32 1, %s29
      %s41 = scalar_select %p38, %s40, %s29
      %p42 = scmp.ge.s32.totalorder %s41, 1
      %s43 = scalar_select %p42, 0, %s41
      %s44 = sadd.s32 1, %s28
      %s45 = scalar_select %p42, %s44, %s28
      %p46 = scmp.ge.s32.totalorder %s45, 2
      %s47 = scalar_select %p46, 0, %s45
      %s48 = ssub.s32 %s28, %s47
      %s49 = ssub.s32 %s29, %s43
      %s50 = sor.u32 %s48, %s49
      %p51 = scmp.eq.s32.totalorder %s50, 0
      %s53 = sadd.s32 %s52, 1
      %s54 = scalar_select %p51, %s52, %s53
      %p57 = pneg %p51
      %p58 = scmp.eq.s32.totalorder %s21, 1
      %p59 = por %p57, %p58
      %p60 = scmp.ne.s32.totalorder %s52, %s55
      %p61 = scmp.eq.s32.totalorder %s21, 0
      %p62 = por %p60, %p61
      %p63 = scmp.ne.s32.totalorder %s52, %s55
      %p64 = scmp.eq.s32.totalorder %s26, 1
      %p65 = por %p63, %p64
      %p66 = scmp.ne.s32.totalorder %s55, %s56
      %p67 = scmp.eq.s32.totalorder %s26, 0
      %p68 = por %p66, %p67
      %p69 = scmp.ne.s32.totalorder %s55, %s56
      %p70 = scmp.eq.s32.totalorder %s27, 1
      %p71 = por %p69, %p70
      %p73 = scmp.ne.s32.totalorder %s56, %s72
      %p74 = scmp.eq.s32.totalorder %s27, 0
      %p75 = por %p73, %p74
      %s76 = ssub.s32 %s28, %s47
      %s77 = ssub.s32 %s30, %s39
      %s78 = sor.u32 %s76, %s77
      %p79 = scmp.eq.s32.totalorder %s78, 0
      %s81 = sadd.s32 %s80, 1
      %s82 = scalar_select %p79, %s80, %s81
      %p85 = pneg %p79
      %p86 = scmp.eq.s32.totalorder %s21, 1
      %p87 = por %p85, %p86
      %p88 = scmp.ne.s32.totalorder %s80, %s83
      %p89 = scmp.eq.s32.totalorder %s21, 0
      %p90 = por %p88, %p89
      %p91 = scmp.ne.s32.totalorder %s80, %s83
      %p92 = scmp.eq.s32.totalorder %s26, 1
      %p93 = por %p91, %p92
      %p94 = scmp.ne.s32.totalorder %s83, %s84
      %p95 = scmp.eq.s32.totalorder %s26, 0
      %p96 = por %p94, %p95
      %p97 = scmp.ne.s32.totalorder %s83, %s84
      %p98 = scmp.eq.s32.totalorder %s27, 1
      %p99 = por %p97, %p98
      %p101 = scmp.ne.s32.totalorder %s84, %s100
      %p102 = scmp.eq.s32.totalorder %s27, 0
      %p103 = por %p101, %p102
      %s105 = sadd.s32 %s104, 1
      %p108 = scmp.eq.s32.totalorder %s21, 1
      %p109 = scmp.ne.s32.totalorder %s104, %s106
      %p110 = scmp.eq.s32.totalorder %s21, 0
      %p111 = por %p109, %p110
      %p112 = scmp.ne.s32.totalorder %s104, %s106
      %p113 = scmp.eq.s32.totalorder %s26, 1
      %p114 = por %p112, %p113
      %p115 = scmp.ne.s32.totalorder %s106, %s107
      %p116 = scmp.eq.s32.totalorder %s26, 0
      %p117 = por %p115, %p116
      %p118 = scmp.ne.s32.totalorder %s106, %s107
      %p119 = scmp.eq.s32.totalorder %s27, 1
      %p120 = por %p118, %p119
      %p122 = scmp.ne.s32.totalorder %s107, %s121
      %p123 = scmp.eq.s32.totalorder %s27, 0
      %p124 = por %p122, %p123
      %s126 = sadd.s32 %s125, 1
      %p129 = scmp.eq.s32.totalorder %s21, 1
      %p130 = scmp.ne.s32.totalorder %s125, %s127
      %p131 = scmp.eq.s32.totalorder %s21, 0
      %p132 = por %p130, %p131
      %p133 = scmp.ne.s32.totalorder %s125, %s127
      %p134 = scmp.eq.s32.totalorder %s26, 1
      %p135 = por %p133, %p134
      %p136 = scmp.ne.s32.totalorder %s127, %s128
      %p137 = scmp.eq.s32.totalorder %s26, 0
      %p138 = por %p136, %p137
      %p139 = scmp.ne.s32.totalorder %s127, %s128
      %p140 = scmp.eq.s32.totalorder %s27, 1
      %p141 = por %p139, %p140
      %p143 = scmp.ne.s32.totalorder %s128, %s142
      %p144 = scmp.eq.s32.totalorder %s27, 0
      %p145 = por %p143, %p144
      %s147 = sadd.s32 %s146, 1
      %p150 = scmp.eq.s32.totalorder %s21, 1
      %p151 = scmp.ne.s32.totalorder %s146, %s148
      %p152 = scmp.eq.s32.totalorder %s21, 0
      %p153 = por %p151, %p152
      %p154 = scmp.ne.s32.totalorder %s146, %s148
      %p155 = scmp.eq.s32.totalorder %s26, 1
      %p156 = por %p154, %p155
      %p157 = scmp.ne.s32.totalorder %s148, %s149
      %p158 = scmp.eq.s32.totalorder %s26, 0
      %p159 = por %p157, %p158
      %p160 = scmp.ne.s32.totalorder %s148, %s149
      %p161 = scmp.eq.s32.totalorder %s27, 1
      %p162 = por %p160, %p161
      %p164 = scmp.ne.s32.totalorder %s149, %s163
      %p165 = scmp.eq.s32.totalorder %s27, 0
      %p166 = por %p164, %p165
      %s167 = ssub.s32 %s28, %s47
      %s168 = ssub.s32 %s29, %s43
      %s169 = sor.u32 %s167, %s168
      %p170 = scmp.eq.s32.totalorder %s169, 0
      %s172 = sadd.s32 %s171, 1
      %s173 = scalar_select %p170, %s171, %s172
      %p176 = pneg %p170
      %p177 = scmp.eq.s32.totalorder %s21, 1
      %p178 = por %p176, %p177
      %p179 = scmp.ne.s32.totalorder %s171, %s174
      %p180 = scmp.eq.s32.totalorder %s21, 0
      %p181 = por %p179, %p180
      %p182 = scmp.ne.s32.totalorder %s171, %s174
      %p183 = scmp.eq.s32.totalorder %s26, 1
      %p184 = por %p182, %p183
      %p185 = scmp.ne.s32.totalorder %s174, %s175
      %p186 = scmp.eq.s32.totalorder %s26, 0
      %p187 = por %p185, %p186
      %p188 = scmp.ne.s32.totalorder %s174, %s175
      %p189 = scmp.eq.s32.totalorder %s27, 1
      %p190 = por %p188, %p189
      %p192 = scmp.ne.s32.totalorder %s175, %s191
      %p193 = scmp.eq.s32.totalorder %s27, 0
      %p194 = por %p192, %p193
      %p195 = scmp.le.s32.totalorder 1, %s21
      %p196 = scmp.lt.s32.totalorder %s21, 3
      %p197 = pnand %p195, %p196
      %p198 = pneg %p197
      // Predicated region
      $region9: #{ae_iteration.3} parent=5 // pred_check
        _
      $region10: #{ae_iteration.3} parent=5 // pred_check_branch
        %200 = sbr.rel (%p197) target = $region12
      $region11: #{ae_iteration.3} parent=5 // pred_region
        %s201 = ssub.s32 %s21, 1
        // Predicated region
        $region13: #{ae_iteration.3} parent=11 // pred_check
          %p202 = pneg %p117
        $region14: #{ae_iteration.3} parent=11 // pred_check_branch
          %204 = sbr.rel (%p202) target = $region16
        $region15: #{ae_iteration.3} parent=11 // pred_region
          %s206 = ssub.s32 1536, 1536
          %207 = vsyncadd [#allocation10], %s206
          %s208 = sshll.u32 [#allocation11], 4
          %s209 = int_to_ptr.vmem [resolvable:$true] %s208
          %214 = dma.hbm_to_vmem [thread:$0]  %s2, 1536, %s209, [#allocation10], 64, 64, 4
        $region16: #{ae_iteration.3} parent=11 // pred_fallthru
          _
        // Predicated region
        $region17: #{ae_iteration.3} parent=11 // pred_check
          %p215 = pneg %p138
        $region18: #{ae_iteration.3} parent=11 // pred_check_branch
          %217 = sbr.rel (%p215) target = $region20
        $region19: #{ae_iteration.3} parent=11 // pred_region
          %s219 = ssub.s32 256, 256
          %220 = vsyncadd [#allocation13], %s219
          %s221 = sshll.u32 [#allocation12], 4
          %s222 = int_to_ptr.vmem [resolvable:$true] %s221
          %227 = dma.hbm_to_vmem [thread:$0]  %s3, 256, %s222, [#allocation13], 64, 64, 4
        $region20: #{ae_iteration.3} parent=11 // pred_fallthru
          _
        // Predicated region
        $region21: #{ae_iteration.3} parent=11 // pred_check
          %p228 = pneg %p159
        $region22: #{ae_iteration.3} parent=11 // pred_check_branch
          %230 = sbr.rel (%p228) target = $region24
        $region23: #{ae_iteration.3} parent=11 // pred_region
          %s232 = ssub.s32 3584, 3584
          %233 = vsyncadd [#allocation13], %s232
          %s234 = sshll.u32 [#allocation14], 4
          %s235 = int_to_ptr.vmem [resolvable:$true] %s234
          %240 = dma.hbm_to_vmem [thread:$0]  %s4, 3584, %s235, [#allocation13], 128, 128, 8
        $region24: #{ae_iteration.3} parent=11 // pred_fallthru
          _
      $region12: #{ae_iteration.3} parent=5 // pred_fallthru
        _
      %p241 = scmp.lt.s32.totalorder %s21, 2
      // Predicated region
      $region25: #{ae_iteration.3} parent=5 // pred_check
        %p242 = pneg %p241
      $region26: #{ae_iteration.3} parent=5 // pred_check_branch
        %244 = sbr.rel (%p242) target = $region28
      $region27: #{ae_iteration.3} parent=5 // pred_region
        // Predicated region
        $region29: #{ae_iteration.3} parent=27 // pred_check
          %p245 = pneg %p62
        $region30: #{ae_iteration.3} parent=27 // pred_check_branch
          %247 = sbr.rel (%p245) target = $region32
        $region31: #{ae_iteration.3} parent=27 // pred_region
          %s248 = sand.u32 %s52, 1
          %s249 = scalar_lea.sflag [#allocation7], %s248
          %s250 = sand.u32 %s52, 1
          %s251 = smul.addr %s250, 32
          %s252 = scalar_lea.vmem [#allocation6], %s251
          %s254 = ssub.s32 512, 512
          %255 = vsyncadd %s249, %s254
          %s256 = smul.addr %s28, 4
          %s257 = sadd.s32 %s29, %s256
          %s258 = smul.addr %s257, 128
          %s259 = scalar_lea.hbm %s0, %s258
          %s260 = sshll.u32 %s252, 4
          %s261 = int_to_ptr.vmem [resolvable:$true] %s260
          %266 = dma.hbm_to_vmem [thread:$0]  %s259, 512, %s261, %s249, 128, 128, 8
        $region32: #{ae_iteration.3} parent=27 // pred_fallthru
          _
        // Predicated region
        $region33: #{ae_iteration.3} parent=27 // pred_check
          %p267 = pneg %p90
        $region34: #{ae_iteration.3} parent=27 // pred_check_branch
          %269 = sbr.rel (%p267) target = $region36
        $region35: #{ae_iteration.3} parent=27 // pred_region
          %s270 = sand.u32 %s21, 1
          %s271 = scalar_lea.sflag [#allocation10], %s270
          %s272 = sand.u32 %s80, 1
          %s273 = smul.addr %s272, 32
          %s274 = scalar_lea.vmem [#allocation9], %s273
          %s276 = ssub.s32 512, 512
          %277 = vsyncadd %s271, %s276
          %s278 = smul.addr %s28, 8
          %s279 = sadd.s32 %s30, %s278
          %s280 = smul.addr %s279, 64
          %s281 = scalar_lea.hbm %s1, %s280
          %s282 = sshll.u32 %s274, 4
          %s283 = int_to_ptr.vmem [resolvable:$true] %s282
          %288 = dma.hbm_to_vmem [thread:$0]  %s281, 512, %s283, %s271, 64, 64, 4
        $region36: #{ae_iteration.3} parent=27 // pred_fallthru
          _
      $region28: #{ae_iteration.3} parent=5 // pred_fallthru
        _
      %p289 = scmp.le.s32.totalorder 1, %s21
      %p290 = scmp.lt.s32.totalorder %s21, 3
      %p291 = pnand %p289, %p290
      %p292 = pneg %p291
      // Predicated region
      $region37: #{ae_iteration.3} parent=5 // pred_check
        _
      $region38: #{ae_iteration.3} parent=5 // pred_check_branch
        %294 = sbr.rel (%p291) target = $region40
      $region39: #{ae_iteration.3} parent=5 // pred_region
        %s295 = ssub.s32 %s21, 1
        %s296 = sand.u32 %s55, 1
        %s297 = scalar_lea.sflag [#allocation7], %s296
        %s298 = sand.u32 %s55, 1
        %s299 = smul.addr %s298, 32
        %s300 = scalar_lea.vmem [#allocation6], %s299
        // Predicated region
        $region41: #{ae_iteration.3} parent=39 // pred_check
          %p301 = pneg %p68
        $region42: #{ae_iteration.3} parent=39 // pred_check_branch
          %303 = sbr.rel (%p301) target = $region44
        $region43: #{ae_iteration.3} parent=39 // pred_region
          %304 = dma.done %s297, 512
        $region44: #{ae_iteration.3} parent=39 // pred_fallthru
          _
        %s305 = sand.u32 %s26, 1
        %s306 = scalar_lea.sflag [#allocation10], %s305
        %s307 = sand.u32 %s83, 1
        %s308 = smul.addr %s307, 32
        %s309 = scalar_lea.vmem [#allocation9], %s308
        // Predicated region
        $region45: #{ae_iteration.3} parent=39 // pred_check
          %p310 = pneg %p96
        $region46: #{ae_iteration.3} parent=39 // pred_check_branch
          %312 = sbr.rel (%p310) target = $region48
        $region47: #{ae_iteration.3} parent=39 // pred_region
          %313 = dma.done %s306, 512
        $region48: #{ae_iteration.3} parent=39 // pred_fallthru
          _
        // Predicated region
        $region49: #{ae_iteration.3} parent=39 // pred_check
          %p314 = pneg %p117
        $region50: #{ae_iteration.3} parent=39 // pred_check_branch
          %316 = sbr.rel (%p314) target = $region52
        $region51: #{ae_iteration.3} parent=39 // pred_region
          %317 = dma.done [#allocation10], 1536
        $region52: #{ae_iteration.3} parent=39 // pred_fallthru
          _
        // Predicated region
        $region53: #{ae_iteration.3} parent=39 // pred_check
          %p318 = pneg %p138
        $region54: #{ae_iteration.3} parent=39 // pred_check_branch
          %320 = sbr.rel (%p318) target = $region56
        $region55: #{ae_iteration.3} parent=39 // pred_region
          %321 = dma.done [#allocation13], 256
        $region56: #{ae_iteration.3} parent=39 // pred_fallthru
          _
        // Predicated region
        $region57: #{ae_iteration.3} parent=39 // pred_check
          %p322 = pneg %p159
        $region58: #{ae_iteration.3} parent=39 // pred_check_branch
          %324 = sbr.rel (%p322) target = $region60
        $region59: #{ae_iteration.3} parent=39 // pred_region
          %325 = dma.done [#allocation13], 3584
        $region60: #{ae_iteration.3} parent=39 // pred_fallthru
          _
        %s326 = sand.u32 %s55, 1
        %s327 = scalar_lea.sflag [#allocation7], %s326
        %s328 = sand.u32 %s55, 1
        %s329 = smul.addr %s328, 32
        %s330 = scalar_lea.vmem [#allocation6], %s329
        %p331 = pneg %p68
        %p332 = pneg %p65
        %s333 = sand.u32 %s26, 1
        %s334 = scalar_lea.sflag [#allocation10], %s333
        %s335 = sand.u32 %s83, 1
        %s336 = smul.addr %s335, 32
        %s337 = scalar_lea.vmem [#allocation9], %s336
        %p338 = pneg %p96
        %p339 = pneg %p93
        %p340 = pneg %p117
        %p341 = pneg %p114
        %p342 = pneg %p138
        %p343 = pneg %p135
        %p344 = pneg %p159
        %p345 = pneg %p156
        %p346 = pneg %p187
        %p347 = pneg %p184
        %s348 = sand.u32 %s174, 1
        %s349 = scalar_lea.sflag [#allocation8], %s348
        %s350 = sand.u32 %s174, 1
        %s351 = smul.addr %s350, 32
        %s352 = scalar_lea.vmem [#allocation15], %s351
        %p354 = scmp.eq.s32.totalorder %s33, 0
        // Predicated region
        $region61: #{ae_iteration.3} parent=39 // pred_check
          %p355 = pneg %p354
        $region62: #{ae_iteration.3} parent=39 // pred_check_branch
          %357 = sbr.rel (%p355) target = $region64
        $region63: #{ae_iteration.3} parent=39 // pred_region
          %v358 = vld [vmem:[#allocation11] sm:$0xf]
          %v359 = vld [vmem:[#allocation11 + $0x4] sm:$0xf]
          %v360 = vld [vmem:[#allocation11 + $0x8] sm:$0xf]
          %v361 = vld [vmem:[#allocation11 + $0xc] sm:$0xf]
          %v362 = vld [vmem:[#allocation14] sm:$0xff]
          %v363 = vld [vmem:[#allocation14 + $0x8] sm:$0xff]
          %v364 = vld [vmem:[#allocation14 + $0x10] sm:$0xff]
          %v365 = vld [vmem:[#allocation14 + $0x18] sm:$0xff]
          %v366 = vld [vmem:[%s300] sm:$0xff]
          %v367 = vld [vmem:[%s300 + $0x8] sm:$0xff]
          %v368 = vld [vmem:[%s300 + $0x10] sm:$0xff]
          %v369 = vld [vmem:[%s300 + $0x18] sm:$0xff]
          %v370 = vpack.c.bf16 %v367, %v366
          %v371 = vpack.c.bf16 %v369, %v368
          %373 = vset.pattern.permute.xlu0 0
          %374 = vperm.xlu0 %373, %v362
          %v375 = vpop.permute.xlu0 %374
          %378 = vset.pattern.permute.xlu0 0
          %379 = vperm.xlu0 %378, %v363
          %v380 = vpop.permute.xlu0 %379
          %383 = vset.pattern.permute.xlu0 0
          %384 = vperm.xlu0 %383, %v364
          %v385 = vpop.permute.xlu0 %384
          %388 = vset.pattern.permute.xlu0 0
          %389 = vperm.xlu0 %388, %v365
          %v390 = vpop.permute.xlu0 %389
          %v396 = vunpack.c.l.b16 %v358
          %v397 = vunpack.c.l.b16 %v359
          %v398 = vunpack.c.l.b16 %v360
          %v399 = vunpack.c.l.b16 %v361
          %v400 = vpack.c.b16 %v397, %v396
          %v401 = vpack.c.b16 %v399, %v398
          %vm402 = vcmask 261120
          %v404 = vsel %vm402, %v400, 0
          %v407 = vsel %vm402, %v401, 0
          %409 = vmatprep.subr.bf16.mxu0 0
          %410 = vmatpush1.bf16.msra.mxu0 %v370
          %411 = vmatprep.subr.bf16.mxu0 0
          %412 = vmatpush1.bf16.msra.mxu0 %v371
          %413 = vmatprep.subr.bf16.mxu0 0
          %414 = vmatpush1.bf16.msra.mxu0 0
          %415 = vmatprep.subr.bf16.mxu0 0
          %416 = vmatpush1.bf16.msra.mxu0 0
          %417 = vmatprep.subr.bf16.mxu0 0
          %418 = vmatpush1.bf16.msra.mxu0 0
          %419 = vmatprep.subr.bf16.mxu0 0
          %420 = vmatpush1.bf16.msra.mxu0 0
          %421 = vmatprep.subr.bf16.mxu0 0
          %422 = vmatpush1.bf16.msra.mxu0 0
          %423 = vmatprep.subr.bf16.mxu0 0
          %424 = vmatpush1.bf16.msra.mxu0 0
          %425 = vmatprep.subr.bf16.mxu0 0
          %426 = vmatpush1.bf16.msra.mxu0 0
          %427 = vmatprep.subr.bf16.mxu0 0
          %428 = vmatpush1.bf16.msra.mxu0 0
          %429 = vmatprep.subr.bf16.mxu0 0
          %430 = vmatpush1.bf16.msra.mxu0 0
          %431 = vmatprep.subr.bf16.mxu0 0
          %432 = vmatpush1.bf16.msra.mxu0 0
          %433 = vmatprep.subr.bf16.mxu0 0
          %434 = vmatpush1.bf16.msra.mxu0 0
          %435 = vmatprep.subr.bf16.mxu0 0
          %436 = vmatpush1.bf16.msra.mxu0 0
          %437 = vmatprep.subr.bf16.mxu0 0
          %438 = vmatpush1.bf16.msra.mxu0 0
          %439 = vmatprep.subr.bf16.mxu0 0
          %440 = vmatpush1.bf16.msra.mxu0 0
          %441 = vmatprep.mubr.bf16.mxu0 0
          %442 = vmatmul.mubr.bf16.gmra.mrb[0].mxu0 %v404
          %v443 = vpop.f32.mrb[0].mxu0
          %v444 = vadd.f32 %v375, %v443
          %v445 = vpop.f32.mrb[0].mxu0
          %v446 = vpop.f32.mrb[0].mxu0
          %v447 = vadd.f32 %v380, %v446
          %v448 = vpop.f32.mrb[0].mxu0
          %449 = vmatprep.mubr.bf16.mxu0 0
          %450 = vmatmul.mubr.bf16.gmra.mrb[0].mxu0 %v407
          %v451 = vpop.f32.mrb[0].mxu0
          %v452 = vadd.f32 %v385, %v451
          %v453 = vpop.f32.mrb[0].mxu0
          %v454 = vpop.f32.mrb[0].mxu0
          %v455 = vadd.f32 %v390, %v454
          %v456 = vpop.f32.mrb[0].mxu0
          %457 = vdwg.mxu0
          %v458 = vmul.f32 %v444, 0.35355338
          %v459 = vmul.f32 %v447, 0.35355338
          %v460 = vmul.f32 %v452, 0.35355338
          %v461 = vmul.f32 %v455, 0.35355338
          %v462 = vpack.c.bf16 %v458, %v458
          %v463 = vpack.c.bf16 %v459, %v459
          %v464 = vpack.c.bf16 %v460, %v460
          %v465 = vpack.c.bf16 %v461, %v461
          %466 = vst [vmem:[#allocation2] sm:$0xf] %v462
          %467 = vst [vmem:[#allocation2 + $0x4] sm:$0xf] %v463
          %468 = vst [vmem:[#allocation2 + $0x8] sm:$0xf] %v464
          %469 = vst [vmem:[#allocation2 + $0xc] sm:$0xf] %v465
          %470 = vst [vmem:[#allocation3] sm:$0x1] -1e+30
          %471 = vst [vmem:[#allocation3 + $0x1] sm:$0x1] -1e+30
          %472 = vst [vmem:[#allocation3 + $0x2] sm:$0x1] -1e+30
          %473 = vst [vmem:[#allocation3 + $0x3] sm:$0x1] -1e+30
          %474 = vst [vmem:[#allocation4] sm:$0x1] 0.0
          %475 = vst [vmem:[#allocation4 + $0x1] sm:$0x1] 0.0
          %476 = vst [vmem:[#allocation4 + $0x2] sm:$0x1] 0.0
          %477 = vst [vmem:[#allocation4 + $0x3] sm:$0x1] 0.0
          %478 = vst [vmem:[#allocation5] sm:$0xff] 0.0
          %479 = vst [vmem:[#allocation5 + $0x8] sm:$0xff] 0.0
          %480 = vst [vmem:[#allocation5 + $0x10] sm:$0xff] 0.0
          %481 = vst [vmem:[#allocation5 + $0x18] sm:$0xff] 0.0
        $region64: #{ae_iteration.3} parent=39 // pred_fallthru
          _
        %v482 = vld [vmem:[%s309] sm:$0xf]
        %v483 = vld [vmem:[%s309 + $0x4] sm:$0xf]
        %v484 = vld [vmem:[%s309 + $0x8] sm:$0xf]
        %v485 = vld [vmem:[%s309 + $0xc] sm:$0xf]
        %v486 = vld [vmem:[%s309 + $0x10] sm:$0xf]
        %v487 = vld [vmem:[%s309 + $0x14] sm:$0xf]
        %v488 = vld [vmem:[%s309 + $0x18] sm:$0xf]
        %v489 = vld [vmem:[%s309 + $0x1c] sm:$0xf]
        %v490 = vld [vmem:[#allocation2] sm:$0xf]
        %v491 = vld [vmem:[#allocation2 + $0x4] sm:$0xf]
        %v492 = vld [vmem:[#allocation2 + $0x8] sm:$0xf]
        %v493 = vld [vmem:[#allocation2 + $0xc] sm:$0xf]
        %v494 = vlaneseq
        %v495 = vshrl.u32 %v494, 7
        %v496 = vadd.s32 %v495, 8
        %v497 = vadd.s32 %v495, 16
        %v498 = vadd.s32 %v495, 24
        %v499 = vadd.s32 %v495, 32
        %v500 = vadd.s32 %v495, 40
        %v501 = vadd.s32 %v495, 48
        %v502 = vadd.s32 %v495, 56
        %v503 = vadd.s32 %v495, 64
        %v504 = vadd.s32 %v495, 72
        %v505 = vadd.s32 %v495, 80
        %v506 = vadd.s32 %v495, 88
        %v507 = vadd.s32 %v495, 96
        %v508 = vadd.s32 %v495, 104
        %v509 = vadd.s32 %v495, 112
        %v510 = vadd.s32 %v495, 120
        %s511 = smul.u32 %s33, 128
        %v512 = vstv %s511
        %v513 = vadd.s32 %v495, %v512
        %v514 = vadd.s32 %v496, %v512
        %v515 = vadd.s32 %v497, %v512
        %v516 = vadd.s32 %v498, %v512
        %v517 = vadd.s32 %v499, %v512
        %v518 = vadd.s32 %v500, %v512
        %v519 = vadd.s32 %v501, %v512
        %v520 = vadd.s32 %v502, %v512
        %v521 = vadd.s32 %v503, %v512
        %v522 = vadd.s32 %v504, %v512
        %v523 = vadd.s32 %v505, %v512
        %v524 = vadd.s32 %v506, %v512
        %v525 = vadd.s32 %v507, %v512
        %v526 = vadd.s32 %v508, %v512
        %v527 = vadd.s32 %v509, %v512
        %v528 = vadd.s32 %v510, %v512
        %vm529 = vcmp.lt.s32.totalorder %v513, 81
        %vm530 = vcmp.lt.s32.totalorder %v514, 81
        %vm531 = vcmp.lt.s32.totalorder %v515, 81
        %vm532 = vcmp.lt.s32.totalorder %v516, 81
        %vm533 = vcmp.lt.s32.totalorder %v517, 81
        %vm534 = vcmp.lt.s32.totalorder %v518, 81
        %vm535 = vcmp.lt.s32.totalorder %v519, 81
        %vm536 = vcmp.lt.s32.totalorder %v520, 81
        %vm537 = vcmp.lt.s32.totalorder %v521, 81
        %vm538 = vcmp.lt.s32.totalorder %v522, 81
        %vm539 = vcmp.lt.s32.totalorder %v523, 81
        %vm540 = vcmp.lt.s32.totalorder %v524, 81
        %vm541 = vcmp.lt.s32.totalorder %v525, 81
        %vm542 = vcmp.lt.s32.totalorder %v526, 81
        %vm543 = vcmp.lt.s32.totalorder %v527, 81
        %vm544 = vcmp.lt.s32.totalorder %v528, 81
        %v545 = vsel %vm529, 0.0, -1e+30
        %v546 = vsel %vm530, 0.0, -1e+30
        %v547 = vsel %vm531, 0.0, -1e+30
        %v548 = vsel %vm532, 0.0, -1e+30
        %v549 = vsel %vm533, 0.0, -1e+30
        %v550 = vsel %vm534, 0.0, -1e+30
        %v551 = vsel %vm535, 0.0, -1e+30
        %v552 = vsel %vm536, 0.0, -1e+30
        %v553 = vsel %vm537, 0.0, -1e+30
        %v554 = vsel %vm538, 0.0, -1e+30
        %v555 = vsel %vm539, 0.0, -1e+30
        %v556 = vsel %vm540, 0.0, -1e+30
        %v557 = vsel %vm541, 0.0, -1e+30
        %v558 = vsel %vm542, 0.0, -1e+30
        %v559 = vsel %vm543, 0.0, -1e+30
        %v560 = vsel %vm544, 0.0, -1e+30
        %561 = vxpose.xlu0.c.b16.start [1/8] %v482, 128
        %562 = vxpose.xlu0.c.b16.cont [2/8] 0, 128
        %563 = vxpose.xlu0.c.b16.cont [3/8] 0, 128
        %564 = vxpose.xlu0.c.b16.cont [4/8] 0, 128
        %565 = vxpose.xlu0.c.b16.cont [5/8] 0, 128
        %566 = vxpose.xlu0.c.b16.cont [6/8] 0, 128
        %567 = vxpose.xlu0.c.b16.cont [7/8] 0, 128
        %568 = vxpose.xlu0.c.b16.end [8/8] 0, 128
        %v569 = vpop.trf.xlu0
        %v570 = vpop.trf.xlu0
        %v571 = vpop.trf.xlu0
        %v572 = vpop.trf.xlu0
        %v573 = vpop.trf.xlu0
        %v574 = vpop.trf.xlu0
        %v575 = vpop.trf.xlu0
        %v576 = vpop.trf.xlu0
        %vm577 = vcmask 64512
        %v579 = vsel %vm577, %v569, 0
        %v582 = vsel %vm577, %v570, 0
        %v585 = vsel %vm577, %v571, 0
        %v588 = vsel %vm577, %v572, 0
        %v591 = vsel %vm577, %v573, 0
        %v594 = vsel %vm577, %v574, 0
        %v597 = vsel %vm577, %v575, 0
        %v600 = vsel %vm577, %v576, 0
        %vm602 = vcmask 1043456
        %v604 = vsel %vm602, %v490, 0
        %606 = vmatprep.subr.bf16.mxu0 0
        %607 = vmatpush1.bf16.msra.mxu0 %v604
        %608 = vmatprep.subr.bf16.mxu0 0
        %609 = vmatpush1.bf16.msra.mxu0 0
        %610 = vmatprep.subr.bf16.mxu0 0
        %611 = vmatpush1.bf16.msra.mxu0 0
        %612 = vmatprep.subr.bf16.mxu0 0
        %613 = vmatpush1.bf16.msra.mxu0 0
        %614 = vmatprep.subr.bf16.mxu0 0
        %615 = vmatpush1.bf16.msra.mxu0 0
        %616 = vmatprep.subr.bf16.mxu0 0
        %617 = vmatpush1.bf16.msra.mxu0 0
        %618 = vmatprep.subr.bf16.mxu0 0
        %619 = vmatpush1.bf16.msra.mxu0 0
        %620 = vmatprep.subr.bf16.mxu0 0
        %621 = vmatpush1.bf16.msra.mxu0 0
        %622 = vmatprep.subr.bf16.mxu0 0
        %623 = vmatpush1.bf16.msra.mxu0 0
        %624 = vmatprep.subr.bf16.mxu0 0
        %625 = vmatpush1.bf16.msra.mxu0 0
        %626 = vmatprep.subr.bf16.mxu0 0
        %627 = vmatpush1.bf16.msra.mxu0 0
        %628 = vmatprep.subr.bf16.mxu0 0
        %629 = vmatpush1.bf16.msra.mxu0 0
        %630 = vmatprep.subr.bf16.mxu0 0
        %631 = vmatpush1.bf16.msra.mxu0 0
        %632 = vmatprep.subr.bf16.mxu0 0
        %633 = vmatpush1.bf16.msra.mxu0 0
        %634 = vmatprep.subr.bf16.mxu0 0
        %635 = vmatpush1.bf16.msra.mxu0 0
        %636 = vmatprep.subr.bf16.mxu0 0
        %637 = vmatpush1.bf16.msra.mxu0 0
        %638 = vmatprep.mubr.bf16.mxu0 0
        %639 = vmatmul.mubr.bf16.gmra.mrb[0].mxu0 %v579
        %v640 = vpop.f32.mrb[0].mxu0
        %v641 = vadd.f32 %v545, %v640
        %v642 = vpop.f32.mrb[0].mxu0
        %v643 = vpop.f32.mrb[0].mxu0
        %v644 = vadd.f32 %v546, %v643
        %v645 = vpop.f32.mrb[0].mxu0
        %646 = vmatprep.mubr.bf16.mxu0 0
        %647 = vmatmul.mubr.bf16.gmra.mrb[0].mxu0 %v582
        %v648 = vpop.f32.mrb[0].mxu0
        %v649 = vadd.f32 %v547, %v648
        %v650 = vpop.f32.mrb[0].mxu0
        %v651 = vpop.f32.mrb[0].mxu0
        %v652 = vadd.f32 %v548, %v651
        %v653 = vpop.f32.mrb[0].mxu0
        %654 = vmatprep.mubr.bf16.mxu0 0
        %655 = vmatmul.mubr.bf16.gmra.mrb[0].mxu0 %v585
        %v656 = vpop.f32.mrb[0].mxu0
        %v657 = vadd.f32 %v549, %v656
        %v658 = vpop.f32.mrb[0].mxu0
        %v659 = vpop.f32.mrb[0].mxu0
        %v660 = vadd.f32 %v550, %v659
        %v661 = vpop.f32.mrb[0].mxu0
        %662 = vmatprep.mubr.bf16.mxu0 0
        %663 = vmatmul.mubr.bf16.gmra.mrb[0].mxu0 %v588
        %v664 = vpop.f32.mrb[0].mxu0
        %v665 = vadd.f32 %v551, %v664
        %v666 = vpop.f32.mrb[0].mxu0
        %v667 = vpop.f32.mrb[0].mxu0
        %v668 = vadd.f32 %v552, %v667
        %v669 = vpop.f32.mrb[0].mxu0
        %670 = vmatprep.mubr.bf16.mxu0 0
        %671 = vmatmul.mubr.bf16.gmra.mrb[0].mxu0 %v591
        %v672 = vpop.f32.mrb[0].mxu0
        %v673 = vadd.f32 %v553, %v672
        %v674 = vpop.f32.mrb[0].mxu0
        %v675 = vpop.f32.mrb[0].mxu0
        %v676 = vadd.f32 %v554, %v675
        %v677 = vpop.f32.mrb[0].mxu0
        %678 = vmatprep.mubr.bf16.mxu0 0
        %679 = vmatmul.mubr.bf16.gmra.mrb[0].mxu0 %v594
        %v680 = vpop.f32.mrb[0].mxu0
        %v681 = vadd.f32 %v555, %v680
        %v682 = vpop.f32.mrb[0].mxu0
        %v683 = vpop.f32.mrb[0].mxu0
        %v684 = vadd.f32 %v556, %v683
        %v685 = vpop.f32.mrb[0].mxu0
        %686 = vmatprep.mubr.bf16.mxu0 0
        %687 = vmatmul.mubr.bf16.gmra.mrb[0].mxu0 %v597
        %v688 = vpop.f32.mrb[0].mxu0
        %v689 = vadd.f32 %v557, %v688
        %v690 = vpop.f32.mrb[0].mxu0
        %v691 = vpop.f32.mrb[0].mxu0
        %v692 = vadd.f32 %v558, %v691
        %v693 = vpop.f32.mrb[0].mxu0
        %694 = vmatprep.mubr.bf16.mxu0 0
        %695 = vmatmul.mubr.bf16.gmra.mrb[0].mxu0 %v600
        %v696 = vpop.f32.mrb[0].mxu0
        %v697 = vadd.f32 %v559, %v696
        %v698 = vpop.f32.mrb[0].mxu0
        %v699 = vpop.f32.mrb[0].mxu0
        %v700 = vadd.f32 %v560, %v699
        %v701 = vpop.f32.mrb[0].mxu0
        %702 = vdwg.mxu0
        %703 = vxpose.xlu0.c.b16.start [1/8] %v483, 128
        %704 = vxpose.xlu0.c.b16.cont [2/8] 0, 128
        %705 = vxpose.xlu0.c.b16.cont [3/8] 0, 128
        %706 = vxpose.xlu0.c.b16.cont [4/8] 0, 128
        %707 = vxpose.xlu0.c.b16.cont [5/8] 0, 128
        %708 = vxpose.xlu0.c.b16.cont [6/8] 0, 128
        %709 = vxpose.xlu0.c.b16.cont [7/8] 0, 128
        %710 = vxpose.xlu0.c.b16.end [8/8] 0, 128
        %v711 = vpop.trf.xlu0
        %v712 = vpop.trf.xlu0
        %v713 = vpop.trf.xlu0
        %v714 = vpop.trf.xlu0
        %v715 = vpop.trf.xlu0
        %v716 = vpop.trf.xlu0
        %v717 = vpop.trf.xlu0
        %v718 = vpop.trf.xlu0
        %v720 = vsel %vm577, %v711, 0
        %v723 = vsel %vm577, %v712, 0
        %v726 = vsel %vm577, %v713, 0
        %v729 = vsel %vm577, %v714, 0
        %v732 = vsel %vm577, %v715, 0
        %v735 = vsel %vm577, %v716, 0
        %v738 = vsel %vm577, %v717, 0
        %v741 = vsel %vm577, %v718, 0
        %v744 = vsel %vm602, %v491, 0
        %746 = vmatprep.subr.bf16.mxu0 0
        %747 = vmatpush1.bf16.msra.mxu0 %v744
        %748 = vmatprep.subr.bf16.mxu0 0
        %749 = vmatpush1.bf16.msra.mxu0 0
        %750 = vmatprep.subr.bf16.mxu0 0
        %751 = vmatpush1.bf16.msra.mxu0 0
        %752 = vmatprep.subr.bf16.mxu0 0
        %753 = vmatpush1.bf16.msra.mxu0 0
        %754 = vmatprep.subr.bf16.mxu0 0
        %755 = vmatpush1.bf16.msra.mxu0 0
        %756 = vmatprep.subr.bf16.mxu0 0
        %757 = vmatpush1.bf16.msra.mxu0 0
        %758 = vmatprep.subr.bf16.mxu0 0
        %759 = vmatpush1.bf16.msra.mxu0 0
        %760 = vmatprep.subr.bf16.mxu0 0
        %761 = vmatpush1.bf16.msra.mxu0 0
        %762 = vmatprep.subr.bf16.mxu0 0
        %763 = vmatpush1.bf16.msra.mxu0 0
        %764 = vmatprep.subr.bf16.mxu0 0
        %765 = vmatpush1.bf16.msra.mxu0 0
        %766 = vmatprep.subr.bf16.mxu0 0
        %767 = vmatpush1.bf16.msra.mxu0 0
        %768 = vmatprep.subr.bf16.mxu0 0
        %769 = vmatpush1.bf16.msra.mxu0 0
        %770 = vmatprep.subr.bf16.mxu0 0
        %771 = vmatpush1.bf16.msra.mxu0 0
        %772 = vmatprep.subr.bf16.mxu0 0
        %773 = vmatpush1.bf16.msra.mxu0 0
        %774 = vmatprep.subr.bf16.mxu0 0
        %775 = vmatpush1.bf16.msra.mxu0 0
        %776 = vmatprep.subr.bf16.mxu0 0
        %777 = vmatpush1.bf16.msra.mxu0 0
        %778 = vmatprep.mubr.bf16.mxu0 0
        %779 = vmatmul.mubr.bf16.gmra.mrb[0].mxu0 %v720
        %v780 = vpop.f32.mrb[0].mxu0
        %v781 = vadd.f32 %v545, %v780
        %v782 = vpop.f32.mrb[0].mxu0
        %v783 = vpop.f32.mrb[0].mxu0
        %v784 = vadd.f32 %v546, %v783
        %v785 = vpop.f32.mrb[0].mxu0
        %786 = vmatprep.mubr.bf16.mxu0 0
        %787 = vmatmul.mubr.bf16.gmra.mrb[0].mxu0 %v723
        %v788 = vpop.f32.mrb[0].mxu0
        %v789 = vadd.f32 %v547, %v788
        %v790 = vpop.f32.mrb[0].mxu0
        %v791 = vpop.f32.mrb[0].mxu0
        %v792 = vadd.f32 %v548, %v791
        %v793 = vpop.f32.mrb[0].mxu0
        %794 = vmatprep.mubr.bf16.mxu0 0
        %795 = vmatmul.mubr.bf16.gmra.mrb[0].mxu0 %v726
        %v796 = vpop.f32.mrb[0].mxu0
        %v797 = vadd.f32 %v549, %v796
        %v798 = vpop.f32.mrb[0].mxu0
        %v799 = vpop.f32.mrb[0].mxu0
        %v800 = vadd.f32 %v550, %v799
        %v801 = vpop.f32.mrb[0].mxu0
        %802 = vmatprep.mubr.bf16.mxu0 0
        %803 = vmatmul.mubr.bf16.gmra.mrb[0].mxu0 %v729
        %v804 = vpop.f32.mrb[0].mxu0
        %v805 = vadd.f32 %v551, %v804
        %v806 = vpop.f32.mrb[0].mxu0
        %v807 = vpop.f32.mrb[0].mxu0
        %v808 = vadd.f32 %v552, %v807
        %v809 = vpop.f32.mrb[0].mxu0
        %810 = vmatprep.mubr.bf16.mxu0 0
        %811 = vmatmul.mubr.bf16.gmra.mrb[0].mxu0 %v732
        %v812 = vpop.f32.mrb[0].mxu0
        %v813 = vadd.f32 %v553, %v812
        %v814 = vpop.f32.mrb[0].mxu0
        %v815 = vpop.f32.mrb[0].mxu0
        %v816 = vadd.f32 %v554, %v815
        %v817 = vpop.f32.mrb[0].mxu0
        %818 = vmatprep.mubr.bf16.mxu0 0
        %819 = vmatmul.mubr.bf16.gmra.mrb[0].mxu0 %v735
        %v820 = vpop.f32.mrb[0].mxu0
        %v821 = vadd.f32 %v555, %v820
        %v822 = vpop.f32.mrb[0].mxu0
        %v823 = vpop.f32.mrb[0].mxu0
        %v824 = vadd.f32 %v556, %v823
        %v825 = vpop.f32.mrb[0].mxu0
        %826 = vmatprep.mubr.bf16.mxu0 0
        %827 = vmatmul.mubr.bf16.gmra.mrb[0].mxu0 %v738
        %v828 = vpop.f32.mrb[0].mxu0
        %v829 = vadd.f32 %v557, %v828
        %v830 = vpop.f32.mrb[0].mxu0
        %v831 = vpop.f32.mrb[0].mxu0
        %v832 = vadd.f32 %v558, %v831
        %v833 = vpop.f32.mrb[0].mxu0
        %834 = vmatprep.mubr.bf16.mxu0 0
        %835 = vmatmul.mubr.bf16.gmra.mrb[0].mxu0 %v741
        %v836 = vpop.f32.mrb[0].mxu0
        %v837 = vadd.f32 %v559, %v836
        %v838 = vpop.f32.mrb[0].mxu0
        %v839 = vpop.f32.mrb[0].mxu0
        %v840 = vadd.f32 %v560, %v839
        %v841 = vpop.f32.mrb[0].mxu0
        %842 = vdwg.mxu0
        %843 = vxpose.xlu0.c.b16.start [1/8] %v484, 128
        %844 = vxpose.xlu0.c.b16.cont [2/8] 0, 128
        %845 = vxpose.xlu0.c.b16.cont [3/8] 0, 128
        %846 = vxpose.xlu0.c.b16.cont [4/8] 0, 128
        %847 = vxpose.xlu0.c.b16.cont [5/8] 0, 128
        %848 = vxpose.xlu0.c.b16.cont [6/8] 0, 128
        %849 = vxpose.xlu0.c.b16.cont [7/8] 0, 128
        %850 = vxpose.xlu0.c.b16.end [8/8] 0, 128
        %v851 = vpop.trf.xlu0
        %v852 = vpop.trf.xlu0
        %v853 = vpop.trf.xlu0
        %v854 = vpop.trf.xlu0
        %v855 = vpop.trf.xlu0
        %v856 = vpop.trf.xlu0
        %v857 = vpop.trf.xlu0
        %v858 = vpop.trf.xlu0
        %v860 = vsel %vm577, %v851, 0
        %v863 = vsel %vm577, %v852, 0
        %v866 = vsel %vm577, %v853, 0
        %v869 = vsel %vm577, %v854, 0
        %v872 = vsel %vm577, %v855, 0
        %v875 = vsel %vm577, %v856, 0
        %v878 = vsel %vm577, %v857, 0
        %v881 = vsel %vm577, %v858, 0
        %v884 = vsel %vm602, %v492, 0
        %886 = vmatprep.subr.bf16.mxu0 0
        %887 = vmatpush1.bf16.msra.mxu0 %v884
        %888 = vmatprep.subr.bf16.mxu0 0
        %889 = vmatpush1.bf16.msra.mxu0 0
        %890 = vmatprep.subr.bf16.mxu0 0
        %891 = vmatpush1.bf16.msra.mxu0 0
        %892 = vmatprep.subr.bf16.mxu0 0
        %893 = vmatpush1.bf16.msra.mxu0 0
        %894 = vmatprep.subr.bf16.mxu0 0
        %895 = vmatpush1.bf16.msra.mxu0 0
        %896 = vmatprep.subr.bf16.mxu0 0
        %897 = vmatpush1.bf16.msra.mxu0 0
        %898 = vmatprep.subr.bf16.mxu0 0
        %899 = vmatpush1.bf16.msra.mxu0 0
        %900 = vmatprep.subr.bf16.mxu0 0
        %901 = vmatpush1.bf16.msra.mxu0 0
        %902 = vmatprep.subr.bf16.mxu0 0
        %903 = vmatpush1.bf16.msra.mxu0 0
        %904 = vmatprep.subr.bf16.mxu0 0
        %905 = vmatpush1.bf16.msra.mxu0 0
        %906 = vmatprep.subr.bf16.mxu0 0
        %907 = vmatpush1.bf16.msra.mxu0 0
        %908 = vmatprep.subr.bf16.mxu0 0
        %909 = vmatpush1.bf16.msra.mxu0 0
        %910 = vmatprep.subr.bf16.mxu0 0
        %911 = vmatpush1.bf16.msra.mxu0 0
        %912 = vmatprep.subr.bf16.mxu0 0
        %913 = vmatpush1.bf16.msra.mxu0 0
        %914 = vmatprep.subr.bf16.mxu0 0
        %915 = vmatpush1.bf16.msra.mxu0 0
        %916 = vmatprep.subr.bf16.mxu0 0
        %917 = vmatpush1.bf16.msra.mxu0 0
        %918 = vmatprep.mubr.bf16.mxu0 0
        %919 = vmatmul.mubr.bf16.gmra.mrb[0].mxu0 %v860
        %v920 = vpop.f32.mrb[0].mxu0
        %v921 = vadd.f32 %v545, %v920
        %v922 = vpop.f32.mrb[0].mxu0
        %v923 = vpop.f32.mrb[0].mxu0
        %v924 = vadd.f32 %v546, %v923
        %v925 = vpop.f32.mrb[0].mxu0
        %926 = vmatprep.mubr.bf16.mxu0 0
        %927 = vmatmul.mubr.bf16.gmra.mrb[0].mxu0 %v863
        %v928 = vpop.f32.mrb[0].mxu0
        %v929 = vadd.f32 %v547, %v928
        %v930 = vpop.f32.mrb[0].mxu0
        %v931 = vpop.f32.mrb[0].mxu0
        %v932 = vadd.f32 %v548, %v931
        %v933 = vpop.f32.mrb[0].mxu0
        %934 = vmatprep.mubr.bf16.mxu0 0
        %935 = vmatmul.mubr.bf16.gmra.mrb[0].mxu0 %v866
        %v936 = vpop.f32.mrb[0].mxu0
        %v937 = vadd.f32 %v549, %v936
        %v938 = vpop.f32.mrb[0].mxu0
        %v939 = vpop.f32.mrb[0].mxu0
        %v940 = vadd.f32 %v550, %v939
        %v941 = vpop.f32.mrb[0].mxu0
        %942 = vmatprep.mubr.bf16.mxu0 0
        %943 = vmatmul.mubr.bf16.gmra.mrb[0].mxu0 %v869
        %v944 = vpop.f32.mrb[0].mxu0
        %v945 = vadd.f32 %v551, %v944
        %v946 = vpop.f32.mrb[0].mxu0
        %v947 = vpop.f32.mrb[0].mxu0
        %v948 = vadd.f32 %v552, %v947
        %v949 = vpop.f32.mrb[0].mxu0
        %950 = vmatprep.mubr.bf16.mxu0 0
        %951 = vmatmul.mubr.bf16.gmra.mrb[0].mxu0 %v872
        %v952 = vpop.f32.mrb[0].mxu0
        %v953 = vadd.f32 %v553, %v952
        %v954 = vpop.f32.mrb[0].mxu0
        %v955 = vpop.f32.mrb[0].mxu0
        %v956 = vadd.f32 %v554, %v955
        %v957 = vpop.f32.mrb[0].mxu0
        %958 = vmatprep.mubr.bf16.mxu0 0
        %959 = vmatmul.mubr.bf16.gmra.mrb[0].mxu0 %v875
        %v960 = vpop.f32.mrb[0].mxu0
        %v961 = vadd.f32 %v555, %v960
        %v962 = vpop.f32.mrb[0].mxu0
        %v963 = vpop.f32.mrb[0].mxu0
        %v964 = vadd.f32 %v556, %v963
        %v965 = vpop.f32.mrb[0].mxu0
        %966 = vmatprep.mubr.bf16.mxu0 0
        %967 = vmatmul.mubr.bf16.gmra.mrb[0].mxu0 %v878
        %v968 = vpop.f32.mrb[0].mxu0
        %v969 = vadd.f32 %v557, %v968
        %v970 = vpop.f32.mrb[0].mxu0
        %v971 = vpop.f32.mrb[0].mxu0
        %v972 = vadd.f32 %v558, %v971
        %v973 = vpop.f32.mrb[0].mxu0
        %974 = vmatprep.mubr.bf16.mxu0 0
        %975 = vmatmul.mubr.bf16.gmra.mrb[0].mxu0 %v881
        %v976 = vpop.f32.mrb[0].mxu0
        %v977 = vadd.f32 %v559, %v976
        %v978 = vpop.f32.mrb[0].mxu0
        %v979 = vpop.f32.mrb[0].mxu0
        %v980 = vadd.f32 %v560, %v979
        %v981 = vpop.f32.mrb[0].mxu0
        %982 = vdwg.mxu0
        %983 = vxpose.xlu0.c.b16.start [1/8] %v485, 128
        %984 = vxpose.xlu0.c.b16.cont [2/8] 0, 128
        %985 = vxpose.xlu0.c.b16.cont [3/8] 0, 128
        %986 = vxpose.xlu0.c.b16.cont [4/8] 0, 128
        %987 = vxpose.xlu0.c.b16.cont [5/8] 0, 128
        %988 = vxpose.xlu0.c.b16.cont [6/8] 0, 128
        %989 = vxpose.xlu0.c.b16.cont [7/8] 0, 128
        %990 = vxpose.xlu0.c.b16.end [8/8] 0, 128
        %v991 = vpop.trf.xlu0
        %v992 = vpop.trf.xlu0
        %v993 = vpop.trf.xlu0
        %v994 = vpop.trf.xlu0
        %v995 = vpop.trf.xlu0
        %v996 = vpop.trf.xlu0
        %v997 = vpop.trf.xlu0
        %v998 = vpop.trf.xlu0
        %v1000 = vsel %vm577, %v991, 0
        %v1003 = vsel %vm577, %v992, 0
        %v1006 = vsel %vm577, %v993, 0
        %v1009 = vsel %vm577, %v994, 0
        %v1012 = vsel %vm577, %v995, 0
        %v1015 = vsel %vm577, %v996, 0
        %v1018 = vsel %vm577, %v997, 0
        %v1021 = vsel %vm577, %v998, 0
        %v1024 = vsel %vm602, %v493, 0
        %1026 = vmatprep.subr.bf16.mxu0 0
        %1027 = vmatpush1.bf16.msra.mxu0 %v1024
        %1028 = vmatprep.subr.bf16.mxu0 0
        %1029 = vmatpush1.bf16.msra.mxu0 0
        %1030 = vmatprep.subr.bf16.mxu0 0
        %1031 = vmatpush1.bf16.msra.mxu0 0
        %1032 = vmatprep.subr.bf16.mxu0 0
        %1033 = vmatpush1.bf16.msra.mxu0 0
        %1034 = vmatprep.subr.bf16.mxu0 0
        %1035 = vmatpush1.bf16.msra.mxu0 0
        %1036 = vmatprep.subr.bf16.mxu0 0
        %1037 = vmatpush1.bf16.msra.mxu0 0
        %1038 = vmatprep.subr.bf16.mxu0 0
        %1039 = vmatpush1.bf16.msra.mxu0 0
        %1040 = vmatprep.subr.bf16.mxu0 0
        %1041 = vmatpush1.bf16.msra.mxu0 0
        %1042 = vmatprep.subr.bf16.mxu0 0
        %1043 = vmatpush1.bf16.msra.mxu0 0
        %1044 = vmatprep.subr.bf16.mxu0 0
        %1045 = vmatpush1.bf16.msra.mxu0 0
        %1046 = vmatprep.subr.bf16.mxu0 0
        %1047 = vmatpush1.bf16.msra.mxu0 0
        %1048 = vmatprep.subr.bf16.mxu0 0
        %1049 = vmatpush1.bf16.msra.mxu0 0
        %1050 = vmatprep.subr.bf16.mxu0 0
        %1051 = vmatpush1.bf16.msra.mxu0 0
        %1052 = vmatprep.subr.bf16.mxu0 0
        %1053 = vmatpush1.bf16.msra.mxu0 0
        %1054 = vmatprep.subr.bf16.mxu0 0
        %1055 = vmatpush1.bf16.msra.mxu0 0
        %1056 = vmatprep.subr.bf16.mxu0 0
        %1057 = vmatpush1.bf16.msra.mxu0 0
        %1058 = vmatprep.mubr.bf16.mxu0 0
        %1059 = vmatmul.mubr.bf16.gmra.mrb[0].mxu0 %v1000
        %v1060 = vpop.f32.mrb[0].mxu0
        %v1061 = vadd.f32 %v545, %v1060
        %v1062 = vpop.f32.mrb[0].mxu0
        %v1063 = vpop.f32.mrb[0].mxu0
        %v1064 = vadd.f32 %v546, %v1063
        %v1065 = vpop.f32.mrb[0].mxu0
        %1066 = vmatprep.mubr.bf16.mxu0 0
        %1067 = vmatmul.mubr.bf16.gmra.mrb[0].mxu0 %v1003
        %v1068 = vpop.f32.mrb[0].mxu0
        %v1069 = vadd.f32 %v547, %v1068
        %v1070 = vpop.f32.mrb[0].mxu0
        %v1071 = vpop.f32.mrb[0].mxu0
        %v1072 = vadd.f32 %v548, %v1071
        %v1073 = vpop.f32.mrb[0].mxu0
        %1074 = vmatprep.mubr.bf16.mxu0 0
        %1075 = vmatmul.mubr.bf16.gmra.mrb[0].mxu0 %v1006
        %v1076 = vpop.f32.mrb[0].mxu0
        %v1077 = vadd.f32 %v549, %v1076
        %v1078 = vpop.f32.mrb[0].mxu0
        %v1079 = vpop.f32.mrb[0].mxu0
        %v1080 = vadd.f32 %v550, %v1079
        %v1081 = vpop.f32.mrb[0].mxu0
        %1082 = vmatprep.mubr.bf16.mxu0 0
        %1083 = vmatmul.mubr.bf16.gmra.mrb[0].mxu0 %v1009
        %v1084 = vpop.f32.mrb[0].mxu0
        %v1085 = vadd.f32 %v551, %v1084
        %v1086 = vpop.f32.mrb[0].mxu0
        %v1087 = vpop.f32.mrb[0].mxu0
        %v1088 = vadd.f32 %v552, %v1087
        %v1089 = vpop.f32.mrb[0].mxu0
        %1090 = vmatprep.mubr.bf16.mxu0 0
        %1091 = vmatmul.mubr.bf16.gmra.mrb[0].mxu0 %v1012
        %v1092 = vpop.f32.mrb[0].mxu0
        %v1093 = vadd.f32 %v553, %v1092
        %v1094 = vpop.f32.mrb[0].mxu0
        %v1095 = vpop.f32.mrb[0].mxu0
        %v1096 = vadd.f32 %v554, %v1095
        %v1097 = vpop.f32.mrb[0].mxu0
        %1098 = vmatprep.mubr.bf16.mxu0 0
        %1099 = vmatmul.mubr.bf16.gmra.mrb[0].mxu0 %v1015
        %v1100 = vpop.f32.mrb[0].mxu0
        %v1101 = vadd.f32 %v555, %v1100
        %v1102 = vpop.f32.mrb[0].mxu0
        %v1103 = vpop.f32.mrb[0].mxu0
        %v1104 = vadd.f32 %v556, %v1103
        %v1105 = vpop.f32.mrb[0].mxu0
        %1106 = vmatprep.mubr.bf16.mxu0 0
        %1107 = vmatmul.mubr.bf16.gmra.mrb[0].mxu0 %v1018
        %v1108 = vpop.f32.mrb[0].mxu0
        %v1109 = vadd.f32 %v557, %v1108
        %v1110 = vpop.f32.mrb[0].mxu0
        %v1111 = vpop.f32.mrb[0].mxu0
        %v1112 = vadd.f32 %v558, %v1111
        %v1113 = vpop.f32.mrb[0].mxu0
        %1114 = vmatprep.mubr.bf16.mxu0 0
        %1115 = vmatmul.mubr.bf16.gmra.mrb[0].mxu0 %v1021
        %v1116 = vpop.f32.mrb[0].mxu0
        %v1117 = vadd.f32 %v559, %v1116
        %v1118 = vpop.f32.mrb[0].mxu0
        %v1119 = vpop.f32.mrb[0].mxu0
        %v1120 = vadd.f32 %v560, %v1119
        %v1121 = vpop.f32.mrb[0].mxu0
        %1122 = vdwg.mxu0
        %v1123 = vld [vmem:[#allocation3] sm:$0x1]
        %v1124 = vld [vmem:[#allocation3 + $0x1] sm:$0x1]
        %v1125 = vld [vmem:[#allocation3 + $0x2] sm:$0x1]
        %v1126 = vld [vmem:[#allocation3 + $0x3] sm:$0x1]
        %v1127 = vmax.f32 %v641, %v644
        %v1128 = vmax.f32 %v1127, %v649
        %v1129 = vmax.f32 %v1128, %v652
        %v1130 = vmax.f32 %v1129, %v657
        %v1131 = vmax.f32 %v1130, %v660
        %v1132 = vmax.f32 %v1131, %v665
        %v1133 = vmax.f32 %v1132, %v668
        %v1134 = vmax.f32 %v1133, %v673
        %v1135 = vmax.f32 %v1134, %v676
        %v1136 = vmax.f32 %v1135, %v681
        %v1137 = vmax.f32 %v1136, %v684
        %v1138 = vmax.f32 %v1137, %v689
        %v1139 = vmax.f32 %v1138, %v692
        %v1140 = vmax.f32 %v1139, %v697
        %v1141 = vmax.f32 %v1140, %v700
        %v1142 = vrot.slane %v1141, 4
        %v1143 = vmax.f32 %v1141, %v1142
        %v1144 = vrot.slane %v1143, 2
        %v1145 = vmax.f32 %v1143, %v1144
        %v1146 = vrot.slane %v1145, 1
        %v1147 = vmax.f32 %v1145, %v1146
        %v1148 = vmax.f32 %v781, %v784
        %v1149 = vmax.f32 %v1148, %v789
        %v1150 = vmax.f32 %v1149, %v792
        %v1151 = vmax.f32 %v1150, %v797
        %v1152 = vmax.f32 %v1151, %v800
        %v1153 = vmax.f32 %v1152, %v805
        %v1154 = vmax.f32 %v1153, %v808
        %v1155 = vmax.f32 %v1154, %v813
        %v1156 = vmax.f32 %v1155, %v816
        %v1157 = vmax.f32 %v1156, %v821
        %v1158 = vmax.f32 %v1157, %v824
        %v1159 = vmax.f32 %v1158, %v829
        %v1160 = vmax.f32 %v1159, %v832
        %v1161 = vmax.f32 %v1160, %v837
        %v1162 = vmax.f32 %v1161, %v840
        %v1163 = vrot.slane %v1162, 4
        %v1164 = vmax.f32 %v1162, %v1163
        %v1165 = vrot.slane %v1164, 2
        %v1166 = vmax.f32 %v1164, %v1165
        %v1167 = vrot.slane %v1166, 1
        %v1168 = vmax.f32 %v1166, %v1167
        %v1169 = vmax.f32 %v921, %v924
        %v1170 = vmax.f32 %v1169, %v929
        %v1171 = vmax.f32 %v1170, %v932
        %v1172 = vmax.f32 %v1171, %v937
        %v1173 = vmax.f32 %v1172, %v940
        %v1174 = vmax.f32 %v1173, %v945
        %v1175 = vmax.f32 %v1174, %v948
        %v1176 = vmax.f32 %v1175, %v953
        %v1177 = vmax.f32 %v1176, %v956
        %v1178 = vmax.f32 %v1177, %v961
        %v1179 = vmax.f32 %v1178, %v964
        %v1180 = vmax.f32 %v1179, %v969
        %v1181 = vmax.f32 %v1180, %v972
        %v1182 = vmax.f32 %v1181, %v977
        %v1183 = vmax.f32 %v1182, %v980
        %v1184 = vrot.slane %v1183, 4
        %v1185 = vmax.f32 %v1183, %v1184
        %v1186 = vrot.slane %v1185, 2
        %v1187 = vmax.f32 %v1185, %v1186
        %v1188 = vrot.slane %v1187, 1
        %v1189 = vmax.f32 %v1187, %v1188
        %v1190 = vmax.f32 %v1061, %v1064
        %v1191 = vmax.f32 %v1190, %v1069
        %v1192 = vmax.f32 %v1191, %v1072
        %v1193 = vmax.f32 %v1192, %v1077
        %v1194 = vmax.f32 %v1193, %v1080
        %v1195 = vmax.f32 %v1194, %v1085
        %v1196 = vmax.f32 %v1195, %v1088
        %v1197 = vmax.f32 %v1196, %v1093
        %v1198 = vmax.f32 %v1197, %v1096
        %v1199 = vmax.f32 %v1198, %v1101
        %v1200 = vmax.f32 %v1199, %v1104
        %v1201 = vmax.f32 %v1200, %v1109
        %v1202 = vmax.f32 %v1201, %v1112
        %v1203 = vmax.f32 %v1202, %v1117
        %v1204 = vmax.f32 %v1203, %v1120
        %v1205 = vrot.slane %v1204, 4
        %v1206 = vmax.f32 %v1204, %v1205
        %v1207 = vrot.slane %v1206, 2
        %v1208 = vmax.f32 %v1206, %v1207
        %v1209 = vrot.slane %v1208, 1
        %v1210 = vmax.f32 %v1208, %v1209
        %v1211 = vmax.f32 %v1123, %v1147
        %v1212 = vmax.f32 %v1124, %v1168
        %v1213 = vmax.f32 %v1125, %v1189
        %v1214 = vmax.f32 %v1126, %v1210
        %v1215 = vsub.f32 %v1123, %v1211
        %v1216 = vsub.f32 %v1124, %v1212
        %v1217 = vsub.f32 %v1125, %v1213
        %v1218 = vsub.f32 %v1126, %v1214
        %v1219 = vmul.f32 %v1215, 1.442695
        %v1220 = vpow.pop %v1219
        %v1221 = vmul.f32 %v1216, 1.442695
        %v1222 = vpow.pop %v1221
        %v1223 = vmul.f32 %v1217, 1.442695
        %v1224 = vpow.pop %v1223
        %v1225 = vmul.f32 %v1218, 1.442695
        %v1226 = vpow.pop %v1225
        %v1231 = vlaneseq
        %v1232 = vshrl.u32 %v1231, 7
        %v1233 = vsub.s32 0, %v1232
        %v1234 = vrot.slane %v1211, %v1233
        %v1235 = vlaneseq
        %v1236 = vshrl.u32 %v1235, 7
        %v1237 = vsub.s32 0, %v1236
        %v1238 = vrot.slane %v1212, %v1237
        %v1239 = vlaneseq
        %v1240 = vshrl.u32 %v1239, 7
        %v1241 = vsub.s32 0, %v1240
        %v1242 = vrot.slane %v1213, %v1241
        %v1243 = vlaneseq
        %v1244 = vshrl.u32 %v1243, 7
        %v1245 = vsub.s32 0, %v1244
        %v1246 = vrot.slane %v1214, %v1245
        %v1251 = vsub.f32 %v641, %v1234
        %v1252 = vsub.f32 %v644, %v1234
        %v1253 = vsub.f32 %v649, %v1234
        %v1254 = vsub.f32 %v652, %v1234
        %v1255 = vsub.f32 %v657, %v1234
        %v1256 = vsub.f32 %v660, %v1234
        %v1257 = vsub.f32 %v665, %v1234
        %v1258 = vsub.f32 %v668, %v1234
        %v1259 = vsub.f32 %v673, %v1234
        %v1260 = vsub.f32 %v676, %v1234
        %v1261 = vsub.f32 %v681, %v1234
        %v1262 = vsub.f32 %v684, %v1234
        %v1263 = vsub.f32 %v689, %v1234
        %v1264 = vsub.f32 %v692, %v1234
        %v1265 = vsub.f32 %v697, %v1234
        %v1266 = vsub.f32 %v700, %v1234
        %v1267 = vsub.f32 %v781, %v1238
        %v1268 = vsub.f32 %v784, %v1238
        %v1269 = vsub.f32 %v789, %v1238
        %v1270 = vsub.f32 %v792, %v1238
        %v1271 = vsub.f32 %v797, %v1238
        %v1272 = vsub.f32 %v800, %v1238
        %v1273 = vsub.f32 %v805, %v1238
        %v1274 = vsub.f32 %v808, %v1238
        %v1275 = vsub.f32 %v813, %v1238
        %v1276 = vsub.f32 %v816, %v1238
        %v1277 = vsub.f32 %v821, %v1238
        %v1278 = vsub.f32 %v824, %v1238
        %v1279 = vsub.f32 %v829, %v1238
        %v1280 = vsub.f32 %v832, %v1238
        %v1281 = vsub.f32 %v837, %v1238
        %v1282 = vsub.f32 %v840, %v1238
        %v1283 = vsub.f32 %v921, %v1242
        %v1284 = vsub.f32 %v924, %v1242
        %v1285 = vsub.f32 %v929, %v1242
        %v1286 = vsub.f32 %v932, %v1242
        %v1287 = vsub.f32 %v937, %v1242
        %v1288 = vsub.f32 %v940, %v1242
        %v1289 = vsub.f32 %v945, %v1242
        %v1290 = vsub.f32 %v948, %v1242
        %v1291 = vsub.f32 %v953, %v1242
        %v1292 = vsub.f32 %v956, %v1242
        %v1293 = vsub.f32 %v961, %v1242
        %v1294 = vsub.f32 %v964, %v1242
        %v1295 = vsub.f32 %v969, %v1242
        %v1296 = vsub.f32 %v972, %v1242
        %v1297 = vsub.f32 %v977, %v1242
        %v1298 = vsub.f32 %v980, %v1242
        %v1299 = vsub.f32 %v1061, %v1246
        %v1300 = vsub.f32 %v1064, %v1246
        %v1301 = vsub.f32 %v1069, %v1246
        %v1302 = vsub.f32 %v1072, %v1246
        %v1303 = vsub.f32 %v1077, %v1246
        %v1304 = vsub.f32 %v1080, %v1246
        %v1305 = vsub.f32 %v1085, %v1246
        %v1306 = vsub.f32 %v1088, %v1246
        %v1307 = vsub.f32 %v1093, %v1246
        %v1308 = vsub.f32 %v1096, %v1246
        %v1309 = vsub.f32 %v1101, %v1246
        %v1310 = vsub.f32 %v1104, %v1246
        %v1311 = vsub.f32 %v1109, %v1246
        %v1312 = vsub.f32 %v1112, %v1246
        %v1313 = vsub.f32 %v1117, %v1246
        %v1314 = vsub.f32 %v1120, %v1246
        %v1315 = vmul.f32 %v1251, 1.442695
        %v1316 = vpow.pop %v1315
        %v1317 = vmul.f32 %v1252, 1.442695
        %v1318 = vpow.pop %v1317
        %v1319 = vmul.f32 %v1253, 1.442695
        %v1320 = vpow.pop %v1319
        %v1321 = vmul.f32 %v1254, 1.442695
        %v1322 = vpow.pop %v1321
        %v1323 = vmul.f32 %v1255, 1.442695
        %v1324 = vpow.pop %v1323
        %v1325 = vmul.f32 %v1256, 1.442695
        %v1326 = vpow.pop %v1325
        %v1327 = vmul.f32 %v1257, 1.442695
        %v1328 = vpow.pop %v1327
        %v1329 = vmul.f32 %v1258, 1.442695
        %v1330 = vpow.pop %v1329
        %v1331 = vmul.f32 %v1259, 1.442695
        %v1332 = vpow.pop %v1331
        %v1333 = vmul.f32 %v1260, 1.442695
        %v1334 = vpow.pop %v1333
        %v1335 = vmul.f32 %v1261, 1.442695
        %v1336 = vpow.pop %v1335
        %v1337 = vmul.f32 %v1262, 1.442695
        %v1338 = vpow.pop %v1337
        %v1339 = vmul.f32 %v1263, 1.442695
        %v1340 = vpow.pop %v1339
        %v1341 = vmul.f32 %v1264, 1.442695
        %v1342 = vpow.pop %v1341
        %v1343 = vmul.f32 %v1265, 1.442695
        %v1344 = vpow.pop %v1343
        %v1345 = vmul.f32 %v1266, 1.442695
        %v1346 = vpow.pop %v1345
        %v1347 = vmul.f32 %v1267, 1.442695
        %v1348 = vpow.pop %v1347
        %v1349 = vmul.f32 %v1268, 1.442695
        %v1350 = vpow.pop %v1349
        %v1351 = vmul.f32 %v1269, 1.442695
        %v1352 = vpow.pop %v1351
        %v1353 = vmul.f32 %v1270, 1.442695
        %v1354 = vpow.pop %v1353
        %v1355 = vmul.f32 %v1271, 1.442695
        %v1356 = vpow.pop %v1355
        %v1357 = vmul.f32 %v1272, 1.442695
        %v1358 = vpow.pop %v1357
        %v1359 = vmul.f32 %v1273, 1.442695
        %v1360 = vpow.pop %v1359
        %v1361 = vmul.f32 %v1274, 1.442695
        %v1362 = vpow.pop %v1361
        %v1363 = vmul.f32 %v1275, 1.442695
        %v1364 = vpow.pop %v1363
        %v1365 = vmul.f32 %v1276, 1.442695
        %v1366 = vpow.pop %v1365
        %v1367 = vmul.f32 %v1277, 1.442695
        %v1368 = vpow.pop %v1367
        %v1369 = vmul.f32 %v1278, 1.442695
        %v1370 = vpow.pop %v1369
        %v1371 = vmul.f32 %v1279, 1.442695
        %v1372 = vpow.pop %v1371
        %v1373 = vmul.f32 %v1280, 1.442695
        %v1374 = vpow.pop %v1373
        %v1375 = vmul.f32 %v1281, 1.442695
        %v1376 = vpow.pop %v1375
        %v1377 = vmul.f32 %v1282, 1.442695
        %v1378 = vpow.pop %v1377
        %v1379 = vmul.f32 %v1283, 1.442695
        %v1380 = vpow.pop %v1379
        %v1381 = vmul.f32 %v1284, 1.442695
        %v1382 = vpow.pop %v1381
        %v1383 = vmul.f32 %v1285, 1.442695
        %v1384 = vpow.pop %v1383
        %v1385 = vmul.f32 %v1286, 1.442695
        %v1386 = vpow.pop %v1385
        %v1387 = vmul.f32 %v1287, 1.442695
        %v1388 = vpow.pop %v1387
        %v1389 = vmul.f32 %v1288, 1.442695
        %v1390 = vpow.pop %v1389
        %v1391 = vmul.f32 %v1289, 1.442695
        %v1392 = vpow.pop %v1391
        %v1393 = vmul.f32 %v1290, 1.442695
        %v1394 = vpow.pop %v1393
        %v1395 = vmul.f32 %v1291, 1.442695
        %v1396 = vpow.pop %v1395
        %v1397 = vmul.f32 %v1292, 1.442695
        %v1398 = vpow.pop %v1397
        %v1399 = vmul.f32 %v1293, 1.442695
        %v1400 = vpow.pop %v1399
        %v1401 = vmul.f32 %v1294, 1.442695
        %v1402 = vpow.pop %v1401
        %v1403 = vmul.f32 %v1295, 1.442695
        %v1404 = vpow.pop %v1403
        %v1405 = vmul.f32 %v1296, 1.442695
        %v1406 = vpow.pop %v1405
        %v1407 = vmul.f32 %v1297, 1.442695
        %v1408 = vpow.pop %v1407
        %v1409 = vmul.f32 %v1298, 1.442695
        %v1410 = vpow.pop %v1409
        %v1411 = vmul.f32 %v1299, 1.442695
        %v1412 = vpow.pop %v1411
        %v1413 = vmul.f32 %v1300, 1.442695
        %v1414 = vpow.pop %v1413
        %v1415 = vmul.f32 %v1301, 1.442695
        %v1416 = vpow.pop %v1415
        %v1417 = vmul.f32 %v1302, 1.442695
        %v1418 = vpow.pop %v1417
        %v1419 = vmul.f32 %v1303, 1.442695
        %v1420 = vpow.pop %v1419
        %v1421 = vmul.f32 %v1304, 1.442695
        %v1422 = vpow.pop %v1421
        %v1423 = vmul.f32 %v1305, 1.442695
        %v1424 = vpow.pop %v1423
        %v1425 = vmul.f32 %v1306, 1.442695
        %v1426 = vpow.pop %v1425
        %v1427 = vmul.f32 %v1307, 1.442695
        %v1428 = vpow.pop %v1427
        %v1429 = vmul.f32 %v1308, 1.442695
        %v1430 = vpow.pop %v1429
        %v1431 = vmul.f32 %v1309, 1.442695
        %v1432 = vpow.pop %v1431
        %v1433 = vmul.f32 %v1310, 1.442695
        %v1434 = vpow.pop %v1433
        %v1435 = vmul.f32 %v1311, 1.442695
        %v1436 = vpow.pop %v1435
        %v1437 = vmul.f32 %v1312, 1.442695
        %v1438 = vpow.pop %v1437
        %v1439 = vmul.f32 %v1313, 1.442695
        %v1440 = vpow.pop %v1439
        %v1441 = vmul.f32 %v1314, 1.442695
        %v1442 = vpow.pop %v1441
        %v1443 = vld [vmem:[#allocation4] sm:$0x1]
        %v1444 = vld [vmem:[#allocation4 + $0x1] sm:$0x1]
        %v1445 = vld [vmem:[#allocation4 + $0x2] sm:$0x1]
        %v1446 = vld [vmem:[#allocation4 + $0x3] sm:$0x1]
        %v1447 = vmul.f32 %v1220, %v1443
        %v1448 = vmul.f32 %v1222, %v1444
        %v1449 = vmul.f32 %v1224, %v1445
        %v1450 = vmul.f32 %v1226, %v1446
        %v1451 = vadd.f32 %v1316, %v1318
        %v1452 = vadd.f32 %v1451, %v1320
        %v1453 = vadd.f32 %v1452, %v1322
        %v1454 = vadd.f32 %v1453, %v1324
        %v1455 = vadd.f32 %v1454, %v1326
        %v1456 = vadd.f32 %v1455, %v1328
        %v1457 = vadd.f32 %v1456, %v1330
        %v1458 = vadd.f32 %v1457, %v1332
        %v1459 = vadd.f32 %v1458, %v1334
        %v1460 = vadd.f32 %v1459, %v1336
        %v1461 = vadd.f32 %v1460, %v1338
        %v1462 = vadd.f32 %v1461, %v1340
        %v1463 = vadd.f32 %v1462, %v1342
        %v1464 = vadd.f32 %v1463, %v1344
        %v1465 = vadd.f32 %v1464, %v1346
        %v1466 = vrot.slane %v1465, 4
        %v1467 = vadd.f32 %v1465, %v1466
        %v1468 = vrot.slane %v1467, 2
        %v1469 = vadd.f32 %v1467, %v1468
        %v1470 = vrot.slane %v1469, 1
        %v1471 = vadd.f32 %v1469, %v1470
        %v1472 = vadd.f32 %v1348, %v1350
        %v1473 = vadd.f32 %v1472, %v1352
        %v1474 = vadd.f32 %v1473, %v1354
        %v1475 = vadd.f32 %v1474, %v1356
        %v1476 = vadd.f32 %v1475, %v1358
        %v1477 = vadd.f32 %v1476, %v1360
        %v1478 = vadd.f32 %v1477, %v1362
        %v1479 = vadd.f32 %v1478, %v1364
        %v1480 = vadd.f32 %v1479, %v1366
        %v1481 = vadd.f32 %v1480, %v1368
        %v1482 = vadd.f32 %v1481, %v1370
        %v1483 = vadd.f32 %v1482, %v1372
        %v1484 = vadd.f32 %v1483, %v1374
        %v1485 = vadd.f32 %v1484, %v1376
        %v1486 = vadd.f32 %v1485, %v1378
        %v1487 = vrot.slane %v1486, 4
        %v1488 = vadd.f32 %v1486, %v1487
        %v1489 = vrot.slane %v1488, 2
        %v1490 = vadd.f32 %v1488, %v1489
        %v1491 = vrot.slane %v1490, 1
        %v1492 = vadd.f32 %v1490, %v1491
        %v1493 = vadd.f32 %v1380, %v1382
        %v1494 = vadd.f32 %v1493, %v1384
        %v1495 = vadd.f32 %v1494, %v1386
        %v1496 = vadd.f32 %v1495, %v1388
        %v1497 = vadd.f32 %v1496, %v1390
        %v1498 = vadd.f32 %v1497, %v1392
        %v1499 = vadd.f32 %v1498, %v1394
        %v1500 = vadd.f32 %v1499, %v1396
        %v1501 = vadd.f32 %v1500, %v1398
        %v1502 = vadd.f32 %v1501, %v1400
        %v1503 = vadd.f32 %v1502, %v1402
        %v1504 = vadd.f32 %v1503, %v1404
        %v1505 = vadd.f32 %v1504, %v1406
        %v1506 = vadd.f32 %v1505, %v1408
        %v1507 = vadd.f32 %v1506, %v1410
        %v1508 = vrot.slane %v1507, 4
        %v1509 = vadd.f32 %v1507, %v1508
        %v1510 = vrot.slane %v1509, 2
        %v1511 = vadd.f32 %v1509, %v1510
        %v1512 = vrot.slane %v1511, 1
        %v1513 = vadd.f32 %v1511, %v1512
        %v1514 = vadd.f32 %v1412, %v1414
        %v1515 = vadd.f32 %v1514, %v1416
        %v1516 = vadd.f32 %v1515, %v1418
        %v1517 = vadd.f32 %v1516, %v1420
        %v1518 = vadd.f32 %v1517, %v1422
        %v1519 = vadd.f32 %v1518, %v1424
        %v1520 = vadd.f32 %v1519, %v1426
        %v1521 = vadd.f32 %v1520, %v1428
        %v1522 = vadd.f32 %v1521, %v1430
        %v1523 = vadd.f32 %v1522, %v1432
        %v1524 = vadd.f32 %v1523, %v1434
        %v1525 = vadd.f32 %v1524, %v1436
        %v1526 = vadd.f32 %v1525, %v1438
        %v1527 = vadd.f32 %v1526, %v1440
        %v1528 = vadd.f32 %v1527, %v1442
        %v1529 = vrot.slane %v1528, 4
        %v1530 = vadd.f32 %v1528, %v1529
        %v1531 = vrot.slane %v1530, 2
        %v1532 = vadd.f32 %v1530, %v1531
        %v1533 = vrot.slane %v1532, 1
        %v1534 = vadd.f32 %v1532, %v1533
        %v1535 = vadd.f32 %v1447, %v1471
        %v1536 = vadd.f32 %v1448, %v1492
        %v1537 = vadd.f32 %v1449, %v1513
        %v1538 = vadd.f32 %v1450, %v1534
        %1539 = vst [vmem:[#allocation4] sm:$0x1] %v1535
        %1540 = vst [vmem:[#allocation4 + $0x1] sm:$0x1] %v1536
        %1541 = vst [vmem:[#allocation4 + $0x2] sm:$0x1] %v1537
        %1542 = vst [vmem:[#allocation4 + $0x3] sm:$0x1] %v1538
        %v1543 = vpack.c.bf16 %v1318, %v1316
        %v1544 = vpack.c.bf16 %v1322, %v1320
        %v1545 = vpack.c.bf16 %v1326, %v1324
        %v1546 = vpack.c.bf16 %v1330, %v1328
        %v1547 = vpack.c.bf16 %v1334, %v1332
        %v1548 = vpack.c.bf16 %v1338, %v1336
        %v1549 = vpack.c.bf16 %v1342, %v1340
        %v1550 = vpack.c.bf16 %v1346, %v1344
        %v1551 = vpack.c.bf16 %v1350, %v1348
        %v1552 = vpack.c.bf16 %v1354, %v1352
        %v1553 = vpack.c.bf16 %v1358, %v1356
        %v1554 = vpack.c.bf16 %v1362, %v1360
        %v1555 = vpack.c.bf16 %v1366, %v1364
        %v1556 = vpack.c.bf16 %v1370, %v1368
        %v1557 = vpack.c.bf16 %v1374, %v1372
        %v1558 = vpack.c.bf16 %v1378, %v1376
        %v1559 = vpack.c.bf16 %v1382, %v1380
        %v1560 = vpack.c.bf16 %v1386, %v1384
        %v1561 = vpack.c.bf16 %v1390, %v1388
        %v1562 = vpack.c.bf16 %v1394, %v1392
        %v1563 = vpack.c.bf16 %v1398, %v1396
        %v1564 = vpack.c.bf16 %v1402, %v1400
        %v1565 = vpack.c.bf16 %v1406, %v1404
        %v1566 = vpack.c.bf16 %v1410, %v1408
        %v1567 = vpack.c.bf16 %v1414, %v1412
        %v1568 = vpack.c.bf16 %v1418, %v1416
        %v1569 = vpack.c.bf16 %v1422, %v1420
        %v1570 = vpack.c.bf16 %v1426, %v1424
        %v1571 = vpack.c.bf16 %v1430, %v1428
        %v1572 = vpack.c.bf16 %v1434, %v1432
        %v1573 = vpack.c.bf16 %v1438, %v1436
        %v1574 = vpack.c.bf16 %v1442, %v1440
        %1575 = vmatprep.subr.bf16.mxu0 0
        %1576 = vmatpush1.bf16.msra.mxu0 %v1543
        %1577 = vmatprep.subr.bf16.mxu0 0
        %1578 = vmatpush1.bf16.msra.mxu0 %v1544
        %1579 = vmatprep.subr.bf16.mxu0 0
        %1580 = vmatpush1.bf16.msra.mxu0 %v1545
        %1581 = vmatprep.subr.bf16.mxu0 0
        %1582 = vmatpush1.bf16.msra.mxu0 %v1546
        %1583 = vmatprep.subr.bf16.mxu0 0
        %1584 = vmatpush1.bf16.msra.mxu0 %v1547
        %1585 = vmatprep.subr.bf16.mxu0 0
        %1586 = vmatpush1.bf16.msra.mxu0 %v1548
        %1587 = vmatprep.subr.bf16.mxu0 0
        %1588 = vmatpush1.bf16.msra.mxu0 %v1549
        %1589 = vmatprep.subr.bf16.mxu0 0
        %1590 = vmatpush1.bf16.msra.mxu0 %v1550
        %1591 = vmatprep.subr.bf16.mxu0 0
        %1592 = vmatpush1.bf16.msra.mxu0 0
        %1593 = vmatprep.subr.bf16.mxu0 0
        %1594 = vmatpush1.bf16.msra.mxu0 0
        %1595 = vmatprep.subr.bf16.mxu0 0
        %1596 = vmatpush1.bf16.msra.mxu0 0
        %1597 = vmatprep.subr.bf16.mxu0 0
        %1598 = vmatpush1.bf16.msra.mxu0 0
        %1599 = vmatprep.subr.bf16.mxu0 0
        %1600 = vmatpush1.bf16.msra.mxu0 0
        %1601 = vmatprep.subr.bf16.mxu0 0
        %1602 = vmatpush1.bf16.msra.mxu0 0
        %1603 = vmatprep.subr.bf16.mxu0 0
        %1604 = vmatpush1.bf16.msra.mxu0 0
        %1605 = vmatprep.subr.bf16.mxu0 0
        %1606 = vmatpush1.bf16.msra.mxu0 0
        %1607 = vmatprep.mubr.bf16.mxu0 0
        %1608 = vmatmul.mubr.bf16.gmra.mrb[0].mxu0 %v486
        %v1609 = vpop.f32.mrb[0].mxu0
        %v1610 = vadd.f32 0.0, %v1609
        %v1611 = vpop.f32.mrb[0].mxu0
        %v1612 = vpop.f32.mrb[0].mxu0
        %v1613 = vpop.f32.mrb[0].mxu0
        %1614 = vdwg.mxu0
        %1615 = vmatprep.subr.bf16.mxu0 0
        %1616 = vmatpush1.bf16.msra.mxu0 %v1551
        %1617 = vmatprep.subr.bf16.mxu0 0
        %1618 = vmatpush1.bf16.msra.mxu0 %v1552
        %1619 = vmatprep.subr.bf16.mxu0 0
        %1620 = vmatpush1.bf16.msra.mxu0 %v1553
        %1621 = vmatprep.subr.bf16.mxu0 0
        %1622 = vmatpush1.bf16.msra.mxu0 %v1554
        %1623 = vmatprep.subr.bf16.mxu0 0
        %1624 = vmatpush1.bf16.msra.mxu0 %v1555
        %1625 = vmatprep.subr.bf16.mxu0 0
        %1626 = vmatpush1.bf16.msra.mxu0 %v1556
        %1627 = vmatprep.subr.bf16.mxu0 0
        %1628 = vmatpush1.bf16.msra.mxu0 %v1557
        %1629 = vmatprep.subr.bf16.mxu0 0
        %1630 = vmatpush1.bf16.msra.mxu0 %v1558
        %1631 = vmatprep.subr.bf16.mxu0 0
        %1632 = vmatpush1.bf16.msra.mxu0 0
        %1633 = vmatprep.subr.bf16.mxu0 0
        %1634 = vmatpush1.bf16.msra.mxu0 0
        %1635 = vmatprep.subr.bf16.mxu0 0
        %1636 = vmatpush1.bf16.msra.mxu0 0
        %1637 = vmatprep.subr.bf16.mxu0 0
        %1638 = vmatpush1.bf16.msra.mxu0 0
        %1639 = vmatprep.subr.bf16.mxu0 0
        %1640 = vmatpush1.bf16.msra.mxu0 0
        %1641 = vmatprep.subr.bf16.mxu0 0
        %1642 = vmatpush1.bf16.msra.mxu0 0
        %1643 = vmatprep.subr.bf16.mxu0 0
        %1644 = vmatpush1.bf16.msra.mxu0 0
        %1645 = vmatprep.subr.bf16.mxu0 0
        %1646 = vmatpush1.bf16.msra.mxu0 0
        %1647 = vmatprep.mubr.bf16.mxu0 0
        %1648 = vmatmul.mubr.bf16.gmra.mrb[0].mxu0 %v487
        %v1649 = vpop.f32.mrb[0].mxu0
        %v1650 = vadd.f32 0.0, %v1649
        %v1651 = vpop.f32.mrb[0].mxu0
        %v1652 = vpop.f32.mrb[0].mxu0
        %v1653 = vpop.f32.mrb[0].mxu0
        %1654 = vdwg.mxu0
        %1655 = vmatprep.subr.bf16.mxu0 0
        %1656 = vmatpush1.bf16.msra.mxu0 %v1559
        %1657 = vmatprep.subr.bf16.mxu0 0
        %1658 = vmatpush1.bf16.msra.mxu0 %v1560
        %1659 = vmatprep.subr.bf16.mxu0 0
        %1660 = vmatpush1.bf16.msra.mxu0 %v1561
        %1661 = vmatprep.subr.bf16.mxu0 0
        %1662 = vmatpush1.bf16.msra.mxu0 %v1562
        %1663 = vmatprep.subr.bf16.mxu0 0
        %1664 = vmatpush1.bf16.msra.mxu0 %v1563
        %1665 = vmatprep.subr.bf16.mxu0 0
        %1666 = vmatpush1.bf16.msra.mxu0 %v1564
        %1667 = vmatprep.subr.bf16.mxu0 0
        %1668 = vmatpush1.bf16.msra.mxu0 %v1565
        %1669 = vmatprep.subr.bf16.mxu0 0
        %1670 = vmatpush1.bf16.msra.mxu0 %v1566
        %1671 = vmatprep.subr.bf16.mxu0 0
        %1672 = vmatpush1.bf16.msra.mxu0 0
        %1673 = vmatprep.subr.bf16.mxu0 0
        %1674 = vmatpush1.bf16.msra.mxu0 0
        %1675 = vmatprep.subr.bf16.mxu0 0
        %1676 = vmatpush1.bf16.msra.mxu0 0
        %1677 = vmatprep.subr.bf16.mxu0 0
        %1678 = vmatpush1.bf16.msra.mxu0 0
        %1679 = vmatprep.subr.bf16.mxu0 0
        %1680 = vmatpush1.bf16.msra.mxu0 0
        %1681 = vmatprep.subr.bf16.mxu0 0
        %1682 = vmatpush1.bf16.msra.mxu0 0
        %1683 = vmatprep.subr.bf16.mxu0 0
        %1684 = vmatpush1.bf16.msra.mxu0 0
        %1685 = vmatprep.subr.bf16.mxu0 0
        %1686 = vmatpush1.bf16.msra.mxu0 0
        %1687 = vmatprep.mubr.bf16.mxu0 0
        %1688 = vmatmul.mubr.bf16.gmra.mrb[0].mxu0 %v488
        %v1689 = vpop.f32.mrb[0].mxu0
        %v1690 = vadd.f32 0.0, %v1689
        %v1691 = vpop.f32.mrb[0].mxu0
        %v1692 = vpop.f32.mrb[0].mxu0
        %v1693 = vpop.f32.mrb[0].mxu0
        %1694 = vdwg.mxu0
        %1695 = vmatprep.subr.bf16.mxu0 0
        %1696 = vmatpush1.bf16.msra.mxu0 %v1567
        %1697 = vmatprep.subr.bf16.mxu0 0
        %1698 = vmatpush1.bf16.msra.mxu0 %v1568
        %1699 = vmatprep.subr.bf16.mxu0 0
        %1700 = vmatpush1.bf16.msra.mxu0 %v1569
        %1701 = vmatprep.subr.bf16.mxu0 0
        %1702 = vmatpush1.bf16.msra.mxu0 %v1570
        %1703 = vmatprep.subr.bf16.mxu0 0
        %1704 = vmatpush1.bf16.msra.mxu0 %v1571
        %1705 = vmatprep.subr.bf16.mxu0 0
        %1706 = vmatpush1.bf16.msra.mxu0 %v1572
        %1707 = vmatprep.subr.bf16.mxu0 0
        %1708 = vmatpush1.bf16.msra.mxu0 %v1573
        %1709 = vmatprep.subr.bf16.mxu0 0
        %1710 = vmatpush1.bf16.msra.mxu0 %v1574
        %1711 = vmatprep.subr.bf16.mxu0 0
        %1712 = vmatpush1.bf16.msra.mxu0 0
        %1713 = vmatprep.subr.bf16.mxu0 0
        %1714 = vmatpush1.bf16.msra.mxu0 0
        %1715 = vmatprep.subr.bf16.mxu0 0
        %1716 = vmatpush1.bf16.msra.mxu0 0
        %1717 = vmatprep.subr.bf16.mxu0 0
        %1718 = vmatpush1.bf16.msra.mxu0 0
        %1719 = vmatprep.subr.bf16.mxu0 0
        %1720 = vmatpush1.bf16.msra.mxu0 0
        %1721 = vmatprep.subr.bf16.mxu0 0
        %1722 = vmatpush1.bf16.msra.mxu0 0
        %1723 = vmatprep.subr.bf16.mxu0 0
        %1724 = vmatpush1.bf16.msra.mxu0 0
        %1725 = vmatprep.subr.bf16.mxu0 0
        %1726 = vmatpush1.bf16.msra.mxu0 0
        %1727 = vmatprep.mubr.bf16.mxu0 0
        %1728 = vmatmul.mubr.bf16.gmra.mrb[0].mxu0 %v489
        %v1729 = vpop.f32.mrb[0].mxu0
        %v1730 = vadd.f32 0.0, %v1729
        %v1731 = vpop.f32.mrb[0].mxu0
        %v1732 = vpop.f32.mrb[0].mxu0
        %v1733 = vpop.f32.mrb[0].mxu0
        %1734 = vdwg.mxu0
        %v1735 = vld [vmem:[#allocation5] sm:$0xff]
        %v1736 = vld [vmem:[#allocation5 + $0x8] sm:$0xff]
        %v1737 = vld [vmem:[#allocation5 + $0x10] sm:$0xff]
        %v1738 = vld [vmem:[#allocation5 + $0x18] sm:$0xff]
        %v1743 = vlaneseq
        %v1744 = vshrl.u32 %v1743, 7
        %v1745 = vsub.s32 0, %v1744
        %v1746 = vrot.slane %v1220, %v1745
        %v1747 = vlaneseq
        %v1748 = vshrl.u32 %v1747, 7
        %v1749 = vsub.s32 0, %v1748
        %v1750 = vrot.slane %v1222, %v1749
        %v1751 = vlaneseq
        %v1752 = vshrl.u32 %v1751, 7
        %v1753 = vsub.s32 0, %v1752
        %v1754 = vrot.slane %v1224, %v1753
        %v1755 = vlaneseq
        %v1756 = vshrl.u32 %v1755, 7
        %v1757 = vsub.s32 0, %v1756
        %v1758 = vrot.slane %v1226, %v1757
        %v1763 = vmul.f32 %v1746, %v1735
        %v1764 = vmul.f32 %v1750, %v1736
        %v1765 = vmul.f32 %v1754, %v1737
        %v1766 = vmul.f32 %v1758, %v1738
        %v1767 = vadd.f32 %v1763, %v1610
        %v1768 = vadd.f32 %v1764, %v1650
        %v1769 = vadd.f32 %v1765, %v1690
        %v1770 = vadd.f32 %v1766, %v1730
        %1771 = vst [vmem:[#allocation5] sm:$0xff] %v1767
        %1772 = vst [vmem:[#allocation5 + $0x8] sm:$0xff] %v1768
        %1773 = vst [vmem:[#allocation5 + $0x10] sm:$0xff] %v1769
        %1774 = vst [vmem:[#allocation5 + $0x18] sm:$0xff] %v1770
        %1775 = vst [vmem:[#allocation3] sm:$0x1] %v1211
        %1776 = vst [vmem:[#allocation3 + $0x1] sm:$0x1] %v1212
        %1777 = vst [vmem:[#allocation3 + $0x2] sm:$0x1] %v1213
        %1778 = vst [vmem:[#allocation3 + $0x3] sm:$0x1] %v1214
        // Predicated region
        $region65: #{ae_iteration.3} parent=39 // pred_check
          %p1779 = pneg %p354
        $region66: #{ae_iteration.3} parent=39 // pred_check_branch
          %1781 = sbr.rel (%p1779) target = $region68
        $region67: #{ae_iteration.3} parent=39 // pred_region
          %v1782 = vld [vmem:[#allocation11 + $0x10] sm:$0xf]
          %v1783 = vld [vmem:[#allocation11 + $0x14] sm:$0xf]
          %v1784 = vld [vmem:[#allocation11 + $0x18] sm:$0xf]
          %v1785 = vld [vmem:[#allocation11 + $0x1c] sm:$0xf]
          %v1786 = vld [vmem:[#allocation11 + $0x20] sm:$0xf]
          %v1787 = vld [vmem:[#allocation11 + $0x24] sm:$0xf]
          %v1788 = vld [vmem:[#allocation11 + $0x28] sm:$0xf]
          %v1789 = vld [vmem:[#allocation11 + $0x2c] sm:$0xf]
          %v1790 = vld [vmem:[#allocation11 + $0x30] sm:$0xf]
          %v1791 = vld [vmem:[#allocation11 + $0x34] sm:$0xf]
          %v1792 = vld [vmem:[#allocation11 + $0x38] sm:$0xf]
          %v1793 = vld [vmem:[#allocation11 + $0x3c] sm:$0xf]
          %v1794 = vld [vmem:[#allocation11 + $0x40] sm:$0xf]
          %v1795 = vld [vmem:[#allocation11 + $0x44] sm:$0xf]
          %v1796 = vld [vmem:[#allocation11 + $0x48] sm:$0xf]
          %v1797 = vld [vmem:[#allocation11 + $0x4c] sm:$0xf]
          %v1798 = vld [vmem:[#allocation11 + $0x50] sm:$0xf]
          %v1799 = vld [vmem:[#allocation11 + $0x54] sm:$0xf]
          %v1800 = vld [vmem:[#allocation11 + $0x58] sm:$0xf]
          %v1801 = vld [vmem:[#allocation11 + $0x5c] sm:$0xf]
          %v1802 = vld [vmem:[#allocation14 + $0x20] sm:$0xff]
          %v1803 = vld [vmem:[#allocation14 + $0x28] sm:$0xff]
          %v1804 = vld [vmem:[#allocation14 + $0x30] sm:$0xff]
          %v1805 = vld [vmem:[#allocation14 + $0x38] sm:$0xff]
          %v1806 = vld [vmem:[#allocation14 + $0x40] sm:$0xff]
          %v1807 = vld [vmem:[#allocation14 + $0x48] sm:$0xff]
          %v1808 = vld [vmem:[#allocation14 + $0x50] sm:$0xff]
          %v1809 = vld [vmem:[#allocation14 + $0x58] sm:$0xff]
          %v1810 = vld [vmem:[#allocation14 + $0x60] sm:$0xff]
          %v1811 = vld [vmem:[#allocation14 + $0x68] sm:$0xff]
          %v1812 = vld [vmem:[#allocation14 + $0x70] sm:$0xff]
          %v1813 = vld [vmem:[#allocation14 + $0x78] sm:$0xff]
          %v1814 = vld [vmem:[#allocation14 + $0x80] sm:$0xff]
          %v1815 = vld [vmem:[#allocation14 + $0x88] sm:$0xff]
          %v1816 = vld [vmem:[#allocation14 + $0x90] sm:$0xff]
          %v1817 = vld [vmem:[#allocation14 + $0x98] sm:$0xff]
          %v1818 = vld [vmem:[#allocation14 + $0xa0] sm:$0xff]
          %v1819 = vld [vmem:[#allocation14 + $0xa8] sm:$0xff]
          %v1820 = vld [vmem:[#allocation14 + $0xb0] sm:$0xff]
          %v1821 = vld [vmem:[#allocation14 + $0xb8] sm:$0xff]
          %v1822 = vld [vmem:[#allocation14 + $0xc0] sm:$0xff]
          %v1823 = vld [vmem:[#allocation14 + $0xc8] sm:$0xff]
          %v1824 = vld [vmem:[#allocation14 + $0xd0] sm:$0xff]
          %v1825 = vld [vmem:[#allocation14 + $0xd8] sm:$0xff]
          %v1826 = vld [vmem:[#allocation4] sm:$0x1]
          %v1827 = vld [vmem:[#allocation4 + $0x1] sm:$0x1]
          %v1828 = vld [vmem:[#allocation4 + $0x2] sm:$0x1]
          %v1829 = vld [vmem:[#allocation4 + $0x3] sm:$0x1]
          %v1830 = vrcp.pop %v1826
          %v1831 = vrcp.pop %v1827
          %v1832 = vrcp.pop %v1828
          %v1833 = vrcp.pop %v1829
          %v1834 = vld [vmem:[#allocation5] sm:$0xff]
          %v1835 = vld [vmem:[#allocation5 + $0x8] sm:$0xff]
          %v1836 = vld [vmem:[#allocation5 + $0x10] sm:$0xff]
          %v1837 = vld [vmem:[#allocation5 + $0x18] sm:$0xff]
          %v1842 = vlaneseq
          %v1843 = vshrl.u32 %v1842, 7
          %v1844 = vsub.s32 0, %v1843
          %v1845 = vrot.slane %v1830, %v1844
          %v1846 = vlaneseq
          %v1847 = vshrl.u32 %v1846, 7
          %v1848 = vsub.s32 0, %v1847
          %v1849 = vrot.slane %v1831, %v1848
          %v1850 = vlaneseq
          %v1851 = vshrl.u32 %v1850, 7
          %v1852 = vsub.s32 0, %v1851
          %v1853 = vrot.slane %v1832, %v1852
          %v1854 = vlaneseq
          %v1855 = vshrl.u32 %v1854, 7
          %v1856 = vsub.s32 0, %v1855
          %v1857 = vrot.slane %v1833, %v1856
          %v1862 = vmul.f32 %v1834, %v1845
          %v1863 = vmul.f32 %v1835, %v1849
          %v1864 = vmul.f32 %v1836, %v1853
          %v1865 = vmul.f32 %v1837, %v1857
          %v1866 = vpack.c.bf16 %v1863, %v1862
          %v1867 = vpack.c.bf16 %v1865, %v1864
          %1869 = vset.pattern.permute.xlu0 0
          %1870 = vperm.xlu0 %1869, %v1802
          %v1871 = vpop.permute.xlu0 %1870
          %1874 = vset.pattern.permute.xlu0 0
          %1875 = vperm.xlu0 %1874, %v1803
          %v1876 = vpop.permute.xlu0 %1875
          %1879 = vset.pattern.permute.xlu0 0
          %1880 = vperm.xlu0 %1879, %v1804
          %v1881 = vpop.permute.xlu0 %1880
          %1884 = vset.pattern.permute.xlu0 0
          %1885 = vperm.xlu0 %1884, %v1805
          %v1886 = vpop.permute.xlu0 %1885
          %v1892 = vunpack.c.l.b16 %v1782
          %v1893 = vunpack.c.l.b16 %v1783
          %v1894 = vunpack.c.l.b16 %v1784
          %v1895 = vunpack.c.l.b16 %v1785
          %v1896 = vpack.c.b16 %v1893, %v1892
          %v1897 = vpack.c.b16 %v1895, %v1894
          %vm1898 = vcmask 261120
          %v1900 = vsel %vm1898, %v1896, 0
          %v1903 = vsel %vm1898, %v1897, 0
          %1905 = vmatprep.subr.bf16.mxu0 0
          %1906 = vmatpush1.bf16.msra.mxu0 %v1866
          %1907 = vmatprep.subr.bf16.mxu0 0
          %1908 = vmatpush1.bf16.msra.mxu0 %v1867
          %1909 = vmatprep.subr.bf16.mxu0 0
          %1910 = vmatpush1.bf16.msra.mxu0 0
          %1911 = vmatprep.subr.bf16.mxu0 0
          %1912 = vmatpush1.bf16.msra.mxu0 0
          %1913 = vmatprep.subr.bf16.mxu0 0
          %1914 = vmatpush1.bf16.msra.mxu0 0
          %1915 = vmatprep.subr.bf16.mxu0 0
          %1916 = vmatpush1.bf16.msra.mxu0 0
          %1917 = vmatprep.subr.bf16.mxu0 0
          %1918 = vmatpush1.bf16.msra.mxu0 0
          %1919 = vmatprep.subr.bf16.mxu0 0
          %1920 = vmatpush1.bf16.msra.mxu0 0
          %1921 = vmatprep.subr.bf16.mxu0 0
          %1922 = vmatpush1.bf16.msra.mxu0 0
          %1923 = vmatprep.subr.bf16.mxu0 0
          %1924 = vmatpush1.bf16.msra.mxu0 0
          %1925 = vmatprep.subr.bf16.mxu0 0
          %1926 = vmatpush1.bf16.msra.mxu0 0
          %1927 = vmatprep.subr.bf16.mxu0 0
          %1928 = vmatpush1.bf16.msra.mxu0 0
          %1929 = vmatprep.subr.bf16.mxu0 0
          %1930 = vmatpush1.bf16.msra.mxu0 0
          %1931 = vmatprep.subr.bf16.mxu0 0
          %1932 = vmatpush1.bf16.msra.mxu0 0
          %1933 = vmatprep.subr.bf16.mxu0 0
          %1934 = vmatpush1.bf16.msra.mxu0 0
          %1935 = vmatprep.subr.bf16.mxu0 0
          %1936 = vmatpush1.bf16.msra.mxu0 0
          %1937 = vmatprep.mubr.bf16.mxu0 0
          %1938 = vmatmul.mubr.bf16.gmra.mrb[0].mxu0 %v1900
          %v1939 = vpop.f32.mrb[0].mxu0
          %v1940 = vadd.f32 %v1871, %v1939
          %v1941 = vpop.f32.mrb[0].mxu0
          %v1942 = vpop.f32.mrb[0].mxu0
          %v1943 = vadd.f32 %v1876, %v1942
          %v1944 = vpop.f32.mrb[0].mxu0
          %1945 = vmatprep.mubr.bf16.mxu0 0
          %1946 = vmatmul.mubr.bf16.gmra.mrb[0].mxu0 %v1903
          %v1947 = vpop.f32.mrb[0].mxu0
          %v1948 = vadd.f32 %v1881, %v1947
          %v1949 = vpop.f32.mrb[0].mxu0
          %v1950 = vpop.f32.mrb[0].mxu0
          %v1951 = vadd.f32 %v1886, %v1950
          %v1952 = vpop.f32.mrb[0].mxu0
          %1953 = vdwg.mxu0
          %v1954 = vld [vmem:[%s300] sm:$0xff]
          %v1955 = vld [vmem:[%s300 + $0x8] sm:$0xff]
          %v1956 = vld [vmem:[%s300 + $0x10] sm:$0xff]
          %v1957 = vld [vmem:[%s300 + $0x18] sm:$0xff]
          %v1958 = vadd.f32 %v1954, %v1940
          %v1959 = vadd.f32 %v1955, %v1943
          %v1960 = vadd.f32 %v1956, %v1948
          %v1961 = vadd.f32 %v1957, %v1951
          %v1962 = vpack.c.bf16 %v1959, %v1958
          %v1963 = vpack.c.bf16 %v1961, %v1960
          %1965 = vset.pattern.permute.xlu0 0
          %1966 = vperm.xlu0 %1965, %v1806
          %v1967 = vpop.permute.xlu0 %1966
          %1970 = vset.pattern.permute.xlu0 0
          %1971 = vperm.xlu0 %1970, %v1807
          %v1972 = vpop.permute.xlu0 %1971
          %1975 = vset.pattern.permute.xlu0 0
          %1976 = vperm.xlu0 %1975, %v1808
          %v1977 = vpop.permute.xlu0 %1976
          %1980 = vset.pattern.permute.xlu0 0
          %1981 = vperm.xlu0 %1980, %v1809
          %v1982 = vpop.permute.xlu0 %1981
          %1985 = vset.pattern.permute.xlu0 0
          %1986 = vperm.xlu0 %1985, %v1810
          %v1987 = vpop.permute.xlu0 %1986
          %1990 = vset.pattern.permute.xlu0 0
          %1991 = vperm.xlu0 %1990, %v1811
          %v1992 = vpop.permute.xlu0 %1991
          %1995 = vset.pattern.permute.xlu0 0
          %1996 = vperm.xlu0 %1995, %v1812
          %v1997 = vpop.permute.xlu0 %1996
          %2000 = vset.pattern.permute.xlu0 0
          %2001 = vperm.xlu0 %2000, %v1813
          %v2002 = vpop.permute.xlu0 %2001
          %2005 = vset.pattern.permute.xlu0 0
          %2006 = vperm.xlu0 %2005, %v1814
          %v2007 = vpop.permute.xlu0 %2006
          %2010 = vset.pattern.permute.xlu0 0
          %2011 = vperm.xlu0 %2010, %v1815
          %v2012 = vpop.permute.xlu0 %2011
          %2015 = vset.pattern.permute.xlu0 0
          %2016 = vperm.xlu0 %2015, %v1816
          %v2017 = vpop.permute.xlu0 %2016
          %2020 = vset.pattern.permute.xlu0 0
          %2021 = vperm.xlu0 %2020, %v1817
          %v2022 = vpop.permute.xlu0 %2021
          %2025 = vset.pattern.permute.xlu0 0
          %2026 = vperm.xlu0 %2025, %v1818
          %v2027 = vpop.permute.xlu0 %2026
          %2030 = vset.pattern.permute.xlu0 0
          %2031 = vperm.xlu0 %2030, %v1819
          %v2032 = vpop.permute.xlu0 %2031
          %2035 = vset.pattern.permute.xlu0 0
          %2036 = vperm.xlu0 %2035, %v1820
          %v2037 = vpop.permute.xlu0 %2036
          %2040 = vset.pattern.permute.xlu0 0
          %2041 = vperm.xlu0 %2040, %v1821
          %v2042 = vpop.permute.xlu0 %2041
          %v2060 = vunpack.c.l.b16 %v1786
          %v2061 = vunpack.c.l.b16 %v1787
          %v2062 = vunpack.c.l.b16 %v1788
          %v2063 = vunpack.c.l.b16 %v1789
          %v2064 = vunpack.c.l.b16 %v1790
          %v2065 = vunpack.c.l.b16 %v1791
          %v2066 = vunpack.c.l.b16 %v1792
          %v2067 = vunpack.c.l.b16 %v1793
          %v2068 = vunpack.c.l.b16 %v1794
          %v2069 = vunpack.c.l.b16 %v1795
          %v2070 = vunpack.c.l.b16 %v1796
          %v2071 = vunpack.c.l.b16 %v1797
          %v2072 = vunpack.c.l.b16 %v1798
          %v2073 = vunpack.c.l.b16 %v1799
          %v2074 = vunpack.c.l.b16 %v1800
          %v2075 = vunpack.c.l.b16 %v1801
          %v2076 = vpack.c.b16 %v2061, %v2060
          %v2077 = vpack.c.b16 %v2063, %v2062
          %v2078 = vpack.c.b16 %v2065, %v2064
          %v2079 = vpack.c.b16 %v2067, %v2066
          %v2080 = vpack.c.b16 %v2069, %v2068
          %v2081 = vpack.c.b16 %v2071, %v2070
          %v2082 = vpack.c.b16 %v2073, %v2072
          %v2083 = vpack.c.b16 %v2075, %v2074
          %v2085 = vsel %vm1898, %v2076, 0
          %v2088 = vsel %vm1898, %v2077, 0
          %v2091 = vsel %vm1898, %v2078, 0
          %v2094 = vsel %vm1898, %v2079, 0
          %v2097 = vsel %vm1898, %v2080, 0
          %v2100 = vsel %vm1898, %v2081, 0
          %v2103 = vsel %vm1898, %v2082, 0
          %v2106 = vsel %vm1898, %v2083, 0
          %2108 = vmatprep.subr.bf16.mxu0 0
          %2109 = vmatpush1.bf16.msra.mxu0 %v1962
          %2110 = vmatprep.subr.bf16.mxu0 0
          %2111 = vmatpush1.bf16.msra.mxu0 %v1963
          %2112 = vmatprep.subr.bf16.mxu0 0
          %2113 = vmatpush1.bf16.msra.mxu0 0
          %2114 = vmatprep.subr.bf16.mxu0 0
          %2115 = vmatpush1.bf16.msra.mxu0 0
          %2116 = vmatprep.subr.bf16.mxu0 0
          %2117 = vmatpush1.bf16.msra.mxu0 0
          %2118 = vmatprep.subr.bf16.mxu0 0
          %2119 = vmatpush1.bf16.msra.mxu0 0
          %2120 = vmatprep.subr.bf16.mxu0 0
          %2121 = vmatpush1.bf16.msra.mxu0 0
          %2122 = vmatprep.subr.bf16.mxu0 0
          %2123 = vmatpush1.bf16.msra.mxu0 0
          %2124 = vmatprep.subr.bf16.mxu0 0
          %2125 = vmatpush1.bf16.msra.mxu0 0
          %2126 = vmatprep.subr.bf16.mxu0 0
          %2127 = vmatpush1.bf16.msra.mxu0 0
          %2128 = vmatprep.subr.bf16.mxu0 0
          %2129 = vmatpush1.bf16.msra.mxu0 0
          %2130 = vmatprep.subr.bf16.mxu0 0
          %2131 = vmatpush1.bf16.msra.mxu0 0
          %2132 = vmatprep.subr.bf16.mxu0 0
          %2133 = vmatpush1.bf16.msra.mxu0 0
          %2134 = vmatprep.subr.bf16.mxu0 0
          %2135 = vmatpush1.bf16.msra.mxu0 0
          %2136 = vmatprep.subr.bf16.mxu0 0
          %2137 = vmatpush1.bf16.msra.mxu0 0
          %2138 = vmatprep.subr.bf16.mxu0 0
          %2139 = vmatpush1.bf16.msra.mxu0 0
          %2140 = vmatprep.mubr.bf16.mxu0 0
          %2141 = vmatmul.mubr.bf16.gmra.mrb[0].mxu0 %v2085
          %v2142 = vpop.f32.mrb[0].mxu0
          %v2143 = vadd.f32 %v1967, %v2142
          %v2144 = vpop.f32.mrb[0].mxu0
          %v2145 = vpop.f32.mrb[0].mxu0
          %v2146 = vadd.f32 %v1972, %v2145
          %v2147 = vpop.f32.mrb[0].mxu0
          %2148 = vmatprep.mubr.bf16.mxu0 0
          %2149 = vmatmul.mubr.bf16.gmra.mrb[0].mxu0 %v2088
          %v2150 = vpop.f32.mrb[0].mxu0
          %v2151 = vadd.f32 %v1977, %v2150
          %v2152 = vpop.f32.mrb[0].mxu0
          %v2153 = vpop.f32.mrb[0].mxu0
          %v2154 = vadd.f32 %v1982, %v2153
          %v2155 = vpop.f32.mrb[0].mxu0
          %2156 = vmatprep.mubr.bf16.mxu0 0
          %2157 = vmatmul.mubr.bf16.gmra.mrb[0].mxu0 %v2091
          %v2158 = vpop.f32.mrb[0].mxu0
          %v2159 = vadd.f32 %v1987, %v2158
          %v2160 = vpop.f32.mrb[0].mxu0
          %v2161 = vpop.f32.mrb[0].mxu0
          %v2162 = vadd.f32 %v1992, %v2161
          %v2163 = vpop.f32.mrb[0].mxu0
          %2164 = vmatprep.mubr.bf16.mxu0 0
          %2165 = vmatmul.mubr.bf16.gmra.mrb[0].mxu0 %v2094
          %v2166 = vpop.f32.mrb[0].mxu0
          %v2167 = vadd.f32 %v1997, %v2166
          %v2168 = vpop.f32.mrb[0].mxu0
          %v2169 = vpop.f32.mrb[0].mxu0
          %v2170 = vadd.f32 %v2002, %v2169
          %v2171 = vpop.f32.mrb[0].mxu0
          %2172 = vmatprep.mubr.bf16.mxu0 0
          %2173 = vmatmul.mubr.bf16.gmra.mrb[0].mxu0 %v2097
          %v2174 = vpop.f32.mrb[0].mxu0
          %v2175 = vadd.f32 %v2007, %v2174
          %v2176 = vpop.f32.mrb[0].mxu0
          %v2177 = vpop.f32.mrb[0].mxu0
          %v2178 = vadd.f32 %v2012, %v2177
          %v2179 = vpop.f32.mrb[0].mxu0
          %2180 = vmatprep.mubr.bf16.mxu0 0
          %2181 = vmatmul.mubr.bf16.gmra.mrb[0].mxu0 %v2100
          %v2182 = vpop.f32.mrb[0].mxu0
          %v2183 = vadd.f32 %v2017, %v2182
          %v2184 = vpop.f32.mrb[0].mxu0
          %v2185 = vpop.f32.mrb[0].mxu0
          %v2186 = vadd.f32 %v2022, %v2185
          %v2187 = vpop.f32.mrb[0].mxu0
          %2188 = vmatprep.mubr.bf16.mxu0 0
          %2189 = vmatmul.mubr.bf16.gmra.mrb[0].mxu0 %v2103
          %v2190 = vpop.f32.mrb[0].mxu0
          %v2191 = vadd.f32 %v2027, %v2190
          %v2192 = vpop.f32.mrb[0].mxu0
          %v2193 = vpop.f32.mrb[0].mxu0
          %v2194 = vadd.f32 %v2032, %v2193
          %v2195 = vpop.f32.mrb[0].mxu0
          %2196 = vmatprep.mubr.bf16.mxu0 0
          %2197 = vmatmul.mubr.bf16.gmra.mrb[0].mxu0 %v2106
          %v2198 = vpop.f32.mrb[0].mxu0
          %v2199 = vadd.f32 %v2037, %v2198
          %v2200 = vpop.f32.mrb[0].mxu0
          %v2201 = vpop.f32.mrb[0].mxu0
          %v2202 = vadd.f32 %v2042, %v2201
          %v2203 = vpop.f32.mrb[0].mxu0
          %2204 = vdwg.mxu0
          %v2205 = vmul.f32 %v2143, 0.5
          %v2206 = vmul.f32 %v2146, 0.5
          %v2207 = vmul.f32 %v2151, 0.5
          %v2208 = vmul.f32 %v2154, 0.5
          %v2209 = vmul.f32 %v2159, 0.5
          %v2210 = vmul.f32 %v2162, 0.5
          %v2211 = vmul.f32 %v2167, 0.5
          %v2212 = vmul.f32 %v2170, 0.5
          %v2213 = vmul.f32 %v2175, 0.5
          %v2214 = vmul.f32 %v2178, 0.5
          %v2215 = vmul.f32 %v2183, 0.5
          %v2216 = vmul.f32 %v2186, 0.5
          %v2217 = vmul.f32 %v2191, 0.5
          %v2218 = vmul.f32 %v2194, 0.5
          %v2219 = vmul.f32 %v2199, 0.5
          %v2220 = vmul.f32 %v2202, 0.5
          %v2221 = vmul.f32 %v2143, 0.70710677
          %v2222 = vmul.f32 %v2146, 0.70710677
          %v2223 = vmul.f32 %v2151, 0.70710677
          %v2224 = vmul.f32 %v2154, 0.70710677
          %v2225 = vmul.f32 %v2159, 0.70710677
          %v2226 = vmul.f32 %v2162, 0.70710677
          %v2227 = vmul.f32 %v2167, 0.70710677
          %v2228 = vmul.f32 %v2170, 0.70710677
          %v2229 = vmul.f32 %v2175, 0.70710677
          %v2230 = vmul.f32 %v2178, 0.70710677
          %v2231 = vmul.f32 %v2183, 0.70710677
          %v2232 = vmul.f32 %v2186, 0.70710677
          %v2233 = vmul.f32 %v2191, 0.70710677
          %v2234 = vmul.f32 %v2194, 0.70710677
          %v2235 = vmul.f32 %v2199, 0.70710677
          %v2236 = vmul.f32 %v2202, 0.70710677
          %vm2237 = vcmp.ge.f32.partialorder %v2221, 0.0
          %vm2238 = vcmp.ge.f32.partialorder %v2222, 0.0
          %vm2239 = vcmp.ge.f32.partialorder %v2223, 0.0
          %vm2240 = vcmp.ge.f32.partialorder %v2224, 0.0
          %vm2241 = vcmp.ge.f32.partialorder %v2225, 0.0
          %vm2242 = vcmp.ge.f32.partialorder %v2226, 0.0
          %vm2243 = vcmp.ge.f32.partialorder %v2227, 0.0
          %vm2244 = vcmp.ge.f32.partialorder %v2228, 0.0
          %vm2245 = vcmp.ge.f32.partialorder %v2229, 0.0
          %vm2246 = vcmp.ge.f32.partialorder %v2230, 0.0
          %vm2247 = vcmp.ge.f32.partialorder %v2231, 0.0
          %vm2248 = vcmp.ge.f32.partialorder %v2232, 0.0
          %vm2249 = vcmp.ge.f32.partialorder %v2233, 0.0
          %vm2250 = vcmp.ge.f32.partialorder %v2234, 0.0
          %vm2251 = vcmp.ge.f32.partialorder %v2235, 0.0
          %vm2252 = vcmp.ge.f32.partialorder %v2236, 0.0
          %v2253 = vsel %vm2237, 1.0, -1.0
          %v2254 = vsel %vm2238, 1.0, -1.0
          %v2255 = vsel %vm2239, 1.0, -1.0
          %v2256 = vsel %vm2240, 1.0, -1.0
          %v2257 = vsel %vm2241, 1.0, -1.0
          %v2258 = vsel %vm2242, 1.0, -1.0
          %v2259 = vsel %vm2243, 1.0, -1.0
          %v2260 = vsel %vm2244, 1.0, -1.0
          %v2261 = vsel %vm2245, 1.0, -1.0
          %v2262 = vsel %vm2246, 1.0, -1.0
          %v2263 = vsel %vm2247, 1.0, -1.0
          %v2264 = vsel %vm2248, 1.0, -1.0
          %v2265 = vsel %vm2249, 1.0, -1.0
          %v2266 = vsel %vm2250, 1.0, -1.0
          %v2267 = vsel %vm2251, 1.0, -1.0
          %v2268 = vsel %vm2252, 1.0, -1.0
          %v2269 = vand.u32 2147483647, %v2221
          %v2270 = vand.u32 2147483647, %v2222
          %v2271 = vand.u32 2147483647, %v2223
          %v2272 = vand.u32 2147483647, %v2224
          %v2273 = vand.u32 2147483647, %v2225
          %v2274 = vand.u32 2147483647, %v2226
          %v2275 = vand.u32 2147483647, %v2227
          %v2276 = vand.u32 2147483647, %v2228
          %v2277 = vand.u32 2147483647, %v2229
          %v2278 = vand.u32 2147483647, %v2230
          %v2279 = vand.u32 2147483647, %v2231
          %v2280 = vand.u32 2147483647, %v2232
          %v2281 = vand.u32 2147483647, %v2233
          %v2282 = vand.u32 2147483647, %v2234
          %v2283 = vand.u32 2147483647, %v2235
          %v2284 = vand.u32 2147483647, %v2236
          %v2285 = vmul.f32 %v2269, 0.3275911
          %v2286 = vmul.f32 %v2270, 0.3275911
          %v2287 = vmul.f32 %v2271, 0.3275911
          %v2288 = vmul.f32 %v2272, 0.3275911
          %v2289 = vmul.f32 %v2273, 0.3275911
          %v2290 = vmul.f32 %v2274, 0.3275911
          %v2291 = vmul.f32 %v2275, 0.3275911
          %v2292 = vmul.f32 %v2276, 0.3275911
          %v2293 = vmul.f32 %v2277, 0.3275911
          %v2294 = vmul.f32 %v2278, 0.3275911
          %v2295 = vmul.f32 %v2279, 0.3275911
          %v2296 = vmul.f32 %v2280, 0.3275911
          %v2297 = vmul.f32 %v2281, 0.3275911
          %v2298 = vmul.f32 %v2282, 0.3275911
          %v2299 = vmul.f32 %v2283, 0.3275911
          %v2300 = vmul.f32 %v2284, 0.3275911
          %v2301 = vadd.f32 %v2285, 1.0
          %v2302 = vadd.f32 %v2286, 1.0
          %v2303 = vadd.f32 %v2287, 1.0
          %v2304 = vadd.f32 %v2288, 1.0
          %v2305 = vadd.f32 %v2289, 1.0
          %v2306 = vadd.f32 %v2290, 1.0
          %v2307 = vadd.f32 %v2291, 1.0
          %v2308 = vadd.f32 %v2292, 1.0
          %v2309 = vadd.f32 %v2293, 1.0
          %v2310 = vadd.f32 %v2294, 1.0
          %v2311 = vadd.f32 %v2295, 1.0
          %v2312 = vadd.f32 %v2296, 1.0
          %v2313 = vadd.f32 %v2297, 1.0
          %v2314 = vadd.f32 %v2298, 1.0
          %v2315 = vadd.f32 %v2299, 1.0
          %v2316 = vadd.f32 %v2300, 1.0
          %v2317 = vrcp.pop %v2301
          %v2318 = vmul.f32 1.0, %v2317
          %v2319 = vrcp.pop %v2302
          %v2320 = vmul.f32 1.0, %v2319
          %v2321 = vrcp.pop %v2303
          %v2322 = vmul.f32 1.0, %v2321
          %v2323 = vrcp.pop %v2304
          %v2324 = vmul.f32 1.0, %v2323
          %v2325 = vrcp.pop %v2305
          %v2326 = vmul.f32 1.0, %v2325
          %v2327 = vrcp.pop %v2306
          %v2328 = vmul.f32 1.0, %v2327
          %v2329 = vrcp.pop %v2307
          %v2330 = vmul.f32 1.0, %v2329
          %v2331 = vrcp.pop %v2308
          %v2332 = vmul.f32 1.0, %v2331
          %v2333 = vrcp.pop %v2309
          %v2334 = vmul.f32 1.0, %v2333
          %v2335 = vrcp.pop %v2310
          %v2336 = vmul.f32 1.0, %v2335
          %v2337 = vrcp.pop %v2311
          %v2338 = vmul.f32 1.0, %v2337
          %v2339 = vrcp.pop %v2312
          %v2340 = vmul.f32 1.0, %v2339
          %v2341 = vrcp.pop %v2313
          %v2342 = vmul.f32 1.0, %v2341
          %v2343 = vrcp.pop %v2314
          %v2344 = vmul.f32 1.0, %v2343
          %v2345 = vrcp.pop %v2315
          %v2346 = vmul.f32 1.0, %v2345
          %v2347 = vrcp.pop %v2316
          %v2348 = vmul.f32 1.0, %v2347
          %v2349 = vmul.f32 %v2318, 1.0614054
          %v2350 = vmul.f32 %v2320, 1.0614054
          %v2351 = vmul.f32 %v2322, 1.0614054
          %v2352 = vmul.f32 %v2324, 1.0614054
          %v2353 = vmul.f32 %v2326, 1.0614054
          %v2354 = vmul.f32 %v2328, 1.0614054
          %v2355 = vmul.f32 %v2330, 1.0614054
          %v2356 = vmul.f32 %v2332, 1.0614054
          %v2357 = vmul.f32 %v2334, 1.0614054
          %v2358 = vmul.f32 %v2336, 1.0614054
          %v2359 = vmul.f32 %v2338, 1.0614054
          %v2360 = vmul.f32 %v2340, 1.0614054
          %v2361 = vmul.f32 %v2342, 1.0614054
          %v2362 = vmul.f32 %v2344, 1.0614054
          %v2363 = vmul.f32 %v2346, 1.0614054
          %v2364 = vmul.f32 %v2348, 1.0614054
          %v2365 = vadd.f32 %v2349, -1.4531521
          %v2366 = vadd.f32 %v2350, -1.4531521
          %v2367 = vadd.f32 %v2351, -1.4531521
          %v2368 = vadd.f32 %v2352, -1.4531521
          %v2369 = vadd.f32 %v2353, -1.4531521
          %v2370 = vadd.f32 %v2354, -1.4531521
          %v2371 = vadd.f32 %v2355, -1.4531521
          %v2372 = vadd.f32 %v2356, -1.4531521
          %v2373 = vadd.f32 %v2357, -1.4531521
          %v2374 = vadd.f32 %v2358, -1.4531521
          %v2375 = vadd.f32 %v2359, -1.4531521
          %v2376 = vadd.f32 %v2360, -1.4531521
          %v2377 = vadd.f32 %v2361, -1.4531521
          %v2378 = vadd.f32 %v2362, -1.4531521
          %v2379 = vadd.f32 %v2363, -1.4531521
          %v2380 = vadd.f32 %v2364, -1.4531521
          %v2381 = vmul.f32 %v2365, %v2318
          %v2382 = vmul.f32 %v2366, %v2320
          %v2383 = vmul.f32 %v2367, %v2322
          %v2384 = vmul.f32 %v2368, %v2324
          %v2385 = vmul.f32 %v2369, %v2326
          %v2386 = vmul.f32 %v2370, %v2328
          %v2387 = vmul.f32 %v2371, %v2330
          %v2388 = vmul.f32 %v2372, %v2332
          %v2389 = vmul.f32 %v2373, %v2334
          %v2390 = vmul.f32 %v2374, %v2336
          %v2391 = vmul.f32 %v2375, %v2338
          %v2392 = vmul.f32 %v2376, %v2340
          %v2393 = vmul.f32 %v2377, %v2342
          %v2394 = vmul.f32 %v2378, %v2344
          %v2395 = vmul.f32 %v2379, %v2346
          %v2396 = vmul.f32 %v2380, %v2348
          %v2397 = vadd.f32 %v2381, 1.4214138
          %v2398 = vadd.f32 %v2382, 1.4214138
          %v2399 = vadd.f32 %v2383, 1.4214138
          %v2400 = vadd.f32 %v2384, 1.4214138
          %v2401 = vadd.f32 %v2385, 1.4214138
          %v2402 = vadd.f32 %v2386, 1.4214138
          %v2403 = vadd.f32 %v2387, 1.4214138
          %v2404 = vadd.f32 %v2388, 1.4214138
          %v2405 = vadd.f32 %v2389, 1.4214138
          %v2406 = vadd.f32 %v2390, 1.4214138
          %v2407 = vadd.f32 %v2391, 1.4214138
          %v2408 = vadd.f32 %v2392, 1.4214138
          %v2409 = vadd.f32 %v2393, 1.4214138
          %v2410 = vadd.f32 %v2394, 1.4214138
          %v2411 = vadd.f32 %v2395, 1.4214138
          %v2412 = vadd.f32 %v2396, 1.4214138
          %v2413 = vmul.f32 %v2397, %v2318
          %v2414 = vmul.f32 %v2398, %v2320
          %v2415 = vmul.f32 %v2399, %v2322
          %v2416 = vmul.f32 %v2400, %v2324
          %v2417 = vmul.f32 %v2401, %v2326
          %v2418 = vmul.f32 %v2402, %v2328
          %v2419 = vmul.f32 %v2403, %v2330
          %v2420 = vmul.f32 %v2404, %v2332
          %v2421 = vmul.f32 %v2405, %v2334
          %v2422 = vmul.f32 %v2406, %v2336
          %v2423 = vmul.f32 %v2407, %v2338
          %v2424 = vmul.f32 %v2408, %v2340
          %v2425 = vmul.f32 %v2409, %v2342
          %v2426 = vmul.f32 %v2410, %v2344
          %v2427 = vmul.f32 %v2411, %v2346
          %v2428 = vmul.f32 %v2412, %v2348
          %v2429 = vadd.f32 %v2413, -0.28449672
          %v2430 = vadd.f32 %v2414, -0.28449672
          %v2431 = vadd.f32 %v2415, -0.28449672
          %v2432 = vadd.f32 %v2416, -0.28449672
          %v2433 = vadd.f32 %v2417, -0.28449672
          %v2434 = vadd.f32 %v2418, -0.28449672
          %v2435 = vadd.f32 %v2419, -0.28449672
          %v2436 = vadd.f32 %v2420, -0.28449672
          %v2437 = vadd.f32 %v2421, -0.28449672
          %v2438 = vadd.f32 %v2422, -0.28449672
          %v2439 = vadd.f32 %v2423, -0.28449672
          %v2440 = vadd.f32 %v2424, -0.28449672
          %v2441 = vadd.f32 %v2425, -0.28449672
          %v2442 = vadd.f32 %v2426, -0.28449672
          %v2443 = vadd.f32 %v2427, -0.28449672
          %v2444 = vadd.f32 %v2428, -0.28449672
          %v2445 = vmul.f32 %v2429, %v2318
          %v2446 = vmul.f32 %v2430, %v2320
          %v2447 = vmul.f32 %v2431, %v2322
          %v2448 = vmul.f32 %v2432, %v2324
          %v2449 = vmul.f32 %v2433, %v2326
          %v2450 = vmul.f32 %v2434, %v2328
          %v2451 = vmul.f32 %v2435, %v2330
          %v2452 = vmul.f32 %v2436, %v2332
          %v2453 = vmul.f32 %v2437, %v2334
          %v2454 = vmul.f32 %v2438, %v2336
          %v2455 = vmul.f32 %v2439, %v2338
          %v2456 = vmul.f32 %v2440, %v2340
          %v2457 = vmul.f32 %v2441, %v2342
          %v2458 = vmul.f32 %v2442, %v2344
          %v2459 = vmul.f32 %v2443, %v2346
          %v2460 = vmul.f32 %v2444, %v2348
          %v2461 = vadd.f32 %v2445, 0.2548296
          %v2462 = vadd.f32 %v2446, 0.2548296
          %v2463 = vadd.f32 %v2447, 0.2548296
          %v2464 = vadd.f32 %v2448, 0.2548296
          %v2465 = vadd.f32 %v2449, 0.2548296
          %v2466 = vadd.f32 %v2450, 0.2548296
          %v2467 = vadd.f32 %v2451, 0.2548296
          %v2468 = vadd.f32 %v2452, 0.2548296
          %v2469 = vadd.f32 %v2453, 0.2548296
          %v2470 = vadd.f32 %v2454, 0.2548296
          %v2471 = vadd.f32 %v2455, 0.2548296
          %v2472 = vadd.f32 %v2456, 0.2548296
          %v2473 = vadd.f32 %v2457, 0.2548296
          %v2474 = vadd.f32 %v2458, 0.2548296
          %v2475 = vadd.f32 %v2459, 0.2548296
          %v2476 = vadd.f32 %v2460, 0.2548296
          %v2477 = vmul.f32 %v2461, %v2318
          %v2478 = vmul.f32 %v2462, %v2320
          %v2479 = vmul.f32 %v2463, %v2322
          %v2480 = vmul.f32 %v2464, %v2324
          %v2481 = vmul.f32 %v2465, %v2326
          %v2482 = vmul.f32 %v2466, %v2328
          %v2483 = vmul.f32 %v2467, %v2330
          %v2484 = vmul.f32 %v2468, %v2332
          %v2485 = vmul.f32 %v2469, %v2334
          %v2486 = vmul.f32 %v2470, %v2336
          %v2487 = vmul.f32 %v2471, %v2338
          %v2488 = vmul.f32 %v2472, %v2340
          %v2489 = vmul.f32 %v2473, %v2342
          %v2490 = vmul.f32 %v2474, %v2344
          %v2491 = vmul.f32 %v2475, %v2346
          %v2492 = vmul.f32 %v2476, %v2348
          %v2493 = vsub.f32 0.0, %v2269
          %v2494 = vsub.f32 0.0, %v2270
          %v2495 = vsub.f32 0.0, %v2271
          %v2496 = vsub.f32 0.0, %v2272
          %v2497 = vsub.f32 0.0, %v2273
          %v2498 = vsub.f32 0.0, %v2274
          %v2499 = vsub.f32 0.0, %v2275
          %v2500 = vsub.f32 0.0, %v2276
          %v2501 = vsub.f32 0.0, %v2277
          %v2502 = vsub.f32 0.0, %v2278
          %v2503 = vsub.f32 0.0, %v2279
          %v2504 = vsub.f32 0.0, %v2280
          %v2505 = vsub.f32 0.0, %v2281
          %v2506 = vsub.f32 0.0, %v2282
          %v2507 = vsub.f32 0.0, %v2283
          %v2508 = vsub.f32 0.0, %v2284
          %v2509 = vmul.f32 %v2493, %v2269
          %v2510 = vmul.f32 %v2494, %v2270
          %v2511 = vmul.f32 %v2495, %v2271
          %v2512 = vmul.f32 %v2496, %v2272
          %v2513 = vmul.f32 %v2497, %v2273
          %v2514 = vmul.f32 %v2498, %v2274
          %v2515 = vmul.f32 %v2499, %v2275
          %v2516 = vmul.f32 %v2500, %v2276
          %v2517 = vmul.f32 %v2501, %v2277
          %v2518 = vmul.f32 %v2502, %v2278
          %v2519 = vmul.f32 %v2503, %v2279
          %v2520 = vmul.f32 %v2504, %v2280
          %v2521 = vmul.f32 %v2505, %v2281
          %v2522 = vmul.f32 %v2506, %v2282
          %v2523 = vmul.f32 %v2507, %v2283
          %v2524 = vmul.f32 %v2508, %v2284
          %v2525 = vmul.f32 %v2509, 1.442695
          %v2526 = vpow.pop %v2525
          %v2527 = vmul.f32 %v2510, 1.442695
          %v2528 = vpow.pop %v2527
          %v2529 = vmul.f32 %v2511, 1.442695
          %v2530 = vpow.pop %v2529
          %v2531 = vmul.f32 %v2512, 1.442695
          %v2532 = vpow.pop %v2531
          %v2533 = vmul.f32 %v2513, 1.442695
          %v2534 = vpow.pop %v2533
          %v2535 = vmul.f32 %v2514, 1.442695
          %v2536 = vpow.pop %v2535
          %v2537 = vmul.f32 %v2515, 1.442695
          %v2538 = vpow.pop %v2537
          %v2539 = vmul.f32 %v2516, 1.442695
          %v2540 = vpow.pop %v2539
          %v2541 = vmul.f32 %v2517, 1.442695
          %v2542 = vpow.pop %v2541
          %v2543 = vmul.f32 %v2518, 1.442695
          %v2544 = vpow.pop %v2543
          %v2545 = vmul.f32 %v2519, 1.442695
          %v2546 = vpow.pop %v2545
          %v2547 = vmul.f32 %v2520, 1.442695
          %v2548 = vpow.pop %v2547
          %v2549 = vmul.f32 %v2521, 1.442695
          %v2550 = vpow.pop %v2549
          %v2551 = vmul.f32 %v2522, 1.442695
          %v2552 = vpow.pop %v2551
          %v2553 = vmul.f32 %v2523, 1.442695
          %v2554 = vpow.pop %v2553
          %v2555 = vmul.f32 %v2524, 1.442695
          %v2556 = vpow.pop %v2555
          %v2557 = vmul.f32 %v2477, %v2526
          %v2558 = vmul.f32 %v2478, %v2528
          %v2559 = vmul.f32 %v2479, %v2530
          %v2560 = vmul.f32 %v2480, %v2532
          %v2561 = vmul.f32 %v2481, %v2534
          %v2562 = vmul.f32 %v2482, %v2536
          %v2563 = vmul.f32 %v2483, %v2538
          %v2564 = vmul.f32 %v2484, %v2540
          %v2565 = vmul.f32 %v2485, %v2542
          %v2566 = vmul.f32 %v2486, %v2544
          %v2567 = vmul.f32 %v2487, %v2546
          %v2568 = vmul.f32 %v2488, %v2548
          %v2569 = vmul.f32 %v2489, %v2550
          %v2570 = vmul.f32 %v2490, %v2552
          %v2571 = vmul.f32 %v2491, %v2554
          %v2572 = vmul.f32 %v2492, %v2556
          %v2573 = vsub.f32 1.0, %v2557
          %v2574 = vsub.f32 1.0, %v2558
          %v2575 = vsub.f32 1.0, %v2559
          %v2576 = vsub.f32 1.0, %v2560
          %v2577 = vsub.f32 1.0, %v2561
          %v2578 = vsub.f32 1.0, %v2562
          %v2579 = vsub.f32 1.0, %v2563
          %v2580 = vsub.f32 1.0, %v2564
          %v2581 = vsub.f32 1.0, %v2565
          %v2582 = vsub.f32 1.0, %v2566
          %v2583 = vsub.f32 1.0, %v2567
          %v2584 = vsub.f32 1.0, %v2568
          %v2585 = vsub.f32 1.0, %v2569
          %v2586 = vsub.f32 1.0, %v2570
          %v2587 = vsub.f32 1.0, %v2571
          %v2588 = vsub.f32 1.0, %v2572
          %v2589 = vmul.f32 %v2253, %v2573
          %v2590 = vmul.f32 %v2254, %v2574
          %v2591 = vmul.f32 %v2255, %v2575
          %v2592 = vmul.f32 %v2256, %v2576
          %v2593 = vmul.f32 %v2257, %v2577
          %v2594 = vmul.f32 %v2258, %v2578
          %v2595 = vmul.f32 %v2259, %v2579
          %v2596 = vmul.f32 %v2260, %v2580
          %v2597 = vmul.f32 %v2261, %v2581
          %v2598 = vmul.f32 %v2262, %v2582
          %v2599 = vmul.f32 %v2263, %v2583
          %v2600 = vmul.f32 %v2264, %v2584
          %v2601 = vmul.f32 %v2265, %v2585
          %v2602 = vmul.f32 %v2266, %v2586
          %v2603 = vmul.f32 %v2267, %v2587
          %v2604 = vmul.f32 %v2268, %v2588
          %v2605 = vadd.f32 %v2589, 1.0
          %v2606 = vadd.f32 %v2590, 1.0
          %v2607 = vadd.f32 %v2591, 1.0
          %v2608 = vadd.f32 %v2592, 1.0
          %v2609 = vadd.f32 %v2593, 1.0
          %v2610 = vadd.f32 %v2594, 1.0
          %v2611 = vadd.f32 %v2595, 1.0
          %v2612 = vadd.f32 %v2596, 1.0
          %v2613 = vadd.f32 %v2597, 1.0
          %v2614 = vadd.f32 %v2598, 1.0
          %v2615 = vadd.f32 %v2599, 1.0
          %v2616 = vadd.f32 %v2600, 1.0
          %v2617 = vadd.f32 %v2601, 1.0
          %v2618 = vadd.f32 %v2602, 1.0
          %v2619 = vadd.f32 %v2603, 1.0
          %v2620 = vadd.f32 %v2604, 1.0
          %v2621 = vmul.f32 %v2205, %v2605
          %v2622 = vmul.f32 %v2206, %v2606
          %v2623 = vmul.f32 %v2207, %v2607
          %v2624 = vmul.f32 %v2208, %v2608
          %v2625 = vmul.f32 %v2209, %v2609
          %v2626 = vmul.f32 %v2210, %v2610
          %v2627 = vmul.f32 %v2211, %v2611
          %v2628 = vmul.f32 %v2212, %v2612
          %v2629 = vmul.f32 %v2213, %v2613
          %v2630 = vmul.f32 %v2214, %v2614
          %v2631 = vmul.f32 %v2215, %v2615
          %v2632 = vmul.f32 %v2216, %v2616
          %v2633 = vmul.f32 %v2217, %v2617
          %v2634 = vmul.f32 %v2218, %v2618
          %v2635 = vmul.f32 %v2219, %v2619
          %v2636 = vmul.f32 %v2220, %v2620
          %v2637 = vpack.c.bf16 %v2622, %v2621
          %v2638 = vpack.c.bf16 %v2624, %v2623
          %v2639 = vpack.c.bf16 %v2626, %v2625
          %v2640 = vpack.c.bf16 %v2628, %v2627
          %v2641 = vpack.c.bf16 %v2630, %v2629
          %v2642 = vpack.c.bf16 %v2632, %v2631
          %v2643 = vpack.c.bf16 %v2634, %v2633
          %v2644 = vpack.c.bf16 %v2636, %v2635
          %v2645 = vld [vmem:[#allocation12] sm:$0xf]
          %v2646 = vld [vmem:[#allocation12 + $0x4] sm:$0xf]
          %v2647 = vld [vmem:[#allocation12 + $0x8] sm:$0xf]
          %v2648 = vld [vmem:[#allocation12 + $0xc] sm:$0xf]
          %2650 = vset.pattern.permute.xlu0 0
          %2651 = vperm.xlu0 %2650, %v1822
          %v2652 = vpop.permute.xlu0 %2651
          %2655 = vset.pattern.permute.xlu0 0
          %2656 = vperm.xlu0 %2655, %v1823
          %v2657 = vpop.permute.xlu0 %2656
          %2660 = vset.pattern.permute.xlu0 0
          %2661 = vperm.xlu0 %2660, %v1824
          %v2662 = vpop.permute.xlu0 %2661
          %2665 = vset.pattern.permute.xlu0 0
          %2666 = vperm.xlu0 %2665, %v1825
          %v2667 = vpop.permute.xlu0 %2666
          %v2673 = vunpack.c.l.b16 %v2645
          %v2674 = vunpack.c.l.b16 %v2646
          %v2675 = vunpack.c.l.b16 %v2647
          %v2676 = vunpack.c.l.b16 %v2648
          %v2677 = vpack.c.b16 %v2674, %v2673
          %v2678 = vpack.c.b16 %v2676, %v2675
          %2681 = vmatprep.subr.bf16.mxu0 0
          %2682 = vmatpush1.bf16.msra.mxu0 %v2637
          %2683 = vmatprep.subr.bf16.mxu0 0
          %2684 = vmatpush1.bf16.msra.mxu0 %v2638
          %2685 = vmatprep.subr.bf16.mxu0 0
          %2686 = vmatpush1.bf16.msra.mxu0 %v2639
          %2687 = vmatprep.subr.bf16.mxu0 0
          %2688 = vmatpush1.bf16.msra.mxu0 %v2640
          %2689 = vmatprep.subr.bf16.mxu0 0
          %2690 = vmatpush1.bf16.msra.mxu0 %v2641
          %2691 = vmatprep.subr.bf16.mxu0 0
          %2692 = vmatpush1.bf16.msra.mxu0 %v2642
          %2693 = vmatprep.subr.bf16.mxu0 0
          %2694 = vmatpush1.bf16.msra.mxu0 %v2643
          %2695 = vmatprep.subr.bf16.mxu0 0
          %2696 = vmatpush1.bf16.msra.mxu0 %v2644
          %2697 = vmatprep.subr.bf16.mxu0 0
          %2698 = vmatpush1.bf16.msra.mxu0 0
          %2699 = vmatprep.subr.bf16.mxu0 0
          %2700 = vmatpush1.bf16.msra.mxu0 0
          %2701 = vmatprep.subr.bf16.mxu0 0
          %2702 = vmatpush1.bf16.msra.mxu0 0
          %2703 = vmatprep.subr.bf16.mxu0 0
          %2704 = vmatpush1.bf16.msra.mxu0 0
          %2705 = vmatprep.subr.bf16.mxu0 0
          %2706 = vmatpush1.bf16.msra.mxu0 0
          %2707 = vmatprep.subr.bf16.mxu0 0
          %2708 = vmatpush1.bf16.msra.mxu0 0
          %2709 = vmatprep.subr.bf16.mxu0 0
          %2710 = vmatpush1.bf16.msra.mxu0 0
          %2711 = vmatprep.subr.bf16.mxu0 0
          %2712 = vmatpush1.bf16.msra.mxu0 0
          %2713 = vmatprep.mubr.bf16.mxu0 0
          %2714 = vmatmul.mubr.bf16.gmra.mrb[0].mxu0 %v2677
          %v2715 = vpop.f32.mrb[0].mxu0
          %v2716 = vadd.f32 %v2652, %v2715
          %v2717 = vpop.f32.mrb[0].mxu0
          %v2718 = vpop.f32.mrb[0].mxu0
          %v2719 = vadd.f32 %v2657, %v2718
          %v2720 = vpop.f32.mrb[0].mxu0
          %2721 = vmatprep.mubr.bf16.mxu0 0
          %2722 = vmatmul.mubr.bf16.gmra.mrb[0].mxu0 %v2678
          %v2723 = vpop.f32.mrb[0].mxu0
          %v2724 = vadd.f32 %v2662, %v2723
          %v2725 = vpop.f32.mrb[0].mxu0
          %v2726 = vpop.f32.mrb[0].mxu0
          %v2727 = vadd.f32 %v2667, %v2726
          %v2728 = vpop.f32.mrb[0].mxu0
          %2729 = vdwg.mxu0
          %2730 = vst [vmem:[%s352] sm:$0xff] %v2716
          %2731 = vst [vmem:[%s352 + $0x8] sm:$0xff] %v2719
          %2732 = vst [vmem:[%s352 + $0x10] sm:$0xff] %v2724
          %2733 = vst [vmem:[%s352 + $0x18] sm:$0xff] %v2727
        $region68: #{ae_iteration.3} parent=39 // pred_fallthru
          _
        %s2734 = sand.u32 %s174, 1
        %s2735 = scalar_lea.sflag [#allocation8], %s2734
        %s2736 = sand.u32 %s174, 1
        %s2737 = smul.addr %s2736, 32
        %s2738 = scalar_lea.vmem [#allocation15], %s2737
        // Predicated region
        $region69: #{ae_iteration.3} parent=39 // pred_check
          %p2739 = pneg %p184
        $region70: #{ae_iteration.3} parent=39 // pred_check_branch
          %2741 = sbr.rel (%p2739) target = $region72
        $region71: #{ae_iteration.3} parent=39 // pred_region
          %s2743 = ssub.s32 512, 512
          %2744 = vsyncadd %s2735, %s2743
          %s2745 = smul.addr %s31, 4
          %s2746 = sadd.s32 %s32, %s2745
          %s2747 = smul.addr %s2746, 128
          %s2748 = scalar_lea.hbm %s5, %s2747
          %s2749 = sshll.u32 %s2738, 4
          %s2750 = int_to_ptr.vmem [resolvable:$true] %s2749
          %2755 = dma.vmem_to_hbm [thread:$0]  %s2750, 512, %s2748, %s2735, 128, 128, 8
        $region72: #{ae_iteration.3} parent=39 // pred_fallthru
          _
      $region40: #{ae_iteration.3} parent=5 // pred_fallthru
        _
      %p2756 = scmp.le.s32.totalorder 2, %s21
      // Predicated region
      $region73: #{ae_iteration.3} parent=5 // pred_check
        %p2757 = pneg %p2756
      $region74: #{ae_iteration.3} parent=5 // pred_check_branch
        %2759 = sbr.rel (%p2757) target = $region76
      $region75: #{ae_iteration.3} parent=5 // pred_region
        %s2760 = ssub.s32 %s21, 2
        // Predicated region
        $region77: #{ae_iteration.3} parent=75 // pred_check
          %p2761 = pneg %p190
        $region78: #{ae_iteration.3} parent=75 // pred_check_branch
          %2763 = sbr.rel (%p2761) target = $region80
        $region79: #{ae_iteration.3} parent=75 // pred_region
          %s2764 = sand.u32 %s175, 1
          %s2765 = scalar_lea.sflag [#allocation8], %s2764
          %s2766 = sand.u32 %s175, 1
          %s2767 = smul.addr %s2766, 32
          %s2768 = scalar_lea.vmem [#allocation15], %s2767
          %2769 = dma.done %s2765, 512
        $region80: #{ae_iteration.3} parent=75 // pred_fallthru
          _
      $region76: #{ae_iteration.3} parent=5 // pred_fallthru
        _
    $region6: #{ae_iteration.3} parent=1 // loop_footer
      %s25 = sadd.s32 1, %s21
    $region7: #{ae_iteration.3} parent=1 // loop_footer_branch
      %20 = sbr.rel target = $region3
    $region8: #{ae_iteration.3} parent=1 // loop_exit
      _
    %2770 = vsyncpa [#allocation7], 1
    %s2771 = scalar_lea.sflag [#allocation7], 1
    %2772 = vsyncpa %s2771, 1
    %2773 = vsyncpa [#allocation10], 1
    %s2774 = scalar_lea.sflag [#allocation10], 1
    %2775 = vsyncpa %s2774, 1
    %2776 = vsyncpa [#allocation13], 1
    %2777 = vsyncpa [#allocation8], 1
    %s2778 = scalar_lea.sflag [#allocation8], 1
    %2779 = vsyncpa %s2778, 1

</llo_original>
